<compile_context>
chip_gen: v6e
topology: v6e:2x2x1
jax: 0.10.0
libtpu: 0.0.40
codegen_flags: <defaults>
</compile_context>

<pallas_src>
import math
from functools import partial

import jax
import jax.numpy as jnp
from jax import lax
from jax.experimental import pallas as pl
from jax.experimental.pallas import tpu as pltpu


def _fast_rope_attn_kernel(cs_ref, at_ref, wq_ref, wk_ref, wv_ref, wo_ref,
                           cosq_ref, sinqu_ref, sinqd_ref,
                           cosk_ref, sinku_ref, sinkd_ref,
                           out_ref, k_scr, v_scr,
                           *, n_heads, proj_size, n_rotate):
    """One (batch, query-tile) grid step.

    cs_ref    : [1, TQ, Din] bf16  current-state tile
    at_ref    : [1, S,  Din] bf16  attend_to (block index depends on batch only)
    wq/wk/wv  : [Din, H*P]   bf16
    wo        : [H*P, Dout]  bf16
    cos*/sin* : [TQ|S, H*P]  bf16  head-tiled RoPE tables (sign folded into sin)
    out_ref   : [1, TQ, Dout]
    k_scr/v_scr : [S, H*P] bf16 persistent VMEM scratch holding the current
                  batch's (RoPE'd) K and V, written at query-tile 0.
    """
    H, P, NR = n_heads, proj_size, n_rotate
    HP = H * P
    half = NR // 2
    scale = 1.0 / math.sqrt(P)

    def rope(x, cos_ref, sin_up_ref, sin_dn_ref):
        # Full-slab RoPE: rot = x*COS + x[c+half]*SIN_UP + x[c-half]*SIN_DN.
        # SIN_UP / SIN_DN are zero wherever the circular roll wraps across a
        # head boundary (and on the non-rotated tail); COS is 1 on the tail.
        # pltpu.roll matches jnp.roll: roll(x, s)[c] = x[c - s].
        x_up = pltpu.roll(x, HP - half, axis=1)   # x[c + half]
        x_dn = pltpu.roll(x, half, axis=1)        # x[c - half]
        # bf16 tables promote to f32 against the f32 projections.
        return x * cos_ref[...] + x_up * sin_up_ref[...] + x_dn * sin_dn_ref[...]

    # ---- K/V projection + K-RoPE: once per batch (first query tile). ------
    @pl.when(pl.program_id(1) == 0)
    def _():
        x_kv = at_ref[0]                                              # [S, Din]
        k_all = jnp.dot(x_kv, wk_ref[...], preferred_element_type=jnp.float32)
        v_all = jnp.dot(x_kv, wv_ref[...], preferred_element_type=jnp.float32)
        if NR > 0:
            k_all = rope(k_all, cosk_ref, sinku_ref, sinkd_ref)
        k_scr[...] = k_all.astype(jnp.bfloat16)
        v_scr[...] = v_all.astype(jnp.bfloat16)

    # ---- Q projection + Q-RoPE: every query tile. --------------------------
    x_q = cs_ref[0]                                                   # [TQ, Din]
    q_all = jnp.dot(x_q, wq_ref[...], preferred_element_type=jnp.float32)
    if NR > 0:
        q_all = rope(q_all, cosq_ref, sinqu_ref, sinqd_ref)
    q_bf = q_all.astype(jnp.bfloat16)

    k_bf = k_scr[...]
    v_bf = v_scr[...]

    # ---- Per-head attention core (contract last dims; no transposes). ------
    head_outs = []
    for h in range(H):
        lo = h * P
        qh = q_bf[:, lo:lo + P]
        kh = k_bf[:, lo:lo + P]
        vh = v_bf[:, lo:lo + P]
        s = lax.dot_general(qh, kh, (((1,), (1,)), ((), ())),
                            preferred_element_type=jnp.float32) * scale  # [TQ, S]
        m = jnp.max(s, axis=-1, keepdims=True)
        e = jnp.exp(s - m)
        p = e * pl.reciprocal(jnp.sum(e, axis=-1, keepdims=True), approx=True)
        head_outs.append(jnp.dot(p.astype(jnp.bfloat16), vh,
                                 preferred_element_type=jnp.float32))     # [TQ, P]

    # One lane-dense [TQ, H*P] value -> single fused output projection.
    o = jnp.concatenate(head_outs, axis=-1).astype(jnp.bfloat16)
    out_ref[0] = jnp.dot(o, wo_ref[...],
                         preferred_element_type=jnp.float32).astype(out_ref.dtype)


def _rope_tables(L, offset, *, n_heads, proj_size, n_rotate, rope_base):
    """Head-tiled [L, H*P] cos / signed-sin RoPE tables, stored bf16."""
    H, P, NR = n_heads, proj_size, n_rotate
    HP = H * P
    if NR == 0:
        ones = jnp.ones((L, HP), jnp.bfloat16)
        zeros = jnp.zeros((L, HP), jnp.bfloat16)
        return ones, zeros, zeros
    half = NR // 2
    inv_freq = 1.0 / (rope_base ** (jnp.arange(0, NR, 2, dtype=jnp.float32) / NR))
    t = jnp.arange(L, dtype=jnp.float32) + float(offset)
    theta = t[:, None] * inv_freq[None, :]                       # [L, half]
    c, s = jnp.cos(theta), jnp.sin(theta)
    z_half = jnp.zeros((L, half), jnp.float32)
    z_tail = jnp.zeros((L, P - NR), jnp.float32)
    one_tail = jnp.ones((L, P - NR), jnp.float32)
    cos_h = jnp.concatenate([c, c, one_tail], axis=-1)           # [L, P]
    sin_up_h = jnp.concatenate([-s, z_half, z_tail], axis=-1)    # pairs with x[c+half]
    sin_dn_h = jnp.concatenate([z_half, s, z_tail], axis=-1)     # pairs with x[c-half]
    tile = lambda a: jnp.tile(a, (1, H)).astype(jnp.bfloat16)
    return tile(cos_h), tile(sin_up_h), tile(sin_dn_h)


def fast_rope_attention(curr_state, attend_to, wq, wkv, wo, *,
                        n_heads, proj_size, n_rotate,
                        pos_offset=0, rope_base=10000.0, q_tile=128):
    B, T, Din = curr_state.shape
    _, S, _ = attend_to.shape
    H, P, NR = n_heads, proj_size, n_rotate
    HP = H * P
    Dout = wo.shape[1]

    assert NR % 2 == 0, "n_rotate must be even"
    assert 0 <= NR <= P
    TQ = T if T <= q_tile else q_tile
    assert T % TQ == 0, "T must be divisible by the query tile"
    NT = T // TQ

    # bf16 HBM-side operands: halves activation/weight/table DMA bytes and the
    # double-buffered VMEM footprint; all matmuls accumulate in f32.
    cs_b = curr_state.astype(jnp.bfloat16)
    at_b = attend_to.astype(jnp.bfloat16)
    wq_b = wq.astype(jnp.bfloat16)
    wk_b = wkv[:, :HP].astype(jnp.bfloat16)   # split here: kernel never splits [S, 2HP]
    wv_b = wkv[:, HP:].astype(jnp.bfloat16)
    wo_b = wo.astype(jnp.bfloat16)

    mk_tables = partial(_rope_tables, n_heads=H, proj_size=P,
                        n_rotate=NR, rope_base=rope_base)
    cosq, sinqu, sinqd = mk_tables(T, pos_offset)
    cosk, sinku, sinkd = mk_tables(S, 0)          # keys always start at position 0

    kernel = partial(_fast_rope_attn_kernel,
                     n_heads=H, proj_size=P, n_rotate=NR)

    grid_spec = pltpu.PrefetchScalarGridSpec(
        num_scalar_prefetch=0,
        grid=(B, NT),
        in_specs=[
            pl.BlockSpec((1, TQ, Din), lambda b, t: (b, t, 0)),   # curr_state tile
            pl.BlockSpec((1, S, Din), lambda b, t: (b, 0, 0)),    # attend_to (per batch)
            pl.BlockSpec((Din, HP), lambda b, t: (0, 0)),         # Wq
            pl.BlockSpec((Din, HP), lambda b, t: (0, 0)),         # Wk
            pl.BlockSpec((Din, HP), lambda b, t: (0, 0)),         # Wv
            pl.BlockSpec((HP, Dout), lambda b, t: (0, 0)),        # Wo
            pl.BlockSpec((TQ, HP), lambda b, t: (t, 0)),          # cos_q
            pl.BlockSpec((TQ, HP), lambda b, t: (t, 0)),          # sin_q (up partner)
            pl.BlockSpec((TQ, HP), lambda b, t: (t, 0)),          # sin_q (down partner)
            pl.BlockSpec((S, HP), lambda b, t: (0, 0)),           # cos_k
            pl.BlockSpec((S, HP), lambda b, t: (0, 0)),           # sin_k (up)
            pl.BlockSpec((S, HP), lambda b, t: (0, 0)),           # sin_k (down)
        ],
        out_specs=pl.BlockSpec((1, TQ, Dout), lambda b, t: (b, t, 0)),
        scratch_shapes=[pltpu.VMEM((S, HP), jnp.bfloat16),        # K cache (RoPE'd)
                        pltpu.VMEM((S, HP), jnp.bfloat16)],       # V cache
    )

    # VMEM budget from actual block sizes (x2 for default double buffering)
    # plus persistent K/V scratch and headroom for compiler-internal scratch.
    blk_bytes = (TQ * Din * 2 + S * Din * 2                        # activations (bf16)
                 + (3 * Din * HP + HP * Dout) * 2                  # weights (bf16)
                 + 3 * TQ * HP * 2 + 3 * S * HP * 2                # RoPE tables (bf16)
                 + TQ * Dout * curr_state.dtype.itemsize)          # output tile
    est = 2 * blk_bytes + 2 * S * HP * 2
    vmem_limit = int(min(max(2 * est + (16 << 20), 32 << 20), 64 << 20))

    flops = (2 * B * T * Din * HP                 # Q projection
             + 2 * B * S * Din * 2 * HP           # K/V projection (once per batch)
             + 4 * B * H * T * S * P              # QK^T and PV
             + 2 * B * T * HP * Dout)             # output projection
    transcendentals = B * H * T * S
    bytes_accessed = ((B * T * Din + B * S * Din) * 2
                      + B * T * Dout * curr_state.dtype.itemsize
                      + (3 * Din * HP + HP * Dout) * 2
                      + (T + S) * 3 * HP * 2)
    cost = pl.CostEstimate(flops=int(flops),
                           transcendentals=int(transcendentals),
                           bytes_accessed=int(bytes_accessed))

    return pl.pallas_call(
        kernel,
        out_shape=jax.ShapeDtypeStruct((B, T, Dout), curr_state.dtype),
        grid_spec=grid_spec,
        compiler_params=pltpu.CompilerParams(
            # Query-tile axis is "arbitrary": the K/V scratch carries state
            # across it.  Batch axis stays "parallel" for megacore sharding.
            dimension_semantics=("parallel", "arbitrary"),
            vmem_limit_bytes=vmem_limit),
        cost_estimate=cost,
    )(cs_b, at_b, wq_b, wk_b, wv_b, wo_b,
      cosq, sinqu, sinqd, cosk, sinku, sinkd)


def reference_forward(curr_state, attend_to, wq, wkv, wo, *,
                      n_heads, proj_size, n_rotate,
                      pos_offset=0, rope_base=10000.0):
    """Pure-JAX f32 reference mirroring the PyTorch module (mask=None)."""
    B, T, _ = curr_state.shape
    S = attend_to.shape[1]
    H, P, NR = n_heads, proj_size, n_rotate

    q = curr_state @ wq
    kv = attend_to @ wkv
    k, v = kv[..., :H * P], kv[..., H * P:]

    def to_heads(x):
        return x.reshape(*x.shape[:-1], H, P).transpose(0, 2, 1, 3)   # [B,H,L,P]

    q, k, v = to_heads(q), to_heads(k), to_heads(v)

    if NR > 0:
        half = NR // 2
        inv_freq = 1.0 / (rope_base ** (jnp.arange(0, NR, 2,
                                                   dtype=jnp.float32) / NR))

        def rot(x, offset):
            L = x.shape[-2]
            t = jnp.arange(L, dtype=jnp.float32) + float(offset)
            f = t[:, None] * inv_freq[None, :]
            cos, sin = jnp.cos(f), jnp.sin(f)
            x1, x2 = x[..., :half], x[..., half:NR]
            r1 = x1 * cos - x2 * sin
            r2 = x2 * cos + x1 * sin
            return jnp.concatenate([r1, r2, x[..., NR:]], axis=-1)

        q = rot(q, pos_offset)
        k = rot(k, 0)

    scale = 1.0 / math.sqrt(P)
    scores = jnp.einsum('bhtd,bhsd->bhts', q, k) * scale
    probs = jax.nn.softmax(scores, axis=-1)
    o = jnp.einsum('bhts,bhsd->bhtd', probs, v)
    o = o.transpose(0, 2, 1, 3).reshape(B, T, H * P)
    return o @ wo


if __name__ == "__main__":
    # Module config: state_size=128, n_heads=4 -> projection_size=32,
    # rotate_fraction=0.5 -> n_rotate=16 (even).  Small but lane-aligned
    # shapes (H*P = Dout = 128); T gives two query tiles per batch so the
    # per-batch K/V caching path is exercised.
    state_size, n_heads = 128, 4
    proj_size = state_size // n_heads
    n_rotate = int(0.5 * proj_size)
    n_rotate -= n_rotate % 2
    input_size = state_size
    output_size = state_size

    B, T, S = 2, 256, 256

    key = jax.random.PRNGKey(0)
    k_cs, k_at, k_wq, k_wkv, k_wo = jax.random.split(key, 5)

    curr_state = jax.random.normal(k_cs, (B, T, input_size), jnp.float32)
    attend_to = jax.random.normal(k_at, (B, S, input_size), jnp.float32)

    HP = n_heads * proj_size

    def xavier_uniform(k, fan_in, fan_out):
        a = math.sqrt(6.0 / (fan_in + fan_out))
        return jax.random.uniform(k, (fan_in, fan_out), jnp.float32, -a, a)

    wq = xavier_uniform(k_wq, input_size, HP)
    wkv = xavier_uniform(k_wkv, input_size, 2 * HP)
    bound = 1.0 / math.sqrt(HP)                     # torch Linear default init
    wo = jax.random.uniform(k_wo, (HP, output_size), jnp.float32, -bound, bound)

    out = fast_rope_attention(curr_state, attend_to, wq, wkv, wo,
                              n_heads=n_heads, proj_size=proj_size,
                              n_rotate=n_rotate, pos_offset=0)
    out = jax.block_until_ready(out)

    ref = reference_forward(curr_state, attend_to, wq, wkv, wo,
                            n_heads=n_heads, proj_size=proj_size,
                            n_rotate=n_rotate, pos_offset=0)
    assert out.shape == (B, T, output_size)
    # Kernel uses bf16 MXU operands / bf16 activations+tables and an
    # approximate softmax reciprocal; compare against the f32 reference with a
    # mixed-precision tolerance.
    assert jnp.allclose(out, ref, rtol=6e-2, atol=6e-2), \
        f"max err {jnp.max(jnp.abs(out - ref))}"

    print("KERNEL_OK")
</pallas_src>

<mosaic_0001>
module attributes {stable_mosaic.version = 11 : i64} {
  func.func @_fast_rope_attn_kernel(%arg0: i32, %arg1: i32, %arg2: memref<1x128x128xbf16, #tpu.memory_space<vmem>>, %arg3: memref<1x256x128xbf16, #tpu.memory_space<vmem>>, %arg4: memref<128x128xbf16, #tpu.memory_space<vmem>>, %arg5: memref<128x128xbf16, #tpu.memory_space<vmem>>, %arg6: memref<128x128xbf16, #tpu.memory_space<vmem>>, %arg7: memref<128x128xbf16, #tpu.memory_space<vmem>>, %arg8: memref<128x128xbf16, #tpu.memory_space<vmem>>, %arg9: memref<128x128xbf16, #tpu.memory_space<vmem>>, %arg10: memref<128x128xbf16, #tpu.memory_space<vmem>>, %arg11: memref<256x128xbf16, #tpu.memory_space<vmem>>, %arg12: memref<256x128xbf16, #tpu.memory_space<vmem>>, %arg13: memref<256x128xbf16, #tpu.memory_space<vmem>>, %arg14: memref<1x128x128xf32, #tpu.memory_space<vmem>>, %arg15: memref<256x128xbf16, #tpu.memory_space<vmem>>, %arg16: memref<256x128xbf16, #tpu.memory_space<vmem>>) attributes {dimension_semantics = [#tpu.dimension_semantics<parallel>, #tpu.dimension_semantics<arbitrary>], iteration_bounds = array<i64: 2, 2>, scalar_prefetch = 0 : i64, scratch_operands = 2 : i64, tpu.core_type = #tpu.core_type<tc>, window_params = [{transform_indices = @transform_0, window_bounds = array<i64: 1, 128, 128>}, {transform_indices = @transform_1, window_bounds = array<i64: 1, 256, 128>}, {pipeline_mode = #tpu.pipeline_mode<synchronous>, transform_indices = @transform_2, window_bounds = array<i64: 128, 128>}, {pipeline_mode = #tpu.pipeline_mode<synchronous>, transform_indices = @transform_3, window_bounds = array<i64: 128, 128>}, {pipeline_mode = #tpu.pipeline_mode<synchronous>, transform_indices = @transform_4, window_bounds = array<i64: 128, 128>}, {pipeline_mode = #tpu.pipeline_mode<synchronous>, transform_indices = @transform_5, window_bounds = array<i64: 128, 128>}, {transform_indices = @transform_6, window_bounds = array<i64: 128, 128>}, {transform_indices = @transform_7, window_bounds = array<i64: 128, 128>}, {transform_indices = @transform_8, window_bounds = array<i64: 128, 128>}, {pipeline_mode = #tpu.pipeline_mode<synchronous>, transform_indices = @transform_9, window_bounds = array<i64: 256, 128>}, {pipeline_mode = #tpu.pipeline_mode<synchronous>, transform_indices = @transform_10, window_bounds = array<i64: 256, 128>}, {pipeline_mode = #tpu.pipeline_mode<synchronous>, transform_indices = @transform_11, window_bounds = array<i64: 256, 128>}, {transform_indices = @transform_12, window_bounds = array<i64: 1, 128, 128>}]} {
    %c0_i32 = arith.constant 0 : i32
    %0 = arith.cmpi eq, %arg1, %c0_i32 : i32
    %1 = arith.extui %0 : i1 to i32
    %c0_i32_0 = arith.constant 0 : i32
    %2 = arith.cmpi ne, %1, %c0_i32_0 : i32
    scf.if %2 {
      %c0_41 = arith.constant 0 : index
      %c0_42 = arith.constant 0 : index
      %c0_43 = arith.constant 0 : index
      %102 = vector.load %arg3[%c0_41, %c0_42, %c0_43] : memref<1x256x128xbf16, #tpu.memory_space<vmem>>, vector<1x256x128xbf16>
      %103 = vector.shape_cast %102 : vector<1x256x128xbf16> to vector<256x128xbf16>
      %c0_44 = arith.constant 0 : index
      %c0_45 = arith.constant 0 : index
      %104 = vector.load %arg5[%c0_44, %c0_45] : memref<128x128xbf16, #tpu.memory_space<vmem>>, vector<128x128xbf16>
      %cst_46 = arith.constant dense<0.000000e+00> : vector<256x128xf32>
      %105 = tpu.matmul %103, %104, %cst_46 {dimension_numbers = #tpu.dot_dimension_numbers<[1], [0], [0], [1], [0, 0, 1, 1], [], []>} : vector<256x128xbf16>, vector<128x128xbf16>, vector<256x128xf32> -> vector<256x128xf32>
      %c0_47 = arith.constant 0 : index
      %c0_48 = arith.constant 0 : index
      %106 = vector.load %arg6[%c0_47, %c0_48] : memref<128x128xbf16, #tpu.memory_space<vmem>>, vector<128x128xbf16>
      %cst_49 = arith.constant dense<0.000000e+00> : vector<256x128xf32>
      %107 = tpu.matmul %103, %106, %cst_49 {dimension_numbers = #tpu.dot_dimension_numbers<[1], [0], [0], [1], [0, 0, 1, 1], [], []>} : vector<256x128xbf16>, vector<128x128xbf16>, vector<256x128xf32> -> vector<256x128xf32>
      %c120_i32_50 = arith.constant 120 : i32
      %108 = tpu.dynamic_rotate %105 by %c120_i32_50 dim 1 : vector<256x128xf32>, i32 -> vector<256x128xf32>
      %c8_i32_51 = arith.constant 8 : i32
      %109 = tpu.dynamic_rotate %105 by %c8_i32_51 dim 1 : vector<256x128xf32>, i32 -> vector<256x128xf32>
      %c0_52 = arith.constant 0 : index
      %c0_53 = arith.constant 0 : index
      %110 = vector.load %arg11[%c0_52, %c0_53] : memref<256x128xbf16, #tpu.memory_space<vmem>>, vector<256x128xbf16>
      %111 = arith.extf %110 : vector<256x128xbf16> to vector<256x128xf32>
      %112 = arith.mulf %105, %111 : vector<256x128xf32>
      %c0_54 = arith.constant 0 : index
      %c0_55 = arith.constant 0 : index
      %113 = vector.load %arg12[%c0_54, %c0_55] : memref<256x128xbf16, #tpu.memory_space<vmem>>, vector<256x128xbf16>
      %114 = arith.extf %113 : vector<256x128xbf16> to vector<256x128xf32>
      %115 = arith.mulf %108, %114 : vector<256x128xf32>
      %116 = arith.addf %112, %115 : vector<256x128xf32>
      %c0_56 = arith.constant 0 : index
      %c0_57 = arith.constant 0 : index
      %117 = vector.load %arg13[%c0_56, %c0_57] : memref<256x128xbf16, #tpu.memory_space<vmem>>, vector<256x128xbf16>
      %118 = arith.extf %117 : vector<256x128xbf16> to vector<256x128xf32>
      %119 = arith.mulf %109, %118 : vector<256x128xf32>
      %120 = arith.addf %116, %119 : vector<256x128xf32>
      %121 = arith.truncf %120 : vector<256x128xf32> to vector<256x128xbf16>
      %c0_58 = arith.constant 0 : index
      %c0_59 = arith.constant 0 : index
      %122 = vector.load %arg15[%c0_58, %c0_59] : memref<256x128xbf16, #tpu.memory_space<vmem>>, vector<256x128xbf16>
      tpu.vector_store %arg15[%c0_58, %c0_59], %121 {strides = array<i32>} : memref<256x128xbf16, #tpu.memory_space<vmem>>, vector<256x128xbf16>,
      %123 = arith.truncf %107 : vector<256x128xf32> to vector<256x128xbf16>
      %c0_60 = arith.constant 0 : index
      %c0_61 = arith.constant 0 : index
      %124 = vector.load %arg16[%c0_60, %c0_61] : memref<256x128xbf16, #tpu.memory_space<vmem>>, vector<256x128xbf16>
      tpu.vector_store %arg16[%c0_60, %c0_61], %123 {strides = array<i32>} : memref<256x128xbf16, #tpu.memory_space<vmem>>, vector<256x128xbf16>,
    } else {
    }
    %c0 = arith.constant 0 : index
    %c0_1 = arith.constant 0 : index
    %c0_2 = arith.constant 0 : index
    %3 = vector.load %arg2[%c0, %c0_1, %c0_2] : memref<1x128x128xbf16, #tpu.memory_space<vmem>>, vector<1x128x128xbf16>
    %4 = vector.shape_cast %3 : vector<1x128x128xbf16> to vector<128x128xbf16>
    %c0_3 = arith.constant 0 : index
    %c0_4 = arith.constant 0 : index
    %5 = vector.load %arg4[%c0_3, %c0_4] : memref<128x128xbf16, #tpu.memory_space<vmem>>, vector<128x128xbf16>
    %cst = arith.constant dense<0.000000e+00> : vector<128x128xf32>
    %6 = tpu.matmul %4, %5, %cst {dimension_numbers = #tpu.dot_dimension_numbers<[1], [0], [0], [1], [0, 0, 1, 1], [], []>} : vector<128x128xbf16>, vector<128x128xbf16>, vector<128x128xf32> -> vector<128x128xf32>
    %c120_i32 = arith.constant 120 : i32
    %7 = tpu.dynamic_rotate %6 by %c120_i32 dim 1 : vector<128x128xf32>, i32 -> vector<128x128xf32>
    %c8_i32 = arith.constant 8 : i32
    %8 = tpu.dynamic_rotate %6 by %c8_i32 dim 1 : vector<128x128xf32>, i32 -> vector<128x128xf32>
    %c0_5 = arith.constant 0 : index
    %c0_6 = arith.constant 0 : index
    %9 = vector.load %arg8[%c0_5, %c0_6] : memref<128x128xbf16, #tpu.memory_space<vmem>>, vector<128x128xbf16>
    %10 = arith.extf %9 : vector<128x128xbf16> to vector<128x128xf32>
    %11 = arith.mulf %6, %10 : vector<128x128xf32>
    %c0_7 = arith.constant 0 : index
    %c0_8 = arith.constant 0 : index
    %12 = vector.load %arg9[%c0_7, %c0_8] : memref<128x128xbf16, #tpu.memory_space<vmem>>, vector<128x128xbf16>
    %13 = arith.extf %12 : vector<128x128xbf16> to vector<128x128xf32>
    %14 = arith.mulf %7, %13 : vector<128x128xf32>
    %15 = arith.addf %11, %14 : vector<128x128xf32>
    %c0_9 = arith.constant 0 : index
    %c0_10 = arith.constant 0 : index
    %16 = vector.load %arg10[%c0_9, %c0_10] : memref<128x128xbf16, #tpu.memory_space<vmem>>, vector<128x128xbf16>
    %17 = arith.extf %16 : vector<128x128xbf16> to vector<128x128xf32>
    %18 = arith.mulf %8, %17 : vector<128x128xf32>
    %19 = arith.addf %15, %18 : vector<128x128xf32>
    %20 = arith.truncf %19 : vector<128x128xf32> to vector<128x128xbf16>
    %c0_11 = arith.constant 0 : index
    %c0_12 = arith.constant 0 : index
    %21 = vector.load %arg15[%c0_11, %c0_12] : memref<256x128xbf16, #tpu.memory_space<vmem>>, vector<256x128xbf16>
    %c0_13 = arith.constant 0 : index
    %c0_14 = arith.constant 0 : index
    %22 = vector.load %arg16[%c0_13, %c0_14] : memref<256x128xbf16, #tpu.memory_space<vmem>>, vector<256x128xbf16>
    %23 = vector.extract_strided_slice %20 {offsets = [0, 0], sizes = [128, 32], strides = [1, 1]} : vector<128x128xbf16> to vector<128x32xbf16>
    %24 = vector.extract_strided_slice %21 {offsets = [0, 0], sizes = [256, 32], strides = [1, 1]} : vector<256x128xbf16> to vector<256x32xbf16>
    %25 = vector.extract_strided_slice %22 {offsets = [0, 0], sizes = [256, 32], strides = [1, 1]} : vector<256x128xbf16> to vector<256x32xbf16>
    %cst_15 = arith.constant dense<0.000000e+00> : vector<128x256xf32>
    %26 = tpu.matmul %23, %24, %cst_15 {dimension_numbers = #tpu.dot_dimension_numbers<[1], [1], [0], [0], [0, 0, 1, 0], [], []>} : vector<128x32xbf16>, vector<256x32xbf16>, vector<128x256xf32> -> vector<128x256xf32>
    %cst_16 = arith.constant 0.176776692 : f32
    %27 = vector.broadcast %cst_16 : f32 to vector<128x256xf32>
    %28 = arith.mulf %26, %27 : vector<128x256xf32>
    %cst_17 = arith.constant dense<0xFF800000> : vector<128xf32>
    %29 = vector.multi_reduction <maximumf>, %28, %cst_17 [1] : vector<128x256xf32> to vector<128xf32>
    %30 = vector.shape_cast %29 : vector<128xf32> to vector<128x1xf32>
    %31 = vector.broadcast %30 : vector<128x1xf32> to vector<128x256xf32>
    %32 = arith.subf %28, %31 : vector<128x256xf32>
    %33 = math.exp %32 : vector<128x256xf32>
    %cst_18 = arith.constant dense<0.000000e+00> : vector<128xf32>
    %34 = vector.multi_reduction <add>, %33, %cst_18 [1] : vector<128x256xf32> to vector<128xf32>
    %35 = vector.shape_cast %34 : vector<128xf32> to vector<128x1xf32>
    %36 = tpu.reciprocal %35 {approx = true} : vector<128x1xf32> -> vector<128x1xf32>
    %37 = vector.broadcast %36 : vector<128x1xf32> to vector<128x256xf32>
    %38 = arith.mulf %33, %37 : vector<128x256xf32>
    %39 = arith.truncf %38 : vector<128x256xf32> to vector<128x256xbf16>
    %cst_19 = arith.constant dense<0.000000e+00> : vector<128x32xf32>
    %40 = tpu.matmul %39, %25, %cst_19 {dimension_numbers = #tpu.dot_dimension_numbers<[1], [0], [0], [1], [0, 0, 1, 1], [], []>} : vector<128x256xbf16>, vector<256x32xbf16>, vector<128x32xf32> -> vector<128x32xf32>
    %41 = vector.extract_strided_slice %20 {offsets = [0, 32], sizes = [128, 32], strides = [1, 1]} : vector<128x128xbf16> to vector<128x32xbf16>
    %42 = vector.extract_strided_slice %21 {offsets = [0, 32], sizes = [256, 32], strides = [1, 1]} : vector<256x128xbf16> to vector<256x32xbf16>
    %43 = vector.extract_strided_slice %22 {offsets = [0, 32], sizes = [256, 32], strides = [1, 1]} : vector<256x128xbf16> to vector<256x32xbf16>
    %cst_20 = arith.constant dense<0.000000e+00> : vector<128x256xf32>
    %44 = tpu.matmul %41, %42, %cst_20 {dimension_numbers = #tpu.dot_dimension_numbers<[1], [1], [0], [0], [0, 0, 1, 0], [], []>} : vector<128x32xbf16>, vector<256x32xbf16>, vector<128x256xf32> -> vector<128x256xf32>
    %cst_21 = arith.constant 0.176776692 : f32
    %45 = vector.broadcast %cst_21 : f32 to vector<128x256xf32>
    %46 = arith.mulf %44, %45 : vector<128x256xf32>
    %cst_22 = arith.constant dense<0xFF800000> : vector<128xf32>
    %47 = vector.multi_reduction <maximumf>, %46, %cst_22 [1] : vector<128x256xf32> to vector<128xf32>
    %48 = vector.shape_cast %47 : vector<128xf32> to vector<128x1xf32>
    %49 = vector.broadcast %48 : vector<128x1xf32> to vector<128x256xf32>
    %50 = arith.subf %46, %49 : vector<128x256xf32>
    %51 = math.exp %50 : vector<128x256xf32>
    %cst_23 = arith.constant dense<0.000000e+00> : vector<128xf32>
    %52 = vector.multi_reduction <add>, %51, %cst_23 [1] : vector<128x256xf32> to vector<128xf32>
    %53 = vector.shape_cast %52 : vector<128xf32> to vector<128x1xf32>
    %54 = tpu.reciprocal %53 {approx = true} : vector<128x1xf32> -> vector<128x1xf32>
    %55 = vector.broadcast %54 : vector<128x1xf32> to vector<128x256xf32>
    %56 = arith.mulf %51, %55 : vector<128x256xf32>
    %57 = arith.truncf %56 : vector<128x256xf32> to vector<128x256xbf16>
    %cst_24 = arith.constant dense<0.000000e+00> : vector<128x32xf32>
    %58 = tpu.matmul %57, %43, %cst_24 {dimension_numbers = #tpu.dot_dimension_numbers<[1], [0], [0], [1], [0, 0, 1, 1], [], []>} : vector<128x256xbf16>, vector<256x32xbf16>, vector<128x32xf32> -> vector<128x32xf32>
    %59 = vector.extract_strided_slice %20 {offsets = [0, 64], sizes = [128, 32], strides = [1, 1]} : vector<128x128xbf16> to vector<128x32xbf16>
    %60 = vector.extract_strided_slice %21 {offsets = [0, 64], sizes = [256, 32], strides = [1, 1]} : vector<256x128xbf16> to vector<256x32xbf16>
    %61 = vector.extract_strided_slice %22 {offsets = [0, 64], sizes = [256, 32], strides = [1, 1]} : vector<256x128xbf16> to vector<256x32xbf16>
    %cst_25 = arith.constant dense<0.000000e+00> : vector<128x256xf32>
    %62 = tpu.matmul %59, %60, %cst_25 {dimension_numbers = #tpu.dot_dimension_numbers<[1], [1], [0], [0], [0, 0, 1, 0], [], []>} : vector<128x32xbf16>, vector<256x32xbf16>, vector<128x256xf32> -> vector<128x256xf32>
    %cst_26 = arith.constant 0.176776692 : f32
    %63 = vector.broadcast %cst_26 : f32 to vector<128x256xf32>
    %64 = arith.mulf %62, %63 : vector<128x256xf32>
    %cst_27 = arith.constant dense<0xFF800000> : vector<128xf32>
    %65 = vector.multi_reduction <maximumf>, %64, %cst_27 [1] : vector<128x256xf32> to vector<128xf32>
    %66 = vector.shape_cast %65 : vector<128xf32> to vector<128x1xf32>
    %67 = vector.broadcast %66 : vector<128x1xf32> to vector<128x256xf32>
    %68 = arith.subf %64, %67 : vector<128x256xf32>
    %69 = math.exp %68 : vector<128x256xf32>
    %cst_28 = arith.constant dense<0.000000e+00> : vector<128xf32>
    %70 = vector.multi_reduction <add>, %69, %cst_28 [1] : vector<128x256xf32> to vector<128xf32>
    %71 = vector.shape_cast %70 : vector<128xf32> to vector<128x1xf32>
    %72 = tpu.reciprocal %71 {approx = true} : vector<128x1xf32> -> vector<128x1xf32>
    %73 = vector.broadcast %72 : vector<128x1xf32> to vector<128x256xf32>
    %74 = arith.mulf %69, %73 : vector<128x256xf32>
    %75 = arith.truncf %74 : vector<128x256xf32> to vector<128x256xbf16>
    %cst_29 = arith.constant dense<0.000000e+00> : vector<128x32xf32>
    %76 = tpu.matmul %75, %61, %cst_29 {dimension_numbers = #tpu.dot_dimension_numbers<[1], [0], [0], [1], [0, 0, 1, 1], [], []>} : vector<128x256xbf16>, vector<256x32xbf16>, vector<128x32xf32> -> vector<128x32xf32>
    %77 = vector.extract_strided_slice %20 {offsets = [0, 96], sizes = [128, 32], strides = [1, 1]} : vector<128x128xbf16> to vector<128x32xbf16>
    %78 = vector.extract_strided_slice %21 {offsets = [0, 96], sizes = [256, 32], strides = [1, 1]} : vector<256x128xbf16> to vector<256x32xbf16>
    %79 = vector.extract_strided_slice %22 {offsets = [0, 96], sizes = [256, 32], strides = [1, 1]} : vector<256x128xbf16> to vector<256x32xbf16>
    %cst_30 = arith.constant dense<0.000000e+00> : vector<128x256xf32>
    %80 = tpu.matmul %77, %78, %cst_30 {dimension_numbers = #tpu.dot_dimension_numbers<[1], [1], [0], [0], [0, 0, 1, 0], [], []>} : vector<128x32xbf16>, vector<256x32xbf16>, vector<128x256xf32> -> vector<128x256xf32>
    %cst_31 = arith.constant 0.176776692 : f32
    %81 = vector.broadcast %cst_31 : f32 to vector<128x256xf32>
    %82 = arith.mulf %80, %81 : vector<128x256xf32>
    %cst_32 = arith.constant dense<0xFF800000> : vector<128xf32>
    %83 = vector.multi_reduction <maximumf>, %82, %cst_32 [1] : vector<128x256xf32> to vector<128xf32>
    %84 = vector.shape_cast %83 : vector<128xf32> to vector<128x1xf32>
    %85 = vector.broadcast %84 : vector<128x1xf32> to vector<128x256xf32>
    %86 = arith.subf %82, %85 : vector<128x256xf32>
    %87 = math.exp %86 : vector<128x256xf32>
    %cst_33 = arith.constant dense<0.000000e+00> : vector<128xf32>
    %88 = vector.multi_reduction <add>, %87, %cst_33 [1] : vector<128x256xf32> to vector<128xf32>
    %89 = vector.shape_cast %88 : vector<128xf32> to vector<128x1xf32>
    %90 = tpu.reciprocal %89 {approx = true} : vector<128x1xf32> -> vector<128x1xf32>
    %91 = vector.broadcast %90 : vector<128x1xf32> to vector<128x256xf32>
    %92 = arith.mulf %87, %91 : vector<128x256xf32>
    %93 = arith.truncf %92 : vector<128x256xf32> to vector<128x256xbf16>
    %cst_34 = arith.constant dense<0.000000e+00> : vector<128x32xf32>
    %94 = tpu.matmul %93, %79, %cst_34 {dimension_numbers = #tpu.dot_dimension_numbers<[1], [0], [0], [1], [0, 0, 1, 1], [], []>} : vector<128x256xbf16>, vector<256x32xbf16>, vector<128x32xf32> -> vector<128x32xf32>
    %95 = tpu.concatenate %40, %58, %76, %94 in 1 : vector<128x32xf32>, vector<128x32xf32>, vector<128x32xf32>, vector<128x32xf32> -> vector<128x128xf32>
    %96 = arith.truncf %95 : vector<128x128xf32> to vector<128x128xbf16>
    %c0_35 = arith.constant 0 : index
    %c0_36 = arith.constant 0 : index
    %97 = vector.load %arg7[%c0_35, %c0_36] : memref<128x128xbf16, #tpu.memory_space<vmem>>, vector<128x128xbf16>
    %cst_37 = arith.constant dense<0.000000e+00> : vector<128x128xf32>
    %98 = tpu.matmul %96, %97, %cst_37 {dimension_numbers = #tpu.dot_dimension_numbers<[1], [0], [0], [1], [0, 0, 1, 1], [], []>} : vector<128x128xbf16>, vector<128x128xbf16>, vector<128x128xf32> -> vector<128x128xf32>
    %c0_38 = arith.constant 0 : index
    %c0_39 = arith.constant 0 : index
    %c0_40 = arith.constant 0 : index
    %99 = vector.load %arg14[%c0_38, %c0_39, %c0_40] : memref<1x128x128xf32, #tpu.memory_space<vmem>>, vector<1x128x128xf32>
    %100 = vector.shape_cast %99 : vector<1x128x128xf32> to vector<128x128xf32>
    %101 = vector.shape_cast %98 : vector<128x128xf32> to vector<1x128x128xf32>
    tpu.vector_store %arg14[%c0_38, %c0_39, %c0_40], %101 {strides = array<i32>} : memref<1x128x128xf32, #tpu.memory_space<vmem>>, vector<1x128x128xf32>,
    return
  }
  func.func @transform_0(%arg0: i32, %arg1: i32) -> (i32, i32, i32) {
    %c0_i32 = arith.constant 0 : i32
    %c0_i32_0 = arith.constant 0 : i32
    return %arg0, %arg1, %c0_i32 : i32, i32, i32
  }
  func.func @transform_1(%arg0: i32, %arg1: i32) -> (i32, i32, i32) {
    %c0_i32 = arith.constant 0 : i32
    %c0_i32_0 = arith.constant 0 : i32
    %c0_i32_1 = arith.constant 0 : i32
    return %arg0, %c0_i32, %c0_i32_0 : i32, i32, i32
  }
  func.func @transform_2(%arg0: i32, %arg1: i32) -> (i32, i32) {
    %c0_i32 = arith.constant 0 : i32
    %c0_i32_0 = arith.constant 0 : i32
    %c0_i32_1 = arith.constant 0 : i32
    return %c0_i32, %c0_i32_0 : i32, i32
  }
  func.func @transform_3(%arg0: i32, %arg1: i32) -> (i32, i32) {
    %c0_i32 = arith.constant 0 : i32
    %c0_i32_0 = arith.constant 0 : i32
    %c0_i32_1 = arith.constant 0 : i32
    return %c0_i32, %c0_i32_0 : i32, i32
  }
  func.func @transform_4(%arg0: i32, %arg1: i32) -> (i32, i32) {
    %c0_i32 = arith.constant 0 : i32
    %c0_i32_0 = arith.constant 0 : i32
    %c0_i32_1 = arith.constant 0 : i32
    return %c0_i32, %c0_i32_0 : i32, i32
  }
  func.func @transform_5(%arg0: i32, %arg1: i32) -> (i32, i32) {
    %c0_i32 = arith.constant 0 : i32
    %c0_i32_0 = arith.constant 0 : i32
    %c0_i32_1 = arith.constant 0 : i32
    return %c0_i32, %c0_i32_0 : i32, i32
  }
  func.func @transform_6(%arg0: i32, %arg1: i32) -> (i32, i32) {
    %c0_i32 = arith.constant 0 : i32
    %c0_i32_0 = arith.constant 0 : i32
    return %arg1, %c0_i32 : i32, i32
  }
  func.func @transform_7(%arg0: i32, %arg1: i32) -> (i32, i32) {
    %c0_i32 = arith.constant 0 : i32
    %c0_i32_0 = arith.constant 0 : i32
    return %arg1, %c0_i32 : i32, i32
  }
  func.func @transform_8(%arg0: i32, %arg1: i32) -> (i32, i32) {
    %c0_i32 = arith.constant 0 : i32
    %c0_i32_0 = arith.constant 0 : i32
    return %arg1, %c0_i32 : i32, i32
  }
  func.func @transform_9(%arg0: i32, %arg1: i32) -> (i32, i32) {
    %c0_i32 = arith.constant 0 : i32
    %c0_i32_0 = arith.constant 0 : i32
    %c0_i32_1 = arith.constant 0 : i32
    return %c0_i32, %c0_i32_0 : i32, i32
  }
  func.func @transform_10(%arg0: i32, %arg1: i32) -> (i32, i32) {
    %c0_i32 = arith.constant 0 : i32
    %c0_i32_0 = arith.constant 0 : i32
    %c0_i32_1 = arith.constant 0 : i32
    return %c0_i32, %c0_i32_0 : i32, i32
  }
  func.func @transform_11(%arg0: i32, %arg1: i32) -> (i32, i32) {
    %c0_i32 = arith.constant 0 : i32
    %c0_i32_0 = arith.constant 0 : i32
    %c0_i32_1 = arith.constant 0 : i32
    return %c0_i32, %c0_i32_0 : i32, i32
  }
  func.func @transform_12(%arg0: i32, %arg1: i32) -> (i32, i32, i32) {
    %c0_i32 = arith.constant 0 : i32
    %c0_i32_0 = arith.constant 0 : i32
    return %arg0, %arg1, %c0_i32 : i32, i32, i32
  }
}

</mosaic_0001>

<llo_original>
// kernel: tpu_custom_call.1
$region0: #{tpu_custom_call.1}
  #allocation0 [shape = 'u32[]', space=smem, size = 0x4, offset = 0x4, fixed_abs, tag = 'smem constant byte address 0x4 - core index']
  #allocation1 [shape = 'u32[144,128]{1,0:T(1,128)}', space=vmem, size = 0x12000, scoped, tag = 'internal scratch']
  #allocation2 [shape = 'bf16[256,128]{1,0:T(8,128)(2,1)}', space=vmem, size = 0x10000, scoped, tag = 'scratch operand']
  #allocation3 [shape = 'bf16[256,128]{1,0:T(8,128)(2,1)}', space=vmem, size = 0x10000, scoped, tag = 'scratch operand']
  %s0 = inlined_call_operand.hbm [shape: bf16[2,256,128], index: 0, kind: input, shape index: {}]
  %s1 = inlined_call_operand.hbm [shape: bf16[2,256,128], index: 1, kind: input, shape index: {}]
  %s2 = inlined_call_operand.hbm [shape: bf16[128,128], index: 2, kind: input, shape index: {}]
  %s3 = inlined_call_operand.hbm [shape: bf16[128,128], index: 3, kind: input, shape index: {}]
  %s4 = inlined_call_operand.hbm [shape: bf16[128,128], index: 4, kind: input, shape index: {}]
  %s5 = inlined_call_operand.hbm [shape: bf16[128,128], index: 5, kind: input, shape index: {}]
  %s6 = inlined_call_operand.hbm [shape: bf16[256,128], index: 6, kind: input, shape index: {}]
  %s7 = inlined_call_operand.hbm [shape: bf16[256,128], index: 7, kind: input, shape index: {}]
  %s8 = inlined_call_operand.hbm [shape: bf16[256,128], index: 8, kind: input, shape index: {}]
  %s9 = inlined_call_operand.hbm [shape: bf16[256,128], index: 9, kind: input, shape index: {}]
  %s10 = inlined_call_operand.hbm [shape: bf16[256,128], index: 10, kind: input, shape index: {}]
  %s11 = inlined_call_operand.hbm [shape: bf16[256,128], index: 11, kind: input, shape index: {}]
  %s12 = inlined_call_operand.hbm [shape: f32[2,256,128], index: 12, kind: output, shape index: {}]
  %s13 = sld [smem:[#allocation0]]
  $region133: #{tpu_custom_call.1} parent=0
    _
  %s15 = ssub.s32 1, %s13
  %s16 = scalar_select 0, %s15, %s13
  $region1: #{tpu_custom_call.1} parent=0
    #allocation4 [shape = 'u8[65536]{0}', space=vmem, size = 0x10000, scoped, tag = 'input window, operand 0']
    #allocation5 [shape = 's32[2]{0}', space=sflag, size = 0x8, scoped, tag = 'scoped memory for tpu_custom_call.1']
    #allocation6 [shape = 's32[2]{0}', space=sflag, size = 0x8, scoped, tag = 'scoped memory for tpu_custom_call.1']
    #allocation7 [shape = 'u8[131072]{0}', space=vmem, size = 0x20000, scoped, tag = 'input window, operand 1']
    #allocation8 [shape = 's32[2]{0}', space=sflag, size = 0x8, scoped, tag = 'scoped memory for tpu_custom_call.1']
    #allocation9 [shape = 'u8[32768]{0}', space=vmem, size = 0x8000, scoped, tag = 'input window, operand 2, single buffered']
    #allocation10 [shape = 'u8[32768]{0}', space=vmem, size = 0x8000, scoped, tag = 'input window, operand 3, single buffered']
    #allocation11 [shape = 's32[1]{0}', space=sflag, size = 0x4, scoped, tag = 'scoped memory for tpu_custom_call.1']
    #allocation12 [shape = 'u8[32768]{0}', space=vmem, size = 0x8000, scoped, tag = 'input window, operand 4, single buffered']
    #allocation13 [shape = 'u8[32768]{0}', space=vmem, size = 0x8000, scoped, tag = 'input window, operand 5, single buffered']
    #allocation14 [shape = 's32[1]{0}', space=sflag, size = 0x4, scoped, tag = 'scoped memory for tpu_custom_call.1']
    #allocation15 [shape = 'u8[65536]{0}', space=vmem, size = 0x10000, scoped, tag = 'input window, operand 6']
    #allocation16 [shape = 'u8[65536]{0}', space=vmem, size = 0x10000, scoped, tag = 'input window, operand 7']
    #allocation17 [shape = 'u8[65536]{0}', space=vmem, size = 0x10000, scoped, tag = 'input window, operand 8']
    #allocation18 [shape = 'u8[65536]{0}', space=vmem, size = 0x10000, scoped, tag = 'input window, operand 9, single buffered']
    #allocation19 [shape = 'u8[65536]{0}', space=vmem, size = 0x10000, scoped, tag = 'input window, operand 10, single buffered']
    #allocation20 [shape = 'u8[65536]{0}', space=vmem, size = 0x10000, scoped, tag = 'input window, operand 11, single buffered']
    #allocation21 [shape = 'u8[131072]{0}', space=vmem, size = 0x20000, scoped, tag = 'output window, operand 0']
    %17 = vsyncpa [#allocation5], 0
    %s18 = scalar_lea.sflag [#allocation5], 1
    %19 = vsyncpa %s18, 0
    %20 = vsyncpa [#allocation8], 0
    %s21 = scalar_lea.sflag [#allocation8], 1
    %22 = vsyncpa %s21, 0
    %23 = vsyncpa [#allocation11], 0
    %24 = vsyncpa [#allocation14], 0
    %25 = vsyncpa [#allocation6], 0
    %s26 = scalar_lea.sflag [#allocation6], 1
    %27 = vsyncpa %s26, 0
    loop: start=0, step=1, limit=6
    $region2: #{tpu_custom_call.1} parent=1 // loop_pre_header
      _
    $region3: #{tpu_custom_call.1} parent=1 // loop_header
      %s29 = sphi 0, %s33
      %p30 = scmp.ge.s32.totalorder %s29, 6
      %s36 = sphi 0, %s48
      %s37 = sphi 0, %s44
      %s38 = sphi 0, %s36
      %s39 = sphi 0, %s37
      %s40 = sphi 0, %s38
      %s41 = sphi 0, %s39
      %s53 = sphi 0, %s55
      %s56 = sphi 0, %s53
      %s57 = sphi 0, %s56
      %s73 = sphi 0, %s57
      %s79 = sphi 0, %s81
      %s82 = sphi 0, %s79
      %s83 = sphi 0, %s82
      %s99 = sphi 0, %s83
      %s103 = sphi 0, %s103
      %s105 = sphi 0, %s103
      %s106 = sphi 0, %s105
      %s120 = sphi 0, %s106
      %s124 = sphi 0, %s124
      %s126 = sphi 0, %s124
      %s127 = sphi 0, %s126
      %s141 = sphi 0, %s127
      %s145 = sphi 0, %s145
      %s147 = sphi 0, %s145
      %s148 = sphi 0, %s147
      %s162 = sphi 0, %s148
      %s166 = sphi 0, %s166
      %s168 = sphi 0, %s166
      %s169 = sphi 0, %s168
      %s183 = sphi 0, %s169
      %s189 = sphi 0, %s191
      %s192 = sphi 0, %s189
      %s193 = sphi 0, %s192
      %s209 = sphi 0, %s193
      %s215 = sphi 0, %s217
      %s218 = sphi 0, %s215
      %s219 = sphi 0, %s218
      %s235 = sphi 0, %s219
      %s241 = sphi 0, %s243
      %s244 = sphi 0, %s241
      %s245 = sphi 0, %s244
      %s261 = sphi 0, %s245
      %s265 = sphi 0, %s265
      %s267 = sphi 0, %s265
      %s268 = sphi 0, %s267
      %s282 = sphi 0, %s268
      %s286 = sphi 0, %s286
      %s288 = sphi 0, %s286
      %s289 = sphi 0, %s288
      %s303 = sphi 0, %s289
      %s307 = sphi 0, %s307
      %s309 = sphi 0, %s307
      %s310 = sphi 0, %s309
      %s324 = sphi 0, %s310
      %s332 = sphi 0, %s334
      %s335 = sphi 0, %s332
      %s336 = sphi 0, %s335
      %s352 = sphi 0, %s336
    $region4: #{tpu_custom_call.1} parent=1 // loop_header_branch
      %32 = sbr.rel (%p30) target = $region8
    $region5: #{tpu_custom_call.1} parent=1 // loop_body
      %s34 = ssub.s32 %s29, 1
      %s35 = ssub.s32 %s29, 2
      %s42 = sadd.s32 1, %s37
      %p43 = scmp.ge.s32.totalorder %s42, 2
      %s44 = scalar_select %p43, 0, %s42
      %s45 = sadd.s32 1, %s36
      %s46 = scalar_select %p43, %s45, %s36
      %p47 = scmp.ge.s32.totalorder %s46, 2
      %s48 = scalar_select %p47, 0, %s46
      %s49 = ssub.s32 %s36, %s48
      %s50 = ssub.s32 %s37, %s44
      %s51 = sor.u32 %s49, %s50
      %p52 = scmp.eq.s32.totalorder %s51, 0
      %s54 = sadd.s32 %s53, 1
      %s55 = scalar_select %p52, %s53, %s54
      %p58 = pneg %p52
      %p59 = scmp.eq.s32.totalorder %s29, 3
      %p60 = por %p58, %p59
      %p61 = scmp.ne.s32.totalorder %s53, %s56
      %p62 = scmp.eq.s32.totalorder %s29, 0
      %p63 = por %p61, %p62
      %p64 = scmp.ne.s32.totalorder %s53, %s56
      %p65 = scmp.eq.s32.totalorder %s34, 3
      %p66 = por %p64, %p65
      %p67 = scmp.ne.s32.totalorder %s56, %s57
      %p68 = scmp.eq.s32.totalorder %s34, 0
      %p69 = por %p67, %p68
      %p70 = scmp.ne.s32.totalorder %s56, %s57
      %p71 = scmp.eq.s32.totalorder %s35, 3
      %p72 = por %p70, %p71
      %p74 = scmp.ne.s32.totalorder %s57, %s73
      %p75 = scmp.eq.s32.totalorder %s35, 0
      %p76 = por %p74, %p75
      %s77 = ssub.s32 %s36, %s48
      %p78 = scmp.eq.s32.totalorder %s77, 0
      %s80 = sadd.s32 %s79, 1
      %s81 = scalar_select %p78, %s79, %s80
      %p84 = pneg %p78
      %p85 = scmp.eq.s32.totalorder %s29, 3
      %p86 = por %p84, %p85
      %p87 = scmp.ne.s32.totalorder %s79, %s82
      %p88 = scmp.eq.s32.totalorder %s29, 0
      %p89 = por %p87, %p88
      %p90 = scmp.ne.s32.totalorder %s79, %s82
      %p91 = scmp.eq.s32.totalorder %s34, 3
      %p92 = por %p90, %p91
      %p93 = scmp.ne.s32.totalorder %s82, %s83
      %p94 = scmp.eq.s32.totalorder %s34, 0
      %p95 = por %p93, %p94
      %p96 = scmp.ne.s32.totalorder %s82, %s83
      %p97 = scmp.eq.s32.totalorder %s35, 3
      %p98 = por %p96, %p97
      %p100 = scmp.ne.s32.totalorder %s83, %s99
      %p101 = scmp.eq.s32.totalorder %s35, 0
      %p102 = por %p100, %p101
      %s104 = sadd.s32 %s103, 1
      %p107 = scmp.eq.s32.totalorder %s29, 3
      %p108 = scmp.ne.s32.totalorder %s103, %s105
      %p109 = scmp.eq.s32.totalorder %s29, 0
      %p110 = por %p108, %p109
      %p111 = scmp.ne.s32.totalorder %s103, %s105
      %p112 = scmp.eq.s32.totalorder %s34, 3
      %p113 = por %p111, %p112
      %p114 = scmp.ne.s32.totalorder %s105, %s106
      %p115 = scmp.eq.s32.totalorder %s34, 0
      %p116 = por %p114, %p115
      %p117 = scmp.ne.s32.totalorder %s105, %s106
      %p118 = scmp.eq.s32.totalorder %s35, 3
      %p119 = por %p117, %p118
      %p121 = scmp.ne.s32.totalorder %s106, %s120
      %p122 = scmp.eq.s32.totalorder %s35, 0
      %p123 = por %p121, %p122
      %s125 = sadd.s32 %s124, 1
      %p128 = scmp.eq.s32.totalorder %s29, 3
      %p129 = scmp.ne.s32.totalorder %s124, %s126
      %p130 = scmp.eq.s32.totalorder %s29, 0
      %p131 = por %p129, %p130
      %p132 = scmp.ne.s32.totalorder %s124, %s126
      %p133 = scmp.eq.s32.totalorder %s34, 3
      %p134 = por %p132, %p133
      %p135 = scmp.ne.s32.totalorder %s126, %s127
      %p136 = scmp.eq.s32.totalorder %s34, 0
      %p137 = por %p135, %p136
      %p138 = scmp.ne.s32.totalorder %s126, %s127
      %p139 = scmp.eq.s32.totalorder %s35, 3
      %p140 = por %p138, %p139
      %p142 = scmp.ne.s32.totalorder %s127, %s141
      %p143 = scmp.eq.s32.totalorder %s35, 0
      %p144 = por %p142, %p143
      %s146 = sadd.s32 %s145, 1
      %p149 = scmp.eq.s32.totalorder %s29, 3
      %p150 = scmp.ne.s32.totalorder %s145, %s147
      %p151 = scmp.eq.s32.totalorder %s29, 0
      %p152 = por %p150, %p151
      %p153 = scmp.ne.s32.totalorder %s145, %s147
      %p154 = scmp.eq.s32.totalorder %s34, 3
      %p155 = por %p153, %p154
      %p156 = scmp.ne.s32.totalorder %s147, %s148
      %p157 = scmp.eq.s32.totalorder %s34, 0
      %p158 = por %p156, %p157
      %p159 = scmp.ne.s32.totalorder %s147, %s148
      %p160 = scmp.eq.s32.totalorder %s35, 3
      %p161 = por %p159, %p160
      %p163 = scmp.ne.s32.totalorder %s148, %s162
      %p164 = scmp.eq.s32.totalorder %s35, 0
      %p165 = por %p163, %p164
      %s167 = sadd.s32 %s166, 1
      %p170 = scmp.eq.s32.totalorder %s29, 3
      %p171 = scmp.ne.s32.totalorder %s166, %s168
      %p172 = scmp.eq.s32.totalorder %s29, 0
      %p173 = por %p171, %p172
      %p174 = scmp.ne.s32.totalorder %s166, %s168
      %p175 = scmp.eq.s32.totalorder %s34, 3
      %p176 = por %p174, %p175
      %p177 = scmp.ne.s32.totalorder %s168, %s169
      %p178 = scmp.eq.s32.totalorder %s34, 0
      %p179 = por %p177, %p178
      %p180 = scmp.ne.s32.totalorder %s168, %s169
      %p181 = scmp.eq.s32.totalorder %s35, 3
      %p182 = por %p180, %p181
      %p184 = scmp.ne.s32.totalorder %s169, %s183
      %p185 = scmp.eq.s32.totalorder %s35, 0
      %p186 = por %p184, %p185
      %s187 = ssub.s32 %s37, %s44
      %p188 = scmp.eq.s32.totalorder %s187, 0
      %s190 = sadd.s32 %s189, 1
      %s191 = scalar_select %p188, %s189, %s190
      %p194 = pneg %p188
      %p195 = scmp.eq.s32.totalorder %s29, 3
      %p196 = por %p194, %p195
      %p197 = scmp.ne.s32.totalorder %s189, %s192
      %p198 = scmp.eq.s32.totalorder %s29, 0
      %p199 = por %p197, %p198
      %p200 = scmp.ne.s32.totalorder %s189, %s192
      %p201 = scmp.eq.s32.totalorder %s34, 3
      %p202 = por %p200, %p201
      %p203 = scmp.ne.s32.totalorder %s192, %s193
      %p204 = scmp.eq.s32.totalorder %s34, 0
      %p205 = por %p203, %p204
      %p206 = scmp.ne.s32.totalorder %s192, %s193
      %p207 = scmp.eq.s32.totalorder %s35, 3
      %p208 = por %p206, %p207
      %p210 = scmp.ne.s32.totalorder %s193, %s209
      %p211 = scmp.eq.s32.totalorder %s35, 0
      %p212 = por %p210, %p211
      %s213 = ssub.s32 %s37, %s44
      %p214 = scmp.eq.s32.totalorder %s213, 0
      %s216 = sadd.s32 %s215, 1
      %s217 = scalar_select %p214, %s215, %s216
      %p220 = pneg %p214
      %p221 = scmp.eq.s32.totalorder %s29, 3
      %p222 = por %p220, %p221
      %p223 = scmp.ne.s32.totalorder %s215, %s218
      %p224 = scmp.eq.s32.totalorder %s29, 0
      %p225 = por %p223, %p224
      %p226 = scmp.ne.s32.totalorder %s215, %s218
      %p227 = scmp.eq.s32.totalorder %s34, 3
      %p228 = por %p226, %p227
      %p229 = scmp.ne.s32.totalorder %s218, %s219
      %p230 = scmp.eq.s32.totalorder %s34, 0
      %p231 = por %p229, %p230
      %p232 = scmp.ne.s32.totalorder %s218, %s219
      %p233 = scmp.eq.s32.totalorder %s35, 3
      %p234 = por %p232, %p233
      %p236 = scmp.ne.s32.totalorder %s219, %s235
      %p237 = scmp.eq.s32.totalorder %s35, 0
      %p238 = por %p236, %p237
      %s239 = ssub.s32 %s37, %s44
      %p240 = scmp.eq.s32.totalorder %s239, 0
      %s242 = sadd.s32 %s241, 1
      %s243 = scalar_select %p240, %s241, %s242
      %p246 = pneg %p240
      %p247 = scmp.eq.s32.totalorder %s29, 3
      %p248 = por %p246, %p247
      %p249 = scmp.ne.s32.totalorder %s241, %s244
      %p250 = scmp.eq.s32.totalorder %s29, 0
      %p251 = por %p249, %p250
      %p252 = scmp.ne.s32.totalorder %s241, %s244
      %p253 = scmp.eq.s32.totalorder %s34, 3
      %p254 = por %p252, %p253
      %p255 = scmp.ne.s32.totalorder %s244, %s245
      %p256 = scmp.eq.s32.totalorder %s34, 0
      %p257 = por %p255, %p256
      %p258 = scmp.ne.s32.totalorder %s244, %s245
      %p259 = scmp.eq.s32.totalorder %s35, 3
      %p260 = por %p258, %p259
      %p262 = scmp.ne.s32.totalorder %s245, %s261
      %p263 = scmp.eq.s32.totalorder %s35, 0
      %p264 = por %p262, %p263
      %s266 = sadd.s32 %s265, 1
      %p269 = scmp.eq.s32.totalorder %s29, 3
      %p270 = scmp.ne.s32.totalorder %s265, %s267
      %p271 = scmp.eq.s32.totalorder %s29, 0
      %p272 = por %p270, %p271
      %p273 = scmp.ne.s32.totalorder %s265, %s267
      %p274 = scmp.eq.s32.totalorder %s34, 3
      %p275 = por %p273, %p274
      %p276 = scmp.ne.s32.totalorder %s267, %s268
      %p277 = scmp.eq.s32.totalorder %s34, 0
      %p278 = por %p276, %p277
      %p279 = scmp.ne.s32.totalorder %s267, %s268
      %p280 = scmp.eq.s32.totalorder %s35, 3
      %p281 = por %p279, %p280
      %p283 = scmp.ne.s32.totalorder %s268, %s282
      %p284 = scmp.eq.s32.totalorder %s35, 0
      %p285 = por %p283, %p284
      %s287 = sadd.s32 %s286, 1
      %p290 = scmp.eq.s32.totalorder %s29, 3
      %p291 = scmp.ne.s32.totalorder %s286, %s288
      %p292 = scmp.eq.s32.totalorder %s29, 0
      %p293 = por %p291, %p292
      %p294 = scmp.ne.s32.totalorder %s286, %s288
      %p295 = scmp.eq.s32.totalorder %s34, 3
      %p296 = por %p294, %p295
      %p297 = scmp.ne.s32.totalorder %s288, %s289
      %p298 = scmp.eq.s32.totalorder %s34, 0
      %p299 = por %p297, %p298
      %p300 = scmp.ne.s32.totalorder %s288, %s289
      %p301 = scmp.eq.s32.totalorder %s35, 3
      %p302 = por %p300, %p301
      %p304 = scmp.ne.s32.totalorder %s289, %s303
      %p305 = scmp.eq.s32.totalorder %s35, 0
      %p306 = por %p304, %p305
      %s308 = sadd.s32 %s307, 1
      %p311 = scmp.eq.s32.totalorder %s29, 3
      %p312 = scmp.ne.s32.totalorder %s307, %s309
      %p313 = scmp.eq.s32.totalorder %s29, 0
      %p314 = por %p312, %p313
      %p315 = scmp.ne.s32.totalorder %s307, %s309
      %p316 = scmp.eq.s32.totalorder %s34, 3
      %p317 = por %p315, %p316
      %p318 = scmp.ne.s32.totalorder %s309, %s310
      %p319 = scmp.eq.s32.totalorder %s34, 0
      %p320 = por %p318, %p319
      %p321 = scmp.ne.s32.totalorder %s309, %s310
      %p322 = scmp.eq.s32.totalorder %s35, 3
      %p323 = por %p321, %p322
      %p325 = scmp.ne.s32.totalorder %s310, %s324
      %p326 = scmp.eq.s32.totalorder %s35, 0
      %p327 = por %p325, %p326
      %s328 = ssub.s32 %s36, %s48
      %s329 = ssub.s32 %s37, %s44
      %s330 = sor.u32 %s328, %s329
      %p331 = scmp.eq.s32.totalorder %s330, 0
      %s333 = sadd.s32 %s332, 1
      %s334 = scalar_select %p331, %s332, %s333
      %p337 = pneg %p331
      %p338 = scmp.eq.s32.totalorder %s29, 3
      %p339 = por %p337, %p338
      %p340 = scmp.ne.s32.totalorder %s332, %s335
      %p341 = scmp.eq.s32.totalorder %s29, 0
      %p342 = por %p340, %p341
      %p343 = scmp.ne.s32.totalorder %s332, %s335
      %p344 = scmp.eq.s32.totalorder %s34, 3
      %p345 = por %p343, %p344
      %p346 = scmp.ne.s32.totalorder %s335, %s336
      %p347 = scmp.eq.s32.totalorder %s34, 0
      %p348 = por %p346, %p347
      %p349 = scmp.ne.s32.totalorder %s335, %s336
      %p350 = scmp.eq.s32.totalorder %s35, 3
      %p351 = por %p349, %p350
      %p353 = scmp.ne.s32.totalorder %s336, %s352
      %p354 = scmp.eq.s32.totalorder %s35, 0
      %p355 = por %p353, %p354
      %p356 = scmp.le.s32.totalorder 1, %s29
      %p357 = scmp.lt.s32.totalorder %s29, 5
      %p358 = pnand %p356, %p357
      %p359 = pneg %p358
      // Predicated region
      $region9: #{tpu_custom_call.1} parent=5 // pred_check
        _
      $region10: #{tpu_custom_call.1} parent=5 // pred_check_branch
        %361 = sbr.rel (%p358) target = $region12
      $region11: #{tpu_custom_call.1} parent=5 // pred_region
        %s362 = ssub.s32 %s29, 1
        // Predicated region
        $region13: #{tpu_custom_call.1} parent=11 // pred_check
          %p363 = pneg %p116
        $region14: #{tpu_custom_call.1} parent=11 // pred_check_branch
          %365 = sbr.rel (%p363) target = $region16
        $region15: #{tpu_custom_call.1} parent=11 // pred_region
          %s367 = ssub.s32 1024, 1024
          %368 = vsyncadd [#allocation8], %s367
          %s369 = sshll.u32 [#allocation9], 4
          %s370 = int_to_ptr.vmem [resolvable:$true] %s369
          %375 = dma.hbm_to_vmem [thread:$0]  %s2, 1024, %s370, [#allocation8], 64, 64, 4
        $region16: #{tpu_custom_call.1} parent=11 // pred_fallthru
          _
        // Predicated region
        $region17: #{tpu_custom_call.1} parent=11 // pred_check
          %p376 = pneg %p137
        $region18: #{tpu_custom_call.1} parent=11 // pred_check_branch
          %378 = sbr.rel (%p376) target = $region20
        $region19: #{tpu_custom_call.1} parent=11 // pred_region
          %s380 = ssub.s32 1024, 1024
          %381 = vsyncadd [#allocation11], %s380
          %s382 = sshll.u32 [#allocation10], 4
          %s383 = int_to_ptr.vmem [resolvable:$true] %s382
          %388 = dma.hbm_to_vmem [thread:$0]  %s3, 1024, %s383, [#allocation11], 64, 64, 4
        $region20: #{tpu_custom_call.1} parent=11 // pred_fallthru
          _
        // Predicated region
        $region21: #{tpu_custom_call.1} parent=11 // pred_check
          %p389 = pneg %p158
        $region22: #{tpu_custom_call.1} parent=11 // pred_check_branch
          %391 = sbr.rel (%p389) target = $region24
        $region23: #{tpu_custom_call.1} parent=11 // pred_region
          %s393 = ssub.s32 1024, 1024
          %394 = vsyncadd [#allocation11], %s393
          %s395 = sshll.u32 [#allocation12], 4
          %s396 = int_to_ptr.vmem [resolvable:$true] %s395
          %401 = dma.hbm_to_vmem [thread:$0]  %s4, 1024, %s396, [#allocation11], 64, 64, 4
        $region24: #{tpu_custom_call.1} parent=11 // pred_fallthru
          _
        // Predicated region
        $region25: #{tpu_custom_call.1} parent=11 // pred_check
          %p402 = pneg %p179
        $region26: #{tpu_custom_call.1} parent=11 // pred_check_branch
          %404 = sbr.rel (%p402) target = $region28
        $region27: #{tpu_custom_call.1} parent=11 // pred_region
          %s406 = ssub.s32 1024, 1024
          %407 = vsyncadd [#allocation14], %s406
          %s408 = sshll.u32 [#allocation13], 4
          %s409 = int_to_ptr.vmem [resolvable:$true] %s408
          %414 = dma.hbm_to_vmem [thread:$0]  %s5, 1024, %s409, [#allocation14], 64, 64, 4
        $region28: #{tpu_custom_call.1} parent=11 // pred_fallthru
          _
        // Predicated region
        $region29: #{tpu_custom_call.1} parent=11 // pred_check
          %p415 = pneg %p278
        $region30: #{tpu_custom_call.1} parent=11 // pred_check_branch
          %417 = sbr.rel (%p415) target = $region32
        $region31: #{tpu_custom_call.1} parent=11 // pred_region
          %s419 = ssub.s32 2048, 2048
          %420 = vsyncadd [#allocation8], %s419
          %s421 = sshll.u32 [#allocation18], 4
          %s422 = int_to_ptr.vmem [resolvable:$true] %s421
          %427 = dma.hbm_to_vmem [thread:$0]  %s9, 2048, %s422, [#allocation8], 64, 64, 4
        $region32: #{tpu_custom_call.1} parent=11 // pred_fallthru
          _
        // Predicated region
        $region33: #{tpu_custom_call.1} parent=11 // pred_check
          %p428 = pneg %p299
        $region34: #{tpu_custom_call.1} parent=11 // pred_check_branch
          %430 = sbr.rel (%p428) target = $region36
        $region35: #{tpu_custom_call.1} parent=11 // pred_region
          %s432 = ssub.s32 2048, 2048
          %433 = vsyncadd [#allocation11], %s432
          %s434 = sshll.u32 [#allocation19], 4
          %s435 = int_to_ptr.vmem [resolvable:$true] %s434
          %440 = dma.hbm_to_vmem [thread:$0]  %s10, 2048, %s435, [#allocation11], 64, 64, 4
        $region36: #{tpu_custom_call.1} parent=11 // pred_fallthru
          _
        // Predicated region
        $region37: #{tpu_custom_call.1} parent=11 // pred_check
          %p441 = pneg %p320
        $region38: #{tpu_custom_call.1} parent=11 // pred_check_branch
          %443 = sbr.rel (%p441) target = $region40
        $region39: #{tpu_custom_call.1} parent=11 // pred_region
          %s445 = ssub.s32 2048, 2048
          %446 = vsyncadd [#allocation14], %s445
          %s447 = sshll.u32 [#allocation20], 4
          %s448 = int_to_ptr.vmem [resolvable:$true] %s447
          %453 = dma.hbm_to_vmem [thread:$0]  %s11, 2048, %s448, [#allocation14], 64, 64, 4
        $region40: #{tpu_custom_call.1} parent=11 // pred_fallthru
          _
      $region12: #{tpu_custom_call.1} parent=5 // pred_fallthru
        _
      %p454 = scmp.lt.s32.totalorder %s29, 4
      // Predicated region
      $region41: #{tpu_custom_call.1} parent=5 // pred_check
        %p455 = pneg %p454
      $region42: #{tpu_custom_call.1} parent=5 // pred_check_branch
        %457 = sbr.rel (%p455) target = $region44
      $region43: #{tpu_custom_call.1} parent=5 // pred_region
        // Predicated region
        $region45: #{tpu_custom_call.1} parent=43 // pred_check
          %p458 = pneg %p63
        $region46: #{tpu_custom_call.1} parent=43 // pred_check_branch
          %460 = sbr.rel (%p458) target = $region48
        $region47: #{tpu_custom_call.1} parent=43 // pred_region
          %s461 = sand.u32 %s29, 1
          %s462 = scalar_lea.sflag [#allocation5], %s461
          %s463 = sand.u32 %s53, 1
          %s464 = smul.addr %s463, 64
          %s465 = scalar_lea.vmem [#allocation4], %s464
          %s466 = smul.u32 16, %s37
          %s468 = ssub.s32 1024, 1024
          %469 = vsyncadd %s462, %s468
          %s470 = smul.addr %s36, 32
          %s471 = sadd.s32 %s466, %s470
          %s472 = smul.addr %s471, 64
          %s473 = scalar_lea.hbm %s0, %s472
          %s474 = sshll.u32 %s465, 4
          %s475 = int_to_ptr.vmem [resolvable:$true] %s474
          %480 = dma.hbm_to_vmem [thread:$0]  %s473, 1024, %s475, %s462, 64, 64, 4
        $region48: #{tpu_custom_call.1} parent=43 // pred_fallthru
          _
        // Predicated region
        $region49: #{tpu_custom_call.1} parent=43 // pred_check
          %p481 = pneg %p89
        $region50: #{tpu_custom_call.1} parent=43 // pred_check_branch
          %483 = sbr.rel (%p481) target = $region52
        $region51: #{tpu_custom_call.1} parent=43 // pred_region
          %s484 = sand.u32 %s29, 1
          %s485 = scalar_lea.sflag [#allocation8], %s484
          %s486 = sand.u32 %s79, 1
          %s487 = smul.addr %s486, 128
          %s488 = scalar_lea.vmem [#allocation7], %s487
          %s490 = ssub.s32 2048, 2048
          %491 = vsyncadd %s485, %s490
          %s492 = smul.addr %s36, 32
          %s493 = smul.addr %s492, 64
          %s494 = scalar_lea.hbm %s1, %s493
          %s495 = sshll.u32 %s488, 4
          %s496 = int_to_ptr.vmem [resolvable:$true] %s495
          %501 = dma.hbm_to_vmem [thread:$0]  %s494, 2048, %s496, %s485, 64, 64, 4
        $region52: #{tpu_custom_call.1} parent=43 // pred_fallthru
          _
        // Predicated region
        $region53: #{tpu_custom_call.1} parent=43 // pred_check
          %p502 = pneg %p199
        $region54: #{tpu_custom_call.1} parent=43 // pred_check_branch
          %504 = sbr.rel (%p502) target = $region56
        $region55: #{tpu_custom_call.1} parent=43 // pred_region
          %s505 = sand.u32 %s29, 1
          %s506 = scalar_lea.sflag [#allocation5], %s505
          %s507 = sand.u32 %s189, 1
          %s508 = smul.addr %s507, 64
          %s509 = scalar_lea.vmem [#allocation15], %s508
          %s510 = smul.u32 16, %s37
          %s512 = ssub.s32 1024, 1024
          %513 = vsyncadd %s506, %s512
          %s514 = smul.addr %s510, 64
          %s515 = scalar_lea.hbm %s6, %s514
          %s516 = sshll.u32 %s509, 4
          %s517 = int_to_ptr.vmem [resolvable:$true] %s516
          %522 = dma.hbm_to_vmem [thread:$0]  %s515, 1024, %s517, %s506, 64, 64, 4
        $region56: #{tpu_custom_call.1} parent=43 // pred_fallthru
          _
        // Predicated region
        $region57: #{tpu_custom_call.1} parent=43 // pred_check
          %p523 = pneg %p225
        $region58: #{tpu_custom_call.1} parent=43 // pred_check_branch
          %525 = sbr.rel (%p523) target = $region60
        $region59: #{tpu_custom_call.1} parent=43 // pred_region
          %s526 = sand.u32 %s29, 1
          %s527 = scalar_lea.sflag [#allocation8], %s526
          %s528 = sand.u32 %s215, 1
          %s529 = smul.addr %s528, 64
          %s530 = scalar_lea.vmem [#allocation16], %s529
          %s531 = smul.u32 16, %s37
          %s533 = ssub.s32 1024, 1024
          %534 = vsyncadd %s527, %s533
          %s535 = smul.addr %s531, 64
          %s536 = scalar_lea.hbm %s7, %s535
          %s537 = sshll.u32 %s530, 4
          %s538 = int_to_ptr.vmem [resolvable:$true] %s537
          %543 = dma.hbm_to_vmem [thread:$0]  %s536, 1024, %s538, %s527, 64, 64, 4
        $region60: #{tpu_custom_call.1} parent=43 // pred_fallthru
          _
        // Predicated region
        $region61: #{tpu_custom_call.1} parent=43 // pred_check
          %p544 = pneg %p251
        $region62: #{tpu_custom_call.1} parent=43 // pred_check_branch
          %546 = sbr.rel (%p544) target = $region64
        $region63: #{tpu_custom_call.1} parent=43 // pred_region
          %s547 = sand.u32 %s29, 1
          %s548 = scalar_lea.sflag [#allocation5], %s547
          %s549 = sand.u32 %s241, 1
          %s550 = smul.addr %s549, 64
          %s551 = scalar_lea.vmem [#allocation17], %s550
          %s552 = smul.u32 16, %s37
          %s554 = ssub.s32 1024, 1024
          %555 = vsyncadd %s548, %s554
          %s556 = smul.addr %s552, 64
          %s557 = scalar_lea.hbm %s8, %s556
          %s558 = sshll.u32 %s551, 4
          %s559 = int_to_ptr.vmem [resolvable:$true] %s558
          %564 = dma.hbm_to_vmem [thread:$0]  %s557, 1024, %s559, %s548, 64, 64, 4
        $region64: #{tpu_custom_call.1} parent=43 // pred_fallthru
          _
      $region44: #{tpu_custom_call.1} parent=5 // pred_fallthru
        _
      %p565 = scmp.le.s32.totalorder 1, %s29
      %p566 = scmp.lt.s32.totalorder %s29, 5
      %p567 = pnand %p565, %p566
      %p568 = pneg %p567
      // Predicated region
      $region65: #{tpu_custom_call.1} parent=5 // pred_check
        _
      $region66: #{tpu_custom_call.1} parent=5 // pred_check_branch
        %570 = sbr.rel (%p567) target = $region68
      $region67: #{tpu_custom_call.1} parent=5 // pred_region
        %s571 = ssub.s32 %s29, 1
        %s572 = sand.u32 %s34, 1
        %s573 = scalar_lea.sflag [#allocation5], %s572
        %s574 = sand.u32 %s56, 1
        %s575 = smul.addr %s574, 64
        %s576 = scalar_lea.vmem [#allocation4], %s575
        // Predicated region
        $region69: #{tpu_custom_call.1} parent=67 // pred_check
          %p577 = pneg %p69
        $region70: #{tpu_custom_call.1} parent=67 // pred_check_branch
          %579 = sbr.rel (%p577) target = $region72
        $region71: #{tpu_custom_call.1} parent=67 // pred_region
          %580 = dma.done %s573, 1024
        $region72: #{tpu_custom_call.1} parent=67 // pred_fallthru
          _
        %s581 = sand.u32 %s34, 1
        %s582 = scalar_lea.sflag [#allocation8], %s581
        %s583 = sand.u32 %s82, 1
        %s584 = smul.addr %s583, 128
        %s585 = scalar_lea.vmem [#allocation7], %s584
        // Predicated region
        $region73: #{tpu_custom_call.1} parent=67 // pred_check
          %p586 = pneg %p95
        $region74: #{tpu_custom_call.1} parent=67 // pred_check_branch
          %588 = sbr.rel (%p586) target = $region76
        $region75: #{tpu_custom_call.1} parent=67 // pred_region
          %589 = dma.done %s582, 2048
        $region76: #{tpu_custom_call.1} parent=67 // pred_fallthru
          _
        // Predicated region
        $region77: #{tpu_custom_call.1} parent=67 // pred_check
          %p590 = pneg %p116
        $region78: #{tpu_custom_call.1} parent=67 // pred_check_branch
          %592 = sbr.rel (%p590) target = $region80
        $region79: #{tpu_custom_call.1} parent=67 // pred_region
          %593 = dma.done [#allocation8], 1024
        $region80: #{tpu_custom_call.1} parent=67 // pred_fallthru
          _
        // Predicated region
        $region81: #{tpu_custom_call.1} parent=67 // pred_check
          %p594 = pneg %p137
        $region82: #{tpu_custom_call.1} parent=67 // pred_check_branch
          %596 = sbr.rel (%p594) target = $region84
        $region83: #{tpu_custom_call.1} parent=67 // pred_region
          %597 = dma.done [#allocation11], 1024
        $region84: #{tpu_custom_call.1} parent=67 // pred_fallthru
          _
        // Predicated region
        $region85: #{tpu_custom_call.1} parent=67 // pred_check
          %p598 = pneg %p158
        $region86: #{tpu_custom_call.1} parent=67 // pred_check_branch
          %600 = sbr.rel (%p598) target = $region88
        $region87: #{tpu_custom_call.1} parent=67 // pred_region
          %601 = dma.done [#allocation11], 1024
        $region88: #{tpu_custom_call.1} parent=67 // pred_fallthru
          _
        // Predicated region
        $region89: #{tpu_custom_call.1} parent=67 // pred_check
          %p602 = pneg %p179
        $region90: #{tpu_custom_call.1} parent=67 // pred_check_branch
          %604 = sbr.rel (%p602) target = $region92
        $region91: #{tpu_custom_call.1} parent=67 // pred_region
          %605 = dma.done [#allocation14], 1024
        $region92: #{tpu_custom_call.1} parent=67 // pred_fallthru
          _
        %s606 = sand.u32 %s34, 1
        %s607 = scalar_lea.sflag [#allocation5], %s606
        %s608 = sand.u32 %s192, 1
        %s609 = smul.addr %s608, 64
        %s610 = scalar_lea.vmem [#allocation15], %s609
        // Predicated region
        $region93: #{tpu_custom_call.1} parent=67 // pred_check
          %p611 = pneg %p205
        $region94: #{tpu_custom_call.1} parent=67 // pred_check_branch
          %613 = sbr.rel (%p611) target = $region96
        $region95: #{tpu_custom_call.1} parent=67 // pred_region
          %614 = dma.done %s607, 1024
        $region96: #{tpu_custom_call.1} parent=67 // pred_fallthru
          _
        %s615 = sand.u32 %s34, 1
        %s616 = scalar_lea.sflag [#allocation8], %s615
        %s617 = sand.u32 %s218, 1
        %s618 = smul.addr %s617, 64
        %s619 = scalar_lea.vmem [#allocation16], %s618
        // Predicated region
        $region97: #{tpu_custom_call.1} parent=67 // pred_check
          %p620 = pneg %p231
        $region98: #{tpu_custom_call.1} parent=67 // pred_check_branch
          %622 = sbr.rel (%p620) target = $region100
        $region99: #{tpu_custom_call.1} parent=67 // pred_region
          %623 = dma.done %s616, 1024
        $region100: #{tpu_custom_call.1} parent=67 // pred_fallthru
          _
        %s624 = sand.u32 %s34, 1
        %s625 = scalar_lea.sflag [#allocation5], %s624
        %s626 = sand.u32 %s244, 1
        %s627 = smul.addr %s626, 64
        %s628 = scalar_lea.vmem [#allocation17], %s627
        // Predicated region
        $region101: #{tpu_custom_call.1} parent=67 // pred_check
          %p629 = pneg %p257
        $region102: #{tpu_custom_call.1} parent=67 // pred_check_branch
          %631 = sbr.rel (%p629) target = $region104
        $region103: #{tpu_custom_call.1} parent=67 // pred_region
          %632 = dma.done %s625, 1024
        $region104: #{tpu_custom_call.1} parent=67 // pred_fallthru
          _
        // Predicated region
        $region105: #{tpu_custom_call.1} parent=67 // pred_check
          %p633 = pneg %p278
        $region106: #{tpu_custom_call.1} parent=67 // pred_check_branch
          %635 = sbr.rel (%p633) target = $region108
        $region107: #{tpu_custom_call.1} parent=67 // pred_region
          %636 = dma.done [#allocation8], 2048
        $region108: #{tpu_custom_call.1} parent=67 // pred_fallthru
          _
        // Predicated region
        $region109: #{tpu_custom_call.1} parent=67 // pred_check
          %p637 = pneg %p299
        $region110: #{tpu_custom_call.1} parent=67 // pred_check_branch
          %639 = sbr.rel (%p637) target = $region112
        $region111: #{tpu_custom_call.1} parent=67 // pred_region
          %640 = dma.done [#allocation11], 2048
        $region112: #{tpu_custom_call.1} parent=67 // pred_fallthru
          _
        // Predicated region
        $region113: #{tpu_custom_call.1} parent=67 // pred_check
          %p641 = pneg %p320
        $region114: #{tpu_custom_call.1} parent=67 // pred_check_branch
          %643 = sbr.rel (%p641) target = $region116
        $region115: #{tpu_custom_call.1} parent=67 // pred_region
          %644 = dma.done [#allocation14], 2048
        $region116: #{tpu_custom_call.1} parent=67 // pred_fallthru
          _
        %s645 = sand.u32 %s34, 1
        %s646 = scalar_lea.sflag [#allocation5], %s645
        %s647 = sand.u32 %s56, 1
        %s648 = smul.addr %s647, 64
        %s649 = scalar_lea.vmem [#allocation4], %s648
        %p650 = pneg %p69
        %p651 = pneg %p66
        %s652 = sand.u32 %s34, 1
        %s653 = scalar_lea.sflag [#allocation8], %s652
        %s654 = sand.u32 %s82, 1
        %s655 = smul.addr %s654, 128
        %s656 = scalar_lea.vmem [#allocation7], %s655
        %p657 = pneg %p95
        %p658 = pneg %p92
        %p659 = pneg %p116
        %p660 = pneg %p113
        %p661 = pneg %p137
        %p662 = pneg %p134
        %p663 = pneg %p158
        %p664 = pneg %p155
        %p665 = pneg %p179
        %p666 = pneg %p176
        %s667 = sand.u32 %s34, 1
        %s668 = scalar_lea.sflag [#allocation5], %s667
        %s669 = sand.u32 %s192, 1
        %s670 = smul.addr %s669, 64
        %s671 = scalar_lea.vmem [#allocation15], %s670
        %p672 = pneg %p205
        %p673 = pneg %p202
        %s674 = sand.u32 %s34, 1
        %s675 = scalar_lea.sflag [#allocation8], %s674
        %s676 = sand.u32 %s218, 1
        %s677 = smul.addr %s676, 64
        %s678 = scalar_lea.vmem [#allocation16], %s677
        %p679 = pneg %p231
        %p680 = pneg %p228
        %s681 = sand.u32 %s34, 1
        %s682 = scalar_lea.sflag [#allocation5], %s681
        %s683 = sand.u32 %s244, 1
        %s684 = smul.addr %s683, 64
        %s685 = scalar_lea.vmem [#allocation17], %s684
        %p686 = pneg %p257
        %p687 = pneg %p254
        %p688 = pneg %p278
        %p689 = pneg %p275
        %p690 = pneg %p299
        %p691 = pneg %p296
        %p692 = pneg %p320
        %p693 = pneg %p317
        %p694 = pneg %p348
        %p695 = pneg %p345
        %s696 = sand.u32 %s335, 1
        %s697 = scalar_lea.sflag [#allocation6], %s696
        %s698 = sand.u32 %s335, 1
        %s699 = smul.addr %s698, 128
        %s700 = scalar_lea.vmem [#allocation21], %s699
        %s701 = smul.u32 16, %s39
        %s702 = smul.u32 16, %s39
        %s703 = smul.u32 16, %s39
        %s704 = smul.u32 16, %s39
        %s705 = smul.u32 16, %s39
        %p707 = scmp.eq.s32.totalorder %s39, 0
        // Predicated region
        $region117: #{tpu_custom_call.1} parent=67 // pred_check
          %p708 = pneg %p707
        $region118: #{tpu_custom_call.1} parent=67 // pred_check_branch
          %710 = sbr.rel (%p708) target = $region120
        $region119: #{tpu_custom_call.1} parent=67 // pred_region
          %v711 = vld [vmem:[%s585] sm:$0xf]
          %v712 = vld [vmem:[%s585 + $0x4] sm:$0xf]
          %v713 = vld [vmem:[%s585 + $0x8] sm:$0xf]
          %v714 = vld [vmem:[%s585 + $0xc] sm:$0xf]
          %v715 = vld [vmem:[%s585 + $0x10] sm:$0xf]
          %v716 = vld [vmem:[%s585 + $0x14] sm:$0xf]
          %v717 = vld [vmem:[%s585 + $0x18] sm:$0xf]
          %v718 = vld [vmem:[%s585 + $0x1c] sm:$0xf]
          %v719 = vld [vmem:[%s585 + $0x20] sm:$0xf]
          %v720 = vld [vmem:[%s585 + $0x24] sm:$0xf]
          %v721 = vld [vmem:[%s585 + $0x28] sm:$0xf]
          %v722 = vld [vmem:[%s585 + $0x2c] sm:$0xf]
          %v723 = vld [vmem:[%s585 + $0x30] sm:$0xf]
          %v724 = vld [vmem:[%s585 + $0x34] sm:$0xf]
          %v725 = vld [vmem:[%s585 + $0x38] sm:$0xf]
          %v726 = vld [vmem:[%s585 + $0x3c] sm:$0xf]
          %v727 = vld [vmem:[%s585 + $0x40] sm:$0xf]
          %v728 = vld [vmem:[%s585 + $0x44] sm:$0xf]
          %v729 = vld [vmem:[%s585 + $0x48] sm:$0xf]
          %v730 = vld [vmem:[%s585 + $0x4c] sm:$0xf]
          %v731 = vld [vmem:[%s585 + $0x50] sm:$0xf]
          %v732 = vld [vmem:[%s585 + $0x54] sm:$0xf]
          %v733 = vld [vmem:[%s585 + $0x58] sm:$0xf]
          %v734 = vld [vmem:[%s585 + $0x5c] sm:$0xf]
          %v735 = vld [vmem:[%s585 + $0x60] sm:$0xf]
          %v736 = vld [vmem:[%s585 + $0x64] sm:$0xf]
          %v737 = vld [vmem:[%s585 + $0x68] sm:$0xf]
          %v738 = vld [vmem:[%s585 + $0x6c] sm:$0xf]
          %v739 = vld [vmem:[%s585 + $0x70] sm:$0xf]
          %v740 = vld [vmem:[%s585 + $0x74] sm:$0xf]
          %v741 = vld [vmem:[%s585 + $0x78] sm:$0xf]
          %v742 = vld [vmem:[%s585 + $0x7c] sm:$0xf]
          %v743 = vld [vmem:[#allocation10] sm:$0xf]
          %v744 = vld [vmem:[#allocation10 + $0x4] sm:$0xf]
          %v745 = vld [vmem:[#allocation10 + $0x8] sm:$0xf]
          %v746 = vld [vmem:[#allocation10 + $0xc] sm:$0xf]
          %v747 = vld [vmem:[#allocation10 + $0x10] sm:$0xf]
          %v748 = vld [vmem:[#allocation10 + $0x14] sm:$0xf]
          %v749 = vld [vmem:[#allocation10 + $0x18] sm:$0xf]
          %v750 = vld [vmem:[#allocation10 + $0x1c] sm:$0xf]
          %v751 = vld [vmem:[#allocation10 + $0x20] sm:$0xf]
          %v752 = vld [vmem:[#allocation10 + $0x24] sm:$0xf]
          %v753 = vld [vmem:[#allocation10 + $0x28] sm:$0xf]
          %v754 = vld [vmem:[#allocation10 + $0x2c] sm:$0xf]
          %v755 = vld [vmem:[#allocation10 + $0x30] sm:$0xf]
          %v756 = vld [vmem:[#allocation10 + $0x34] sm:$0xf]
          %v757 = vld [vmem:[#allocation10 + $0x38] sm:$0xf]
          %v758 = vld [vmem:[#allocation10 + $0x3c] sm:$0xf]
          %v791 = vunpack.c.l.b16 %v711
          %v792 = vunpack.c.l.b16 %v712
          %v793 = vunpack.c.l.b16 %v713
          %v794 = vunpack.c.l.b16 %v714
          %v795 = vunpack.c.l.b16 %v715
          %v796 = vunpack.c.l.b16 %v716
          %v797 = vunpack.c.l.b16 %v717
          %v798 = vunpack.c.l.b16 %v718
          %v799 = vunpack.c.l.b16 %v719
          %v800 = vunpack.c.l.b16 %v720
          %v801 = vunpack.c.l.b16 %v721
          %v802 = vunpack.c.l.b16 %v722
          %v803 = vunpack.c.l.b16 %v723
          %v804 = vunpack.c.l.b16 %v724
          %v805 = vunpack.c.l.b16 %v725
          %v806 = vunpack.c.l.b16 %v726
          %v807 = vunpack.c.l.b16 %v727
          %v808 = vunpack.c.l.b16 %v728
          %v809 = vunpack.c.l.b16 %v729
          %v810 = vunpack.c.l.b16 %v730
          %v811 = vunpack.c.l.b16 %v731
          %v812 = vunpack.c.l.b16 %v732
          %v813 = vunpack.c.l.b16 %v733
          %v814 = vunpack.c.l.b16 %v734
          %v815 = vunpack.c.l.b16 %v735
          %v816 = vunpack.c.l.b16 %v736
          %v817 = vunpack.c.l.b16 %v737
          %v818 = vunpack.c.l.b16 %v738
          %v819 = vunpack.c.l.b16 %v739
          %v820 = vunpack.c.l.b16 %v740
          %v821 = vunpack.c.l.b16 %v741
          %v822 = vunpack.c.l.b16 %v742
          %v823 = vpack.c.b16 %v792, %v791
          %v824 = vpack.c.b16 %v794, %v793
          %v825 = vpack.c.b16 %v796, %v795
          %v826 = vpack.c.b16 %v798, %v797
          %v827 = vpack.c.b16 %v800, %v799
          %v828 = vpack.c.b16 %v802, %v801
          %v829 = vpack.c.b16 %v804, %v803
          %v830 = vpack.c.b16 %v806, %v805
          %v831 = vpack.c.b16 %v808, %v807
          %v832 = vpack.c.b16 %v810, %v809
          %v833 = vpack.c.b16 %v812, %v811
          %v834 = vpack.c.b16 %v814, %v813
          %v835 = vpack.c.b16 %v816, %v815
          %v836 = vpack.c.b16 %v818, %v817
          %v837 = vpack.c.b16 %v820, %v819
          %v838 = vpack.c.b16 %v822, %v821
          %v871 = vunpack.c.l.b16 %v743
          %v872 = vunpack.c.l.b16 %v744
          %v873 = vunpack.c.l.b16 %v745
          %v874 = vunpack.c.l.b16 %v746
          %v875 = vunpack.c.l.b16 %v747
          %v876 = vunpack.c.l.b16 %v748
          %v877 = vunpack.c.l.b16 %v749
          %v878 = vunpack.c.l.b16 %v750
          %v879 = vunpack.c.l.b16 %v751
          %v880 = vunpack.c.l.b16 %v752
          %v881 = vunpack.c.l.b16 %v753
          %v882 = vunpack.c.l.b16 %v754
          %v883 = vunpack.c.l.b16 %v755
          %v884 = vunpack.c.l.b16 %v756
          %v885 = vunpack.c.l.b16 %v757
          %v886 = vunpack.c.l.b16 %v758
          %v887 = vpack.c.b16 %v872, %v871
          %v888 = vpack.c.b16 %v874, %v873
          %v889 = vpack.c.b16 %v876, %v875
          %v890 = vpack.c.b16 %v878, %v877
          %v891 = vpack.c.b16 %v880, %v879
          %v892 = vpack.c.b16 %v882, %v881
          %v893 = vpack.c.b16 %v884, %v883
          %v894 = vpack.c.b16 %v886, %v885
          %903 = vmatprep.subr.bf16.mxu0 0
          %904 = vmatpush1.bf16.msra.mxu0 %v894
          %905 = vmatprep.subr.bf16.mxu0 0
          %906 = vmatpush1.bf16.msra.mxu0 %v893
          %907 = vmatprep.subr.bf16.mxu0 0
          %908 = vmatpush1.bf16.msra.mxu0 %v892
          %909 = vmatprep.subr.bf16.mxu0 0
          %910 = vmatpush1.bf16.msra.mxu0 %v891
          %911 = vmatprep.subr.bf16.mxu0 0
          %912 = vmatpush1.bf16.msra.mxu0 %v890
          %913 = vmatprep.subr.bf16.mxu0 0
          %914 = vmatpush1.bf16.msra.mxu0 %v889
          %915 = vmatprep.subr.bf16.mxu0 0
          %916 = vmatpush1.bf16.msra.mxu0 %v888
          %917 = vmatprep.subr.bf16.mxu0 0
          %918 = vmatpush1.bf16.msra.mxu0 %v887
          %919 = vmatprep.subr.bf16.mxu0 0
          %920 = vmatpush2.bf16.msra.mxu0 0
          %921 = vmatprep.subr.bf16.mxu0 0
          %922 = vmatpush2.bf16.msra.mxu0 0
          %923 = vmatprep.subr.bf16.mxu0 0
          %924 = vmatpush2.bf16.msra.mxu0 0
          %925 = vmatprep.subr.bf16.mxu0 0
          %926 = vmatpush2.bf16.msra.mxu0 0
          %927 = vmatprep.subr.bf16.mxu0 0
          %928 = vmatpush2.bf16.msra.mxu0 0
          %929 = vmatprep.subr.bf16.mxu0 0
          %930 = vmatpush2.bf16.msra.mxu0 0
          %931 = vmatprep.subr.bf16.mxu0 0
          %932 = vmatpush2.bf16.msra.mxu0 0
          %933 = vmatprep.subr.bf16.mxu0 0
          %934 = vmatpush2.bf16.msra.mxu0 0
          %935 = vmatprep.mubr.bf16.mxu0 0
          %936 = vmatmul.mubr.bf16.gmra.mxu0 %v823
          %v937 = vpop.f32.mrf.mxu0
          %v938 = vadd.f32 0.0, %v937
          %v939 = vpop.f32.mrf.mxu0
          %v940 = vpop.f32.mrf.mxu0
          %v941 = vadd.f32 0.0, %v940
          %v942 = vpop.f32.mrf.mxu0
          %943 = vmatprep.mubr.bf16.mxu0 0
          %944 = vmatmul.mubr.bf16.gmra.mxu0 %v824
          %v945 = vpop.f32.mrf.mxu0
          %v946 = vadd.f32 0.0, %v945
          %v947 = vpop.f32.mrf.mxu0
          %v948 = vpop.f32.mrf.mxu0
          %v949 = vadd.f32 0.0, %v948
          %v950 = vpop.f32.mrf.mxu0
          %951 = vmatprep.mubr.bf16.mxu0 0
          %952 = vmatmul.mubr.bf16.gmra.mxu0 %v825
          %v953 = vpop.f32.mrf.mxu0
          %v954 = vadd.f32 0.0, %v953
          %v955 = vpop.f32.mrf.mxu0
          %v956 = vpop.f32.mrf.mxu0
          %v957 = vadd.f32 0.0, %v956
          %v958 = vpop.f32.mrf.mxu0
          %959 = vmatprep.mubr.bf16.mxu0 0
          %960 = vmatmul.mubr.bf16.gmra.mxu0 %v826
          %v961 = vpop.f32.mrf.mxu0
          %v962 = vadd.f32 0.0, %v961
          %v963 = vpop.f32.mrf.mxu0
          %v964 = vpop.f32.mrf.mxu0
          %v965 = vadd.f32 0.0, %v964
          %v966 = vpop.f32.mrf.mxu0
          %967 = vmatprep.mubr.bf16.mxu0 0
          %968 = vmatmul.mubr.bf16.gmra.mxu0 %v827
          %v969 = vpop.f32.mrf.mxu0
          %v970 = vadd.f32 0.0, %v969
          %v971 = vpop.f32.mrf.mxu0
          %v972 = vpop.f32.mrf.mxu0
          %v973 = vadd.f32 0.0, %v972
          %v974 = vpop.f32.mrf.mxu0
          %975 = vmatprep.mubr.bf16.mxu0 0
          %976 = vmatmul.mubr.bf16.gmra.mxu0 %v828
          %v977 = vpop.f32.mrf.mxu0
          %v978 = vadd.f32 0.0, %v977
          %v979 = vpop.f32.mrf.mxu0
          %v980 = vpop.f32.mrf.mxu0
          %v981 = vadd.f32 0.0, %v980
          %v982 = vpop.f32.mrf.mxu0
          %983 = vmatprep.mubr.bf16.mxu0 0
          %984 = vmatmul.mubr.bf16.gmra.mxu0 %v829
          %v985 = vpop.f32.mrf.mxu0
          %v986 = vadd.f32 0.0, %v985
          %v987 = vpop.f32.mrf.mxu0
          %v988 = vpop.f32.mrf.mxu0
          %v989 = vadd.f32 0.0, %v988
          %v990 = vpop.f32.mrf.mxu0
          %991 = vmatprep.mubr.bf16.mxu0 0
          %992 = vmatmul.mubr.bf16.gmra.mxu0 %v830
          %v993 = vpop.f32.mrf.mxu0
          %v994 = vadd.f32 0.0, %v993
          %v995 = vpop.f32.mrf.mxu0
          %v996 = vpop.f32.mrf.mxu0
          %v997 = vadd.f32 0.0, %v996
          %v998 = vpop.f32.mrf.mxu0
          %999 = vmatprep.mubr.bf16.mxu0 0
          %1000 = vmatmul.mubr.bf16.gmra.mxu0 %v831
          %v1001 = vpop.f32.mrf.mxu0
          %v1002 = vadd.f32 0.0, %v1001
          %v1003 = vpop.f32.mrf.mxu0
          %v1004 = vpop.f32.mrf.mxu0
          %v1005 = vadd.f32 0.0, %v1004
          %v1006 = vpop.f32.mrf.mxu0
          %1007 = vmatprep.mubr.bf16.mxu0 0
          %1008 = vmatmul.mubr.bf16.gmra.mxu0 %v832
          %v1009 = vpop.f32.mrf.mxu0
          %v1010 = vadd.f32 0.0, %v1009
          %v1011 = vpop.f32.mrf.mxu0
          %v1012 = vpop.f32.mrf.mxu0
          %v1013 = vadd.f32 0.0, %v1012
          %v1014 = vpop.f32.mrf.mxu0
          %1015 = vmatprep.mubr.bf16.mxu0 0
          %1016 = vmatmul.mubr.bf16.gmra.mxu0 %v833
          %v1017 = vpop.f32.mrf.mxu0
          %v1018 = vadd.f32 0.0, %v1017
          %v1019 = vpop.f32.mrf.mxu0
          %v1020 = vpop.f32.mrf.mxu0
          %v1021 = vadd.f32 0.0, %v1020
          %v1022 = vpop.f32.mrf.mxu0
          %1023 = vmatprep.mubr.bf16.mxu0 0
          %1024 = vmatmul.mubr.bf16.gmra.mxu0 %v834
          %v1025 = vpop.f32.mrf.mxu0
          %v1026 = vadd.f32 0.0, %v1025
          %v1027 = vpop.f32.mrf.mxu0
          %v1028 = vpop.f32.mrf.mxu0
          %v1029 = vadd.f32 0.0, %v1028
          %v1030 = vpop.f32.mrf.mxu0
          %1031 = vmatprep.mubr.bf16.mxu0 0
          %1032 = vmatmul.mubr.bf16.gmra.mxu0 %v835
          %v1033 = vpop.f32.mrf.mxu0
          %v1034 = vadd.f32 0.0, %v1033
          %v1035 = vpop.f32.mrf.mxu0
          %v1036 = vpop.f32.mrf.mxu0
          %v1037 = vadd.f32 0.0, %v1036
          %v1038 = vpop.f32.mrf.mxu0
          %1039 = vmatprep.mubr.bf16.mxu0 0
          %1040 = vmatmul.mubr.bf16.gmra.mxu0 %v836
          %v1041 = vpop.f32.mrf.mxu0
          %v1042 = vadd.f32 0.0, %v1041
          %v1043 = vpop.f32.mrf.mxu0
          %v1044 = vpop.f32.mrf.mxu0
          %v1045 = vadd.f32 0.0, %v1044
          %v1046 = vpop.f32.mrf.mxu0
          %1047 = vmatprep.mubr.bf16.mxu0 0
          %1048 = vmatmul.mubr.bf16.gmra.mxu0 %v837
          %v1049 = vpop.f32.mrf.mxu0
          %v1050 = vadd.f32 0.0, %v1049
          %v1051 = vpop.f32.mrf.mxu0
          %v1052 = vpop.f32.mrf.mxu0
          %v1053 = vadd.f32 0.0, %v1052
          %v1054 = vpop.f32.mrf.mxu0
          %1055 = vmatprep.mubr.bf16.mxu0 0
          %1056 = vmatmul.mubr.bf16.gmra.mxu0 %v838
          %v1057 = vpop.f32.mrf.mxu0
          %v1058 = vadd.f32 0.0, %v1057
          %v1059 = vpop.f32.mrf.mxu0
          %v1060 = vpop.f32.mrf.mxu0
          %v1061 = vadd.f32 0.0, %v1060
          %v1062 = vpop.f32.mrf.mxu0
          %1063 = vdwg.mxu0
          %v1064 = vld [vmem:[#allocation12] sm:$0xf]
          %v1065 = vld [vmem:[#allocation12 + $0x4] sm:$0xf]
          %v1066 = vld [vmem:[#allocation12 + $0x8] sm:$0xf]
          %v1067 = vld [vmem:[#allocation12 + $0xc] sm:$0xf]
          %v1068 = vld [vmem:[#allocation12 + $0x10] sm:$0xf]
          %v1069 = vld [vmem:[#allocation12 + $0x14] sm:$0xf]
          %v1070 = vld [vmem:[#allocation12 + $0x18] sm:$0xf]
          %v1071 = vld [vmem:[#allocation12 + $0x1c] sm:$0xf]
          %v1072 = vld [vmem:[#allocation12 + $0x20] sm:$0xf]
          %v1073 = vld [vmem:[#allocation12 + $0x24] sm:$0xf]
          %v1074 = vld [vmem:[#allocation12 + $0x28] sm:$0xf]
          %v1075 = vld [vmem:[#allocation12 + $0x2c] sm:$0xf]
          %v1076 = vld [vmem:[#allocation12 + $0x30] sm:$0xf]
          %v1077 = vld [vmem:[#allocation12 + $0x34] sm:$0xf]
          %v1078 = vld [vmem:[#allocation12 + $0x38] sm:$0xf]
          %v1079 = vld [vmem:[#allocation12 + $0x3c] sm:$0xf]
          %v1096 = vunpack.c.l.b16 %v1064
          %v1097 = vunpack.c.l.b16 %v1065
          %v1098 = vunpack.c.l.b16 %v1066
          %v1099 = vunpack.c.l.b16 %v1067
          %v1100 = vunpack.c.l.b16 %v1068
          %v1101 = vunpack.c.l.b16 %v1069
          %v1102 = vunpack.c.l.b16 %v1070
          %v1103 = vunpack.c.l.b16 %v1071
          %v1104 = vunpack.c.l.b16 %v1072
          %v1105 = vunpack.c.l.b16 %v1073
          %v1106 = vunpack.c.l.b16 %v1074
          %v1107 = vunpack.c.l.b16 %v1075
          %v1108 = vunpack.c.l.b16 %v1076
          %v1109 = vunpack.c.l.b16 %v1077
          %v1110 = vunpack.c.l.b16 %v1078
          %v1111 = vunpack.c.l.b16 %v1079
          %v1112 = vpack.c.b16 %v1097, %v1096
          %v1113 = vpack.c.b16 %v1099, %v1098
          %v1114 = vpack.c.b16 %v1101, %v1100
          %v1115 = vpack.c.b16 %v1103, %v1102
          %v1116 = vpack.c.b16 %v1105, %v1104
          %v1117 = vpack.c.b16 %v1107, %v1106
          %v1118 = vpack.c.b16 %v1109, %v1108
          %v1119 = vpack.c.b16 %v1111, %v1110
          %1128 = vmatprep.subr.bf16.mxu0 0
          %1129 = vmatpush1.bf16.msra.mxu0 %v1119
          %1130 = vmatprep.subr.bf16.mxu0 0
          %1131 = vmatpush1.bf16.msra.mxu0 %v1118
          %1132 = vmatprep.subr.bf16.mxu0 0
          %1133 = vmatpush1.bf16.msra.mxu0 %v1117
          %1134 = vmatprep.subr.bf16.mxu0 0
          %1135 = vmatpush1.bf16.msra.mxu0 %v1116
          %1136 = vmatprep.subr.bf16.mxu0 0
          %1137 = vmatpush1.bf16.msra.mxu0 %v1115
          %1138 = vmatprep.subr.bf16.mxu0 0
          %1139 = vmatpush1.bf16.msra.mxu0 %v1114
          %1140 = vmatprep.subr.bf16.mxu0 0
          %1141 = vmatpush1.bf16.msra.mxu0 %v1113
          %1142 = vmatprep.subr.bf16.mxu0 0
          %1143 = vmatpush1.bf16.msra.mxu0 %v1112
          %1144 = vmatprep.subr.bf16.mxu0 0
          %1145 = vmatpush2.bf16.msra.mxu0 0
          %1146 = vmatprep.subr.bf16.mxu0 0
          %1147 = vmatpush2.bf16.msra.mxu0 0
          %1148 = vmatprep.subr.bf16.mxu0 0
          %1149 = vmatpush2.bf16.msra.mxu0 0
          %1150 = vmatprep.subr.bf16.mxu0 0
          %1151 = vmatpush2.bf16.msra.mxu0 0
          %1152 = vmatprep.subr.bf16.mxu0 0
          %1153 = vmatpush2.bf16.msra.mxu0 0
          %1154 = vmatprep.subr.bf16.mxu0 0
          %1155 = vmatpush2.bf16.msra.mxu0 0
          %1156 = vmatprep.subr.bf16.mxu0 0
          %1157 = vmatpush2.bf16.msra.mxu0 0
          %1158 = vmatprep.subr.bf16.mxu0 0
          %1159 = vmatpush2.bf16.msra.mxu0 0
          %1160 = vmatprep.mubr.bf16.mxu0 0
          %1161 = vmatmul.mubr.bf16.gmra.mxu0 %v823
          %v1162 = vpop.f32.mrf.mxu0
          %v1163 = vadd.f32 0.0, %v1162
          %v1164 = vpop.f32.mrf.mxu0
          %v1165 = vpop.f32.mrf.mxu0
          %v1166 = vadd.f32 0.0, %v1165
          %v1167 = vpop.f32.mrf.mxu0
          %1168 = vmatprep.mubr.bf16.mxu0 0
          %1169 = vmatmul.mubr.bf16.gmra.mxu0 %v824
          %v1170 = vpop.f32.mrf.mxu0
          %v1171 = vadd.f32 0.0, %v1170
          %v1172 = vpop.f32.mrf.mxu0
          %v1173 = vpop.f32.mrf.mxu0
          %v1174 = vadd.f32 0.0, %v1173
          %v1175 = vpop.f32.mrf.mxu0
          %1176 = vmatprep.mubr.bf16.mxu0 0
          %1177 = vmatmul.mubr.bf16.gmra.mxu0 %v825
          %v1178 = vpop.f32.mrf.mxu0
          %v1179 = vadd.f32 0.0, %v1178
          %v1180 = vpop.f32.mrf.mxu0
          %v1181 = vpop.f32.mrf.mxu0
          %v1182 = vadd.f32 0.0, %v1181
          %v1183 = vpop.f32.mrf.mxu0
          %1184 = vmatprep.mubr.bf16.mxu0 0
          %1185 = vmatmul.mubr.bf16.gmra.mxu0 %v826
          %v1186 = vpop.f32.mrf.mxu0
          %v1187 = vadd.f32 0.0, %v1186
          %v1188 = vpop.f32.mrf.mxu0
          %v1189 = vpop.f32.mrf.mxu0
          %v1190 = vadd.f32 0.0, %v1189
          %v1191 = vpop.f32.mrf.mxu0
          %1192 = vmatprep.mubr.bf16.mxu0 0
          %1193 = vmatmul.mubr.bf16.gmra.mxu0 %v827
          %v1194 = vpop.f32.mrf.mxu0
          %v1195 = vadd.f32 0.0, %v1194
          %v1196 = vpop.f32.mrf.mxu0
          %v1197 = vpop.f32.mrf.mxu0
          %v1198 = vadd.f32 0.0, %v1197
          %v1199 = vpop.f32.mrf.mxu0
          %1200 = vmatprep.mubr.bf16.mxu0 0
          %1201 = vmatmul.mubr.bf16.gmra.mxu0 %v828
          %v1202 = vpop.f32.mrf.mxu0
          %v1203 = vadd.f32 0.0, %v1202
          %v1204 = vpop.f32.mrf.mxu0
          %v1205 = vpop.f32.mrf.mxu0
          %v1206 = vadd.f32 0.0, %v1205
          %v1207 = vpop.f32.mrf.mxu0
          %1208 = vmatprep.mubr.bf16.mxu0 0
          %1209 = vmatmul.mubr.bf16.gmra.mxu0 %v829
          %v1210 = vpop.f32.mrf.mxu0
          %v1211 = vadd.f32 0.0, %v1210
          %v1212 = vpop.f32.mrf.mxu0
          %v1213 = vpop.f32.mrf.mxu0
          %v1214 = vadd.f32 0.0, %v1213
          %v1215 = vpop.f32.mrf.mxu0
          %1216 = vmatprep.mubr.bf16.mxu0 0
          %1217 = vmatmul.mubr.bf16.gmra.mxu0 %v830
          %v1218 = vpop.f32.mrf.mxu0
          %v1219 = vadd.f32 0.0, %v1218
          %v1220 = vpop.f32.mrf.mxu0
          %v1221 = vpop.f32.mrf.mxu0
          %v1222 = vadd.f32 0.0, %v1221
          %v1223 = vpop.f32.mrf.mxu0
          %1224 = vmatprep.mubr.bf16.mxu0 0
          %1225 = vmatmul.mubr.bf16.gmra.mxu0 %v831
          %v1226 = vpop.f32.mrf.mxu0
          %v1227 = vadd.f32 0.0, %v1226
          %v1228 = vpop.f32.mrf.mxu0
          %v1229 = vpop.f32.mrf.mxu0
          %v1230 = vadd.f32 0.0, %v1229
          %v1231 = vpop.f32.mrf.mxu0
          %1232 = vmatprep.mubr.bf16.mxu0 0
          %1233 = vmatmul.mubr.bf16.gmra.mxu0 %v832
          %v1234 = vpop.f32.mrf.mxu0
          %v1235 = vadd.f32 0.0, %v1234
          %v1236 = vpop.f32.mrf.mxu0
          %v1237 = vpop.f32.mrf.mxu0
          %v1238 = vadd.f32 0.0, %v1237
          %v1239 = vpop.f32.mrf.mxu0
          %1240 = vmatprep.mubr.bf16.mxu0 0
          %1241 = vmatmul.mubr.bf16.gmra.mxu0 %v833
          %v1242 = vpop.f32.mrf.mxu0
          %v1243 = vadd.f32 0.0, %v1242
          %v1244 = vpop.f32.mrf.mxu0
          %v1245 = vpop.f32.mrf.mxu0
          %v1246 = vadd.f32 0.0, %v1245
          %v1247 = vpop.f32.mrf.mxu0
          %1248 = vmatprep.mubr.bf16.mxu0 0
          %1249 = vmatmul.mubr.bf16.gmra.mxu0 %v834
          %v1250 = vpop.f32.mrf.mxu0
          %v1251 = vadd.f32 0.0, %v1250
          %v1252 = vpop.f32.mrf.mxu0
          %v1253 = vpop.f32.mrf.mxu0
          %v1254 = vadd.f32 0.0, %v1253
          %v1255 = vpop.f32.mrf.mxu0
          %1256 = vmatprep.mubr.bf16.mxu0 0
          %1257 = vmatmul.mubr.bf16.gmra.mxu0 %v835
          %v1258 = vpop.f32.mrf.mxu0
          %v1259 = vadd.f32 0.0, %v1258
          %v1260 = vpop.f32.mrf.mxu0
          %v1261 = vpop.f32.mrf.mxu0
          %v1262 = vadd.f32 0.0, %v1261
          %v1263 = vpop.f32.mrf.mxu0
          %1264 = vmatprep.mubr.bf16.mxu0 0
          %1265 = vmatmul.mubr.bf16.gmra.mxu0 %v836
          %v1266 = vpop.f32.mrf.mxu0
          %v1267 = vadd.f32 0.0, %v1266
          %v1268 = vpop.f32.mrf.mxu0
          %v1269 = vpop.f32.mrf.mxu0
          %v1270 = vadd.f32 0.0, %v1269
          %v1271 = vpop.f32.mrf.mxu0
          %1272 = vmatprep.mubr.bf16.mxu0 0
          %1273 = vmatmul.mubr.bf16.gmra.mxu0 %v837
          %v1274 = vpop.f32.mrf.mxu0
          %v1275 = vadd.f32 0.0, %v1274
          %v1276 = vpop.f32.mrf.mxu0
          %v1277 = vpop.f32.mrf.mxu0
          %v1278 = vadd.f32 0.0, %v1277
          %v1279 = vpop.f32.mrf.mxu0
          %1280 = vmatprep.mubr.bf16.mxu0 0
          %1281 = vmatmul.mubr.bf16.gmra.mxu0 %v838
          %v1282 = vpop.f32.mrf.mxu0
          %v1283 = vadd.f32 0.0, %v1282
          %v1284 = vpop.f32.mrf.mxu0
          %v1285 = vpop.f32.mrf.mxu0
          %v1286 = vadd.f32 0.0, %v1285
          %v1287 = vpop.f32.mrf.mxu0
          %1288 = vdwg.mxu0
          %1289 = vrot.lane.b32.xlu0 %v938, 120
          %v1290 = vpop.permute.xlu0 %1289
          %1291 = vrot.lane.b32.xlu0 %v941, 120
          %v1292 = vpop.permute.xlu0 %1291
          %1293 = vrot.lane.b32.xlu0 %v946, 120
          %v1294 = vpop.permute.xlu0 %1293
          %1295 = vrot.lane.b32.xlu0 %v949, 120
          %v1296 = vpop.permute.xlu0 %1295
          %1297 = vrot.lane.b32.xlu0 %v954, 120
          %v1298 = vpop.permute.xlu0 %1297
          %1299 = vrot.lane.b32.xlu0 %v957, 120
          %v1300 = vpop.permute.xlu0 %1299
          %1301 = vrot.lane.b32.xlu0 %v962, 120
          %v1302 = vpop.permute.xlu0 %1301
          %1303 = vrot.lane.b32.xlu0 %v965, 120
          %v1304 = vpop.permute.xlu0 %1303
          %1305 = vrot.lane.b32.xlu0 %v970, 120
          %v1306 = vpop.permute.xlu0 %1305
          %1307 = vrot.lane.b32.xlu0 %v973, 120
          %v1308 = vpop.permute.xlu0 %1307
          %1309 = vrot.lane.b32.xlu0 %v978, 120
          %v1310 = vpop.permute.xlu0 %1309
          %1311 = vrot.lane.b32.xlu0 %v981, 120
          %v1312 = vpop.permute.xlu0 %1311
          %1313 = vrot.lane.b32.xlu0 %v986, 120
          %v1314 = vpop.permute.xlu0 %1313
          %1315 = vrot.lane.b32.xlu0 %v989, 120
          %v1316 = vpop.permute.xlu0 %1315
          %1317 = vrot.lane.b32.xlu0 %v994, 120
          %v1318 = vpop.permute.xlu0 %1317
          %1319 = vrot.lane.b32.xlu0 %v997, 120
          %v1320 = vpop.permute.xlu0 %1319
          %1321 = vrot.lane.b32.xlu0 %v1002, 120
          %v1322 = vpop.permute.xlu0 %1321
          %1323 = vrot.lane.b32.xlu0 %v1005, 120
          %v1324 = vpop.permute.xlu0 %1323
          %1325 = vrot.lane.b32.xlu0 %v1010, 120
          %v1326 = vpop.permute.xlu0 %1325
          %1327 = vrot.lane.b32.xlu0 %v1013, 120
          %v1328 = vpop.permute.xlu0 %1327
          %1329 = vrot.lane.b32.xlu0 %v1018, 120
          %v1330 = vpop.permute.xlu0 %1329
          %1331 = vrot.lane.b32.xlu0 %v1021, 120
          %v1332 = vpop.permute.xlu0 %1331
          %1333 = vrot.lane.b32.xlu0 %v1026, 120
          %v1334 = vpop.permute.xlu0 %1333
          %1335 = vrot.lane.b32.xlu0 %v1029, 120
          %v1336 = vpop.permute.xlu0 %1335
          %1337 = vrot.lane.b32.xlu0 %v1034, 120
          %v1338 = vpop.permute.xlu0 %1337
          %1339 = vrot.lane.b32.xlu0 %v1037, 120
          %v1340 = vpop.permute.xlu0 %1339
          %1341 = vrot.lane.b32.xlu0 %v1042, 120
          %v1342 = vpop.permute.xlu0 %1341
          %1343 = vrot.lane.b32.xlu0 %v1045, 120
          %v1344 = vpop.permute.xlu0 %1343
          %1345 = vrot.lane.b32.xlu0 %v1050, 120
          %v1346 = vpop.permute.xlu0 %1345
          %1347 = vrot.lane.b32.xlu0 %v1053, 120
          %v1348 = vpop.permute.xlu0 %1347
          %1349 = vrot.lane.b32.xlu0 %v1058, 120
          %v1350 = vpop.permute.xlu0 %1349
          %1351 = vrot.lane.b32.xlu0 %v1061, 120
          %v1352 = vpop.permute.xlu0 %1351
          %1353 = vrot.lane.b32.xlu0 %v938, 8
          %v1354 = vpop.permute.xlu0 %1353
          %1355 = vrot.lane.b32.xlu0 %v941, 8
          %v1356 = vpop.permute.xlu0 %1355
          %1357 = vrot.lane.b32.xlu0 %v946, 8
          %v1358 = vpop.permute.xlu0 %1357
          %1359 = vrot.lane.b32.xlu0 %v949, 8
          %v1360 = vpop.permute.xlu0 %1359
          %1361 = vrot.lane.b32.xlu0 %v954, 8
          %v1362 = vpop.permute.xlu0 %1361
          %1363 = vrot.lane.b32.xlu0 %v957, 8
          %v1364 = vpop.permute.xlu0 %1363
          %1365 = vrot.lane.b32.xlu0 %v962, 8
          %v1366 = vpop.permute.xlu0 %1365
          %1367 = vrot.lane.b32.xlu0 %v965, 8
          %v1368 = vpop.permute.xlu0 %1367
          %1369 = vrot.lane.b32.xlu0 %v970, 8
          %v1370 = vpop.permute.xlu0 %1369
          %1371 = vrot.lane.b32.xlu0 %v973, 8
          %v1372 = vpop.permute.xlu0 %1371
          %1373 = vrot.lane.b32.xlu0 %v978, 8
          %v1374 = vpop.permute.xlu0 %1373
          %1375 = vrot.lane.b32.xlu0 %v981, 8
          %v1376 = vpop.permute.xlu0 %1375
          %1377 = vrot.lane.b32.xlu0 %v986, 8
          %v1378 = vpop.permute.xlu0 %1377
          %1379 = vrot.lane.b32.xlu0 %v989, 8
          %v1380 = vpop.permute.xlu0 %1379
          %1381 = vrot.lane.b32.xlu0 %v994, 8
          %v1382 = vpop.permute.xlu0 %1381
          %1383 = vrot.lane.b32.xlu0 %v997, 8
          %v1384 = vpop.permute.xlu0 %1383
          %1385 = vrot.lane.b32.xlu0 %v1002, 8
          %v1386 = vpop.permute.xlu0 %1385
          %1387 = vrot.lane.b32.xlu0 %v1005, 8
          %v1388 = vpop.permute.xlu0 %1387
          %1389 = vrot.lane.b32.xlu0 %v1010, 8
          %v1390 = vpop.permute.xlu0 %1389
          %1391 = vrot.lane.b32.xlu0 %v1013, 8
          %v1392 = vpop.permute.xlu0 %1391
          %1393 = vrot.lane.b32.xlu0 %v1018, 8
          %v1394 = vpop.permute.xlu0 %1393
          %1395 = vrot.lane.b32.xlu0 %v1021, 8
          %v1396 = vpop.permute.xlu0 %1395
          %1397 = vrot.lane.b32.xlu0 %v1026, 8
          %v1398 = vpop.permute.xlu0 %1397
          %1399 = vrot.lane.b32.xlu0 %v1029, 8
          %v1400 = vpop.permute.xlu0 %1399
          %1401 = vrot.lane.b32.xlu0 %v1034, 8
          %v1402 = vpop.permute.xlu0 %1401
          %1403 = vrot.lane.b32.xlu0 %v1037, 8
          %v1404 = vpop.permute.xlu0 %1403
          %1405 = vrot.lane.b32.xlu0 %v1042, 8
          %v1406 = vpop.permute.xlu0 %1405
          %1407 = vrot.lane.b32.xlu0 %v1045, 8
          %v1408 = vpop.permute.xlu0 %1407
          %1409 = vrot.lane.b32.xlu0 %v1050, 8
          %v1410 = vpop.permute.xlu0 %1409
          %1411 = vrot.lane.b32.xlu0 %v1053, 8
          %v1412 = vpop.permute.xlu0 %1411
          %1413 = vrot.lane.b32.xlu0 %v1058, 8
          %v1414 = vpop.permute.xlu0 %1413
          %1415 = vrot.lane.b32.xlu0 %v1061, 8
          %v1416 = vpop.permute.xlu0 %1415
          %v1417 = vld [vmem:[#allocation18] sm:$0xf]
          %v1418 = vld [vmem:[#allocation18 + $0x4] sm:$0xf]
          %v1419 = vld [vmem:[#allocation18 + $0x8] sm:$0xf]
          %v1420 = vld [vmem:[#allocation18 + $0xc] sm:$0xf]
          %v1421 = vld [vmem:[#allocation18 + $0x10] sm:$0xf]
          %v1422 = vld [vmem:[#allocation18 + $0x14] sm:$0xf]
          %v1423 = vld [vmem:[#allocation18 + $0x18] sm:$0xf]
          %v1424 = vld [vmem:[#allocation18 + $0x1c] sm:$0xf]
          %v1425 = vld [vmem:[#allocation18 + $0x20] sm:$0xf]
          %v1426 = vld [vmem:[#allocation18 + $0x24] sm:$0xf]
          %v1427 = vld [vmem:[#allocation18 + $0x28] sm:$0xf]
          %v1428 = vld [vmem:[#allocation18 + $0x2c] sm:$0xf]
          %v1429 = vld [vmem:[#allocation18 + $0x30] sm:$0xf]
          %v1430 = vld [vmem:[#allocation18 + $0x34] sm:$0xf]
          %v1431 = vld [vmem:[#allocation18 + $0x38] sm:$0xf]
          %v1432 = vld [vmem:[#allocation18 + $0x3c] sm:$0xf]
          %v1433 = vld [vmem:[#allocation18 + $0x40] sm:$0xf]
          %v1434 = vld [vmem:[#allocation18 + $0x44] sm:$0xf]
          %v1435 = vld [vmem:[#allocation18 + $0x48] sm:$0xf]
          %v1436 = vld [vmem:[#allocation18 + $0x4c] sm:$0xf]
          %v1437 = vld [vmem:[#allocation18 + $0x50] sm:$0xf]
          %v1438 = vld [vmem:[#allocation18 + $0x54] sm:$0xf]
          %v1439 = vld [vmem:[#allocation18 + $0x58] sm:$0xf]
          %v1440 = vld [vmem:[#allocation18 + $0x5c] sm:$0xf]
          %v1441 = vld [vmem:[#allocation18 + $0x60] sm:$0xf]
          %v1442 = vld [vmem:[#allocation18 + $0x64] sm:$0xf]
          %v1443 = vld [vmem:[#allocation18 + $0x68] sm:$0xf]
          %v1444 = vld [vmem:[#allocation18 + $0x6c] sm:$0xf]
          %v1445 = vld [vmem:[#allocation18 + $0x70] sm:$0xf]
          %v1446 = vld [vmem:[#allocation18 + $0x74] sm:$0xf]
          %v1447 = vld [vmem:[#allocation18 + $0x78] sm:$0xf]
          %v1448 = vld [vmem:[#allocation18 + $0x7c] sm:$0xf]
          %v1449 = vunpack.c.l.bf16 %v1417
          %v1450 = vunpack.c.l.bf16 %v1418
          %v1451 = vunpack.c.l.bf16 %v1419
          %v1452 = vunpack.c.l.bf16 %v1420
          %v1453 = vunpack.c.l.bf16 %v1421
          %v1454 = vunpack.c.l.bf16 %v1422
          %v1455 = vunpack.c.l.bf16 %v1423
          %v1456 = vunpack.c.l.bf16 %v1424
          %v1457 = vunpack.c.l.bf16 %v1425
          %v1458 = vunpack.c.l.bf16 %v1426
          %v1459 = vunpack.c.l.bf16 %v1427
          %v1460 = vunpack.c.l.bf16 %v1428
          %v1461 = vunpack.c.l.bf16 %v1429
          %v1462 = vunpack.c.l.bf16 %v1430
          %v1463 = vunpack.c.l.bf16 %v1431
          %v1464 = vunpack.c.l.bf16 %v1432
          %v1465 = vunpack.c.l.bf16 %v1433
          %v1466 = vunpack.c.l.bf16 %v1434
          %v1467 = vunpack.c.l.bf16 %v1435
          %v1468 = vunpack.c.l.bf16 %v1436
          %v1469 = vunpack.c.l.bf16 %v1437
          %v1470 = vunpack.c.l.bf16 %v1438
          %v1471 = vunpack.c.l.bf16 %v1439
          %v1472 = vunpack.c.l.bf16 %v1440
          %v1473 = vunpack.c.l.bf16 %v1441
          %v1474 = vunpack.c.l.bf16 %v1442
          %v1475 = vunpack.c.l.bf16 %v1443
          %v1476 = vunpack.c.l.bf16 %v1444
          %v1477 = vunpack.c.l.bf16 %v1445
          %v1478 = vunpack.c.l.bf16 %v1446
          %v1479 = vunpack.c.l.bf16 %v1447
          %v1480 = vunpack.c.l.bf16 %v1448
          %v1481 = vmul.f32 %v938, %v1449
          %v1482 = vmul.f32 %v941, %v1450
          %v1483 = vmul.f32 %v946, %v1451
          %v1484 = vmul.f32 %v949, %v1452
          %v1485 = vmul.f32 %v954, %v1453
          %v1486 = vmul.f32 %v957, %v1454
          %v1487 = vmul.f32 %v962, %v1455
          %v1488 = vmul.f32 %v965, %v1456
          %v1489 = vmul.f32 %v970, %v1457
          %v1490 = vmul.f32 %v973, %v1458
          %v1491 = vmul.f32 %v978, %v1459
          %v1492 = vmul.f32 %v981, %v1460
          %v1493 = vmul.f32 %v986, %v1461
          %v1494 = vmul.f32 %v989, %v1462
          %v1495 = vmul.f32 %v994, %v1463
          %v1496 = vmul.f32 %v997, %v1464
          %v1497 = vmul.f32 %v1002, %v1465
          %v1498 = vmul.f32 %v1005, %v1466
          %v1499 = vmul.f32 %v1010, %v1467
          %v1500 = vmul.f32 %v1013, %v1468
          %v1501 = vmul.f32 %v1018, %v1469
          %v1502 = vmul.f32 %v1021, %v1470
          %v1503 = vmul.f32 %v1026, %v1471
          %v1504 = vmul.f32 %v1029, %v1472
          %v1505 = vmul.f32 %v1034, %v1473
          %v1506 = vmul.f32 %v1037, %v1474
          %v1507 = vmul.f32 %v1042, %v1475
          %v1508 = vmul.f32 %v1045, %v1476
          %v1509 = vmul.f32 %v1050, %v1477
          %v1510 = vmul.f32 %v1053, %v1478
          %v1511 = vmul.f32 %v1058, %v1479
          %v1512 = vmul.f32 %v1061, %v1480
          %v1513 = vld [vmem:[#allocation19] sm:$0xf]
          %v1514 = vld [vmem:[#allocation19 + $0x4] sm:$0xf]
          %v1515 = vld [vmem:[#allocation19 + $0x8] sm:$0xf]
          %v1516 = vld [vmem:[#allocation19 + $0xc] sm:$0xf]
          %v1517 = vld [vmem:[#allocation19 + $0x10] sm:$0xf]
          %v1518 = vld [vmem:[#allocation19 + $0x14] sm:$0xf]
          %v1519 = vld [vmem:[#allocation19 + $0x18] sm:$0xf]
          %v1520 = vld [vmem:[#allocation19 + $0x1c] sm:$0xf]
          %v1521 = vld [vmem:[#allocation19 + $0x20] sm:$0xf]
          %v1522 = vld [vmem:[#allocation19 + $0x24] sm:$0xf]
          %v1523 = vld [vmem:[#allocation19 + $0x28] sm:$0xf]
          %v1524 = vld [vmem:[#allocation19 + $0x2c] sm:$0xf]
          %v1525 = vld [vmem:[#allocation19 + $0x30] sm:$0xf]
          %v1526 = vld [vmem:[#allocation19 + $0x34] sm:$0xf]
          %v1527 = vld [vmem:[#allocation19 + $0x38] sm:$0xf]
          %v1528 = vld [vmem:[#allocation19 + $0x3c] sm:$0xf]
          %v1529 = vld [vmem:[#allocation19 + $0x40] sm:$0xf]
          %v1530 = vld [vmem:[#allocation19 + $0x44] sm:$0xf]
          %v1531 = vld [vmem:[#allocation19 + $0x48] sm:$0xf]
          %v1532 = vld [vmem:[#allocation19 + $0x4c] sm:$0xf]
          %v1533 = vld [vmem:[#allocation19 + $0x50] sm:$0xf]
          %v1534 = vld [vmem:[#allocation19 + $0x54] sm:$0xf]
          %v1535 = vld [vmem:[#allocation19 + $0x58] sm:$0xf]
          %v1536 = vld [vmem:[#allocation19 + $0x5c] sm:$0xf]
          %v1537 = vld [vmem:[#allocation19 + $0x60] sm:$0xf]
          %v1538 = vld [vmem:[#allocation19 + $0x64] sm:$0xf]
          %v1539 = vld [vmem:[#allocation19 + $0x68] sm:$0xf]
          %v1540 = vld [vmem:[#allocation19 + $0x6c] sm:$0xf]
          %v1541 = vld [vmem:[#allocation19 + $0x70] sm:$0xf]
          %v1542 = vld [vmem:[#allocation19 + $0x74] sm:$0xf]
          %v1543 = vld [vmem:[#allocation19 + $0x78] sm:$0xf]
          %v1544 = vld [vmem:[#allocation19 + $0x7c] sm:$0xf]
          %v1545 = vunpack.c.l.bf16 %v1513
          %v1546 = vunpack.c.l.bf16 %v1514
          %v1547 = vunpack.c.l.bf16 %v1515
          %v1548 = vunpack.c.l.bf16 %v1516
          %v1549 = vunpack.c.l.bf16 %v1517
          %v1550 = vunpack.c.l.bf16 %v1518
          %v1551 = vunpack.c.l.bf16 %v1519
          %v1552 = vunpack.c.l.bf16 %v1520
          %v1553 = vunpack.c.l.bf16 %v1521
          %v1554 = vunpack.c.l.bf16 %v1522
          %v1555 = vunpack.c.l.bf16 %v1523
          %v1556 = vunpack.c.l.bf16 %v1524
          %v1557 = vunpack.c.l.bf16 %v1525
          %v1558 = vunpack.c.l.bf16 %v1526
          %v1559 = vunpack.c.l.bf16 %v1527
          %v1560 = vunpack.c.l.bf16 %v1528
          %v1561 = vunpack.c.l.bf16 %v1529
          %v1562 = vunpack.c.l.bf16 %v1530
          %v1563 = vunpack.c.l.bf16 %v1531
          %v1564 = vunpack.c.l.bf16 %v1532
          %v1565 = vunpack.c.l.bf16 %v1533
          %v1566 = vunpack.c.l.bf16 %v1534
          %v1567 = vunpack.c.l.bf16 %v1535
          %v1568 = vunpack.c.l.bf16 %v1536
          %v1569 = vunpack.c.l.bf16 %v1537
          %v1570 = vunpack.c.l.bf16 %v1538
          %v1571 = vunpack.c.l.bf16 %v1539
          %v1572 = vunpack.c.l.bf16 %v1540
          %v1573 = vunpack.c.l.bf16 %v1541
          %v1574 = vunpack.c.l.bf16 %v1542
          %v1575 = vunpack.c.l.bf16 %v1543
          %v1576 = vunpack.c.l.bf16 %v1544
          %v1577 = vmul.f32 %v1290, %v1545
          %v1578 = vmul.f32 %v1292, %v1546
          %v1579 = vmul.f32 %v1294, %v1547
          %v1580 = vmul.f32 %v1296, %v1548
          %v1581 = vmul.f32 %v1298, %v1549
          %v1582 = vmul.f32 %v1300, %v1550
          %v1583 = vmul.f32 %v1302, %v1551
          %v1584 = vmul.f32 %v1304, %v1552
          %v1585 = vmul.f32 %v1306, %v1553
          %v1586 = vmul.f32 %v1308, %v1554
          %v1587 = vmul.f32 %v1310, %v1555
          %v1588 = vmul.f32 %v1312, %v1556
          %v1589 = vmul.f32 %v1314, %v1557
          %v1590 = vmul.f32 %v1316, %v1558
          %v1591 = vmul.f32 %v1318, %v1559
          %v1592 = vmul.f32 %v1320, %v1560
          %v1593 = vmul.f32 %v1322, %v1561
          %v1594 = vmul.f32 %v1324, %v1562
          %v1595 = vmul.f32 %v1326, %v1563
          %v1596 = vmul.f32 %v1328, %v1564
          %v1597 = vmul.f32 %v1330, %v1565
          %v1598 = vmul.f32 %v1332, %v1566
          %v1599 = vmul.f32 %v1334, %v1567
          %v1600 = vmul.f32 %v1336, %v1568
          %v1601 = vmul.f32 %v1338, %v1569
          %v1602 = vmul.f32 %v1340, %v1570
          %v1603 = vmul.f32 %v1342, %v1571
          %v1604 = vmul.f32 %v1344, %v1572
          %v1605 = vmul.f32 %v1346, %v1573
          %v1606 = vmul.f32 %v1348, %v1574
          %v1607 = vmul.f32 %v1350, %v1575
          %v1608 = vmul.f32 %v1352, %v1576
          %v1609 = vadd.f32 %v1481, %v1577
          %v1610 = vadd.f32 %v1482, %v1578
          %v1611 = vadd.f32 %v1483, %v1579
          %v1612 = vadd.f32 %v1484, %v1580
          %v1613 = vadd.f32 %v1485, %v1581
          %v1614 = vadd.f32 %v1486, %v1582
          %v1615 = vadd.f32 %v1487, %v1583
          %v1616 = vadd.f32 %v1488, %v1584
          %v1617 = vadd.f32 %v1489, %v1585
          %v1618 = vadd.f32 %v1490, %v1586
          %v1619 = vadd.f32 %v1491, %v1587
          %v1620 = vadd.f32 %v1492, %v1588
          %v1621 = vadd.f32 %v1493, %v1589
          %v1622 = vadd.f32 %v1494, %v1590
          %v1623 = vadd.f32 %v1495, %v1591
          %v1624 = vadd.f32 %v1496, %v1592
          %v1625 = vadd.f32 %v1497, %v1593
          %v1626 = vadd.f32 %v1498, %v1594
          %v1627 = vadd.f32 %v1499, %v1595
          %v1628 = vadd.f32 %v1500, %v1596
          %v1629 = vadd.f32 %v1501, %v1597
          %v1630 = vadd.f32 %v1502, %v1598
          %v1631 = vadd.f32 %v1503, %v1599
          %v1632 = vadd.f32 %v1504, %v1600
          %v1633 = vadd.f32 %v1505, %v1601
          %v1634 = vadd.f32 %v1506, %v1602
          %v1635 = vadd.f32 %v1507, %v1603
          %v1636 = vadd.f32 %v1508, %v1604
          %v1637 = vadd.f32 %v1509, %v1605
          %v1638 = vadd.f32 %v1510, %v1606
          %v1639 = vadd.f32 %v1511, %v1607
          %v1640 = vadd.f32 %v1512, %v1608
          %v1641 = vld [vmem:[#allocation20] sm:$0xf]
          %v1642 = vld [vmem:[#allocation20 + $0x4] sm:$0xf]
          %v1643 = vld [vmem:[#allocation20 + $0x8] sm:$0xf]
          %v1644 = vld [vmem:[#allocation20 + $0xc] sm:$0xf]
          %v1645 = vld [vmem:[#allocation20 + $0x10] sm:$0xf]
          %v1646 = vld [vmem:[#allocation20 + $0x14] sm:$0xf]
          %v1647 = vld [vmem:[#allocation20 + $0x18] sm:$0xf]
          %v1648 = vld [vmem:[#allocation20 + $0x1c] sm:$0xf]
          %v1649 = vld [vmem:[#allocation20 + $0x20] sm:$0xf]
          %v1650 = vld [vmem:[#allocation20 + $0x24] sm:$0xf]
          %v1651 = vld [vmem:[#allocation20 + $0x28] sm:$0xf]
          %v1652 = vld [vmem:[#allocation20 + $0x2c] sm:$0xf]
          %v1653 = vld [vmem:[#allocation20 + $0x30] sm:$0xf]
          %v1654 = vld [vmem:[#allocation20 + $0x34] sm:$0xf]
          %v1655 = vld [vmem:[#allocation20 + $0x38] sm:$0xf]
          %v1656 = vld [vmem:[#allocation20 + $0x3c] sm:$0xf]
          %v1657 = vld [vmem:[#allocation20 + $0x40] sm:$0xf]
          %v1658 = vld [vmem:[#allocation20 + $0x44] sm:$0xf]
          %v1659 = vld [vmem:[#allocation20 + $0x48] sm:$0xf]
          %v1660 = vld [vmem:[#allocation20 + $0x4c] sm:$0xf]
          %v1661 = vld [vmem:[#allocation20 + $0x50] sm:$0xf]
          %v1662 = vld [vmem:[#allocation20 + $0x54] sm:$0xf]
          %v1663 = vld [vmem:[#allocation20 + $0x58] sm:$0xf]
          %v1664 = vld [vmem:[#allocation20 + $0x5c] sm:$0xf]
          %v1665 = vld [vmem:[#allocation20 + $0x60] sm:$0xf]
          %v1666 = vld [vmem:[#allocation20 + $0x64] sm:$0xf]
          %v1667 = vld [vmem:[#allocation20 + $0x68] sm:$0xf]
          %v1668 = vld [vmem:[#allocation20 + $0x6c] sm:$0xf]
          %v1669 = vld [vmem:[#allocation20 + $0x70] sm:$0xf]
          %v1670 = vld [vmem:[#allocation20 + $0x74] sm:$0xf]
          %v1671 = vld [vmem:[#allocation20 + $0x78] sm:$0xf]
          %v1672 = vld [vmem:[#allocation20 + $0x7c] sm:$0xf]
          %v1673 = vunpack.c.l.bf16 %v1641
          %v1674 = vunpack.c.l.bf16 %v1642
          %v1675 = vunpack.c.l.bf16 %v1643
          %v1676 = vunpack.c.l.bf16 %v1644
          %v1677 = vunpack.c.l.bf16 %v1645
          %v1678 = vunpack.c.l.bf16 %v1646
          %v1679 = vunpack.c.l.bf16 %v1647
          %v1680 = vunpack.c.l.bf16 %v1648
          %v1681 = vunpack.c.l.bf16 %v1649
          %v1682 = vunpack.c.l.bf16 %v1650
          %v1683 = vunpack.c.l.bf16 %v1651
          %v1684 = vunpack.c.l.bf16 %v1652
          %v1685 = vunpack.c.l.bf16 %v1653
          %v1686 = vunpack.c.l.bf16 %v1654
          %v1687 = vunpack.c.l.bf16 %v1655
          %v1688 = vunpack.c.l.bf16 %v1656
          %v1689 = vunpack.c.l.bf16 %v1657
          %v1690 = vunpack.c.l.bf16 %v1658
          %v1691 = vunpack.c.l.bf16 %v1659
          %v1692 = vunpack.c.l.bf16 %v1660
          %v1693 = vunpack.c.l.bf16 %v1661
          %v1694 = vunpack.c.l.bf16 %v1662
          %v1695 = vunpack.c.l.bf16 %v1663
          %v1696 = vunpack.c.l.bf16 %v1664
          %v1697 = vunpack.c.l.bf16 %v1665
          %v1698 = vunpack.c.l.bf16 %v1666
          %v1699 = vunpack.c.l.bf16 %v1667
          %v1700 = vunpack.c.l.bf16 %v1668
          %v1701 = vunpack.c.l.bf16 %v1669
          %v1702 = vunpack.c.l.bf16 %v1670
          %v1703 = vunpack.c.l.bf16 %v1671
          %v1704 = vunpack.c.l.bf16 %v1672
          %v1705 = vmul.f32 %v1354, %v1673
          %v1706 = vmul.f32 %v1356, %v1674
          %v1707 = vmul.f32 %v1358, %v1675
          %v1708 = vmul.f32 %v1360, %v1676
          %v1709 = vmul.f32 %v1362, %v1677
          %v1710 = vmul.f32 %v1364, %v1678
          %v1711 = vmul.f32 %v1366, %v1679
          %v1712 = vmul.f32 %v1368, %v1680
          %v1713 = vmul.f32 %v1370, %v1681
          %v1714 = vmul.f32 %v1372, %v1682
          %v1715 = vmul.f32 %v1374, %v1683
          %v1716 = vmul.f32 %v1376, %v1684
          %v1717 = vmul.f32 %v1378, %v1685
          %v1718 = vmul.f32 %v1380, %v1686
          %v1719 = vmul.f32 %v1382, %v1687
          %v1720 = vmul.f32 %v1384, %v1688
          %v1721 = vmul.f32 %v1386, %v1689
          %v1722 = vmul.f32 %v1388, %v1690
          %v1723 = vmul.f32 %v1390, %v1691
          %v1724 = vmul.f32 %v1392, %v1692
          %v1725 = vmul.f32 %v1394, %v1693
          %v1726 = vmul.f32 %v1396, %v1694
          %v1727 = vmul.f32 %v1398, %v1695
          %v1728 = vmul.f32 %v1400, %v1696
          %v1729 = vmul.f32 %v1402, %v1697
          %v1730 = vmul.f32 %v1404, %v1698
          %v1731 = vmul.f32 %v1406, %v1699
          %v1732 = vmul.f32 %v1408, %v1700
          %v1733 = vmul.f32 %v1410, %v1701
          %v1734 = vmul.f32 %v1412, %v1702
          %v1735 = vmul.f32 %v1414, %v1703
          %v1736 = vmul.f32 %v1416, %v1704
          %v1737 = vadd.f32 %v1609, %v1705
          %v1738 = vadd.f32 %v1610, %v1706
          %v1739 = vadd.f32 %v1611, %v1707
          %v1740 = vadd.f32 %v1612, %v1708
          %v1741 = vadd.f32 %v1613, %v1709
          %v1742 = vadd.f32 %v1614, %v1710
          %v1743 = vadd.f32 %v1615, %v1711
          %v1744 = vadd.f32 %v1616, %v1712
          %v1745 = vadd.f32 %v1617, %v1713
          %v1746 = vadd.f32 %v1618, %v1714
          %v1747 = vadd.f32 %v1619, %v1715
          %v1748 = vadd.f32 %v1620, %v1716
          %v1749 = vadd.f32 %v1621, %v1717
          %v1750 = vadd.f32 %v1622, %v1718
          %v1751 = vadd.f32 %v1623, %v1719
          %v1752 = vadd.f32 %v1624, %v1720
          %v1753 = vadd.f32 %v1625, %v1721
          %v1754 = vadd.f32 %v1626, %v1722
          %v1755 = vadd.f32 %v1627, %v1723
          %v1756 = vadd.f32 %v1628, %v1724
          %v1757 = vadd.f32 %v1629, %v1725
          %v1758 = vadd.f32 %v1630, %v1726
          %v1759 = vadd.f32 %v1631, %v1727
          %v1760 = vadd.f32 %v1632, %v1728
          %v1761 = vadd.f32 %v1633, %v1729
          %v1762 = vadd.f32 %v1634, %v1730
          %v1763 = vadd.f32 %v1635, %v1731
          %v1764 = vadd.f32 %v1636, %v1732
          %v1765 = vadd.f32 %v1637, %v1733
          %v1766 = vadd.f32 %v1638, %v1734
          %v1767 = vadd.f32 %v1639, %v1735
          %v1768 = vadd.f32 %v1640, %v1736
          %v1769 = vpack.c.bf16 %v1738, %v1737
          %v1770 = vpack.c.bf16 %v1740, %v1739
          %v1771 = vpack.c.bf16 %v1742, %v1741
          %v1772 = vpack.c.bf16 %v1744, %v1743
          %v1773 = vpack.c.bf16 %v1746, %v1745
          %v1774 = vpack.c.bf16 %v1748, %v1747
          %v1775 = vpack.c.bf16 %v1750, %v1749
          %v1776 = vpack.c.bf16 %v1752, %v1751
          %v1777 = vpack.c.bf16 %v1754, %v1753
          %v1778 = vpack.c.bf16 %v1756, %v1755
          %v1779 = vpack.c.bf16 %v1758, %v1757
          %v1780 = vpack.c.bf16 %v1760, %v1759
          %v1781 = vpack.c.bf16 %v1762, %v1761
          %v1782 = vpack.c.bf16 %v1764, %v1763
          %v1783 = vpack.c.bf16 %v1766, %v1765
          %v1784 = vpack.c.bf16 %v1768, %v1767
          %v1801 = vunpack.c.l.b16 %v1769
          %v1802 = vunpack.c.h.b16 %v1769
          %v1803 = vunpack.c.l.b16 %v1770
          %v1804 = vunpack.c.h.b16 %v1770
          %v1805 = vunpack.c.l.b16 %v1771
          %v1806 = vunpack.c.h.b16 %v1771
          %v1807 = vunpack.c.l.b16 %v1772
          %v1808 = vunpack.c.h.b16 %v1772
          %v1809 = vunpack.c.l.b16 %v1773
          %v1810 = vunpack.c.h.b16 %v1773
          %v1811 = vunpack.c.l.b16 %v1774
          %v1812 = vunpack.c.h.b16 %v1774
          %v1813 = vunpack.c.l.b16 %v1775
          %v1814 = vunpack.c.h.b16 %v1775
          %v1815 = vunpack.c.l.b16 %v1776
          %v1816 = vunpack.c.h.b16 %v1776
          %v1817 = vunpack.c.l.b16 %v1777
          %v1818 = vunpack.c.h.b16 %v1777
          %v1819 = vunpack.c.l.b16 %v1778
          %v1820 = vunpack.c.h.b16 %v1778
          %v1821 = vunpack.c.l.b16 %v1779
          %v1822 = vunpack.c.h.b16 %v1779
          %v1823 = vunpack.c.l.b16 %v1780
          %v1824 = vunpack.c.h.b16 %v1780
          %v1825 = vunpack.c.l.b16 %v1781
          %v1826 = vunpack.c.h.b16 %v1781
          %v1827 = vunpack.c.l.b16 %v1782
          %v1828 = vunpack.c.h.b16 %v1782
          %v1829 = vunpack.c.l.b16 %v1783
          %v1830 = vunpack.c.h.b16 %v1783
          %v1831 = vunpack.c.l.b16 %v1784
          %v1832 = vunpack.c.h.b16 %v1784
          %v1833 = vpack.c.b16 %v1801, %v1801
          %v1834 = vpack.c.b16 %v1802, %v1802
          %v1835 = vpack.c.b16 %v1803, %v1803
          %v1836 = vpack.c.b16 %v1804, %v1804
          %v1837 = vpack.c.b16 %v1805, %v1805
          %v1838 = vpack.c.b16 %v1806, %v1806
          %v1839 = vpack.c.b16 %v1807, %v1807
          %v1840 = vpack.c.b16 %v1808, %v1808
          %v1841 = vpack.c.b16 %v1809, %v1809
          %v1842 = vpack.c.b16 %v1810, %v1810
          %v1843 = vpack.c.b16 %v1811, %v1811
          %v1844 = vpack.c.b16 %v1812, %v1812
          %v1845 = vpack.c.b16 %v1813, %v1813
          %v1846 = vpack.c.b16 %v1814, %v1814
          %v1847 = vpack.c.b16 %v1815, %v1815
          %v1848 = vpack.c.b16 %v1816, %v1816
          %v1849 = vpack.c.b16 %v1817, %v1817
          %v1850 = vpack.c.b16 %v1818, %v1818
          %v1851 = vpack.c.b16 %v1819, %v1819
          %v1852 = vpack.c.b16 %v1820, %v1820
          %v1853 = vpack.c.b16 %v1821, %v1821
          %v1854 = vpack.c.b16 %v1822, %v1822
          %v1855 = vpack.c.b16 %v1823, %v1823
          %v1856 = vpack.c.b16 %v1824, %v1824
          %v1857 = vpack.c.b16 %v1825, %v1825
          %v1858 = vpack.c.b16 %v1826, %v1826
          %v1859 = vpack.c.b16 %v1827, %v1827
          %v1860 = vpack.c.b16 %v1828, %v1828
          %v1861 = vpack.c.b16 %v1829, %v1829
          %v1862 = vpack.c.b16 %v1830, %v1830
          %v1863 = vpack.c.b16 %v1831, %v1831
          %v1864 = vpack.c.b16 %v1832, %v1832
          %1897 = vst [vmem:[#allocation2] sm:$0xf] %v1833
          %1898 = vst [vmem:[#allocation2 + $0x4] sm:$0xf] %v1834
          %1899 = vst [vmem:[#allocation2 + $0x8] sm:$0xf] %v1835
          %1900 = vst [vmem:[#allocation2 + $0xc] sm:$0xf] %v1836
          %1901 = vst [vmem:[#allocation2 + $0x10] sm:$0xf] %v1837
          %1902 = vst [vmem:[#allocation2 + $0x14] sm:$0xf] %v1838
          %1903 = vst [vmem:[#allocation2 + $0x18] sm:$0xf] %v1839
          %1904 = vst [vmem:[#allocation2 + $0x1c] sm:$0xf] %v1840
          %1905 = vst [vmem:[#allocation2 + $0x20] sm:$0xf] %v1841
          %1906 = vst [vmem:[#allocation2 + $0x24] sm:$0xf] %v1842
          %1907 = vst [vmem:[#allocation2 + $0x28] sm:$0xf] %v1843
          %1908 = vst [vmem:[#allocation2 + $0x2c] sm:$0xf] %v1844
          %1909 = vst [vmem:[#allocation2 + $0x30] sm:$0xf] %v1845
          %1910 = vst [vmem:[#allocation2 + $0x34] sm:$0xf] %v1846
          %1911 = vst [vmem:[#allocation2 + $0x38] sm:$0xf] %v1847
          %1912 = vst [vmem:[#allocation2 + $0x3c] sm:$0xf] %v1848
          %1913 = vst [vmem:[#allocation2 + $0x40] sm:$0xf] %v1849
          %1914 = vst [vmem:[#allocation2 + $0x44] sm:$0xf] %v1850
          %1915 = vst [vmem:[#allocation2 + $0x48] sm:$0xf] %v1851
          %1916 = vst [vmem:[#allocation2 + $0x4c] sm:$0xf] %v1852
          %1917 = vst [vmem:[#allocation2 + $0x50] sm:$0xf] %v1853
          %1918 = vst [vmem:[#allocation2 + $0x54] sm:$0xf] %v1854
          %1919 = vst [vmem:[#allocation2 + $0x58] sm:$0xf] %v1855
          %1920 = vst [vmem:[#allocation2 + $0x5c] sm:$0xf] %v1856
          %1921 = vst [vmem:[#allocation2 + $0x60] sm:$0xf] %v1857
          %1922 = vst [vmem:[#allocation2 + $0x64] sm:$0xf] %v1858
          %1923 = vst [vmem:[#allocation2 + $0x68] sm:$0xf] %v1859
          %1924 = vst [vmem:[#allocation2 + $0x6c] sm:$0xf] %v1860
          %1925 = vst [vmem:[#allocation2 + $0x70] sm:$0xf] %v1861
          %1926 = vst [vmem:[#allocation2 + $0x74] sm:$0xf] %v1862
          %1927 = vst [vmem:[#allocation2 + $0x78] sm:$0xf] %v1863
          %1928 = vst [vmem:[#allocation2 + $0x7c] sm:$0xf] %v1864
          %v1929 = vpack.c.bf16 %v1166, %v1163
          %v1930 = vpack.c.bf16 %v1174, %v1171
          %v1931 = vpack.c.bf16 %v1182, %v1179
          %v1932 = vpack.c.bf16 %v1190, %v1187
          %v1933 = vpack.c.bf16 %v1198, %v1195
          %v1934 = vpack.c.bf16 %v1206, %v1203
          %v1935 = vpack.c.bf16 %v1214, %v1211
          %v1936 = vpack.c.bf16 %v1222, %v1219
          %v1937 = vpack.c.bf16 %v1230, %v1227
          %v1938 = vpack.c.bf16 %v1238, %v1235
          %v1939 = vpack.c.bf16 %v1246, %v1243
          %v1940 = vpack.c.bf16 %v1254, %v1251
          %v1941 = vpack.c.bf16 %v1262, %v1259
          %v1942 = vpack.c.bf16 %v1270, %v1267
          %v1943 = vpack.c.bf16 %v1278, %v1275
          %v1944 = vpack.c.bf16 %v1286, %v1283
          %v1961 = vunpack.c.l.b16 %v1929
          %v1962 = vunpack.c.h.b16 %v1929
          %v1963 = vunpack.c.l.b16 %v1930
          %v1964 = vunpack.c.h.b16 %v1930
          %v1965 = vunpack.c.l.b16 %v1931
          %v1966 = vunpack.c.h.b16 %v1931
          %v1967 = vunpack.c.l.b16 %v1932
          %v1968 = vunpack.c.h.b16 %v1932
          %v1969 = vunpack.c.l.b16 %v1933
          %v1970 = vunpack.c.h.b16 %v1933
          %v1971 = vunpack.c.l.b16 %v1934
          %v1972 = vunpack.c.h.b16 %v1934
          %v1973 = vunpack.c.l.b16 %v1935
          %v1974 = vunpack.c.h.b16 %v1935
          %v1975 = vunpack.c.l.b16 %v1936
          %v1976 = vunpack.c.h.b16 %v1936
          %v1977 = vunpack.c.l.b16 %v1937
          %v1978 = vunpack.c.h.b16 %v1937
          %v1979 = vunpack.c.l.b16 %v1938
          %v1980 = vunpack.c.h.b16 %v1938
          %v1981 = vunpack.c.l.b16 %v1939
          %v1982 = vunpack.c.h.b16 %v1939
          %v1983 = vunpack.c.l.b16 %v1940
          %v1984 = vunpack.c.h.b16 %v1940
          %v1985 = vunpack.c.l.b16 %v1941
          %v1986 = vunpack.c.h.b16 %v1941
          %v1987 = vunpack.c.l.b16 %v1942
          %v1988 = vunpack.c.h.b16 %v1942
          %v1989 = vunpack.c.l.b16 %v1943
          %v1990 = vunpack.c.h.b16 %v1943
          %v1991 = vunpack.c.l.b16 %v1944
          %v1992 = vunpack.c.h.b16 %v1944
          %v1993 = vpack.c.b16 %v1961, %v1961
          %v1994 = vpack.c.b16 %v1962, %v1962
          %v1995 = vpack.c.b16 %v1963, %v1963
          %v1996 = vpack.c.b16 %v1964, %v1964
          %v1997 = vpack.c.b16 %v1965, %v1965
          %v1998 = vpack.c.b16 %v1966, %v1966
          %v1999 = vpack.c.b16 %v1967, %v1967
          %v2000 = vpack.c.b16 %v1968, %v1968
          %v2001 = vpack.c.b16 %v1969, %v1969
          %v2002 = vpack.c.b16 %v1970, %v1970
          %v2003 = vpack.c.b16 %v1971, %v1971
          %v2004 = vpack.c.b16 %v1972, %v1972
          %v2005 = vpack.c.b16 %v1973, %v1973
          %v2006 = vpack.c.b16 %v1974, %v1974
          %v2007 = vpack.c.b16 %v1975, %v1975
          %v2008 = vpack.c.b16 %v1976, %v1976
          %v2009 = vpack.c.b16 %v1977, %v1977
          %v2010 = vpack.c.b16 %v1978, %v1978
          %v2011 = vpack.c.b16 %v1979, %v1979
          %v2012 = vpack.c.b16 %v1980, %v1980
          %v2013 = vpack.c.b16 %v1981, %v1981
          %v2014 = vpack.c.b16 %v1982, %v1982
          %v2015 = vpack.c.b16 %v1983, %v1983
          %v2016 = vpack.c.b16 %v1984, %v1984
          %v2017 = vpack.c.b16 %v1985, %v1985
          %v2018 = vpack.c.b16 %v1986, %v1986
          %v2019 = vpack.c.b16 %v1987, %v1987
          %v2020 = vpack.c.b16 %v1988, %v1988
          %v2021 = vpack.c.b16 %v1989, %v1989
          %v2022 = vpack.c.b16 %v1990, %v1990
          %v2023 = vpack.c.b16 %v1991, %v1991
          %v2024 = vpack.c.b16 %v1992, %v1992
          %2057 = vst [vmem:[#allocation3] sm:$0xf] %v1993
          %2058 = vst [vmem:[#allocation3 + $0x4] sm:$0xf] %v1994
          %2059 = vst [vmem:[#allocation3 + $0x8] sm:$0xf] %v1995
          %2060 = vst [vmem:[#allocation3 + $0xc] sm:$0xf] %v1996
          %2061 = vst [vmem:[#allocation3 + $0x10] sm:$0xf] %v1997
          %2062 = vst [vmem:[#allocation3 + $0x14] sm:$0xf] %v1998
          %2063 = vst [vmem:[#allocation3 + $0x18] sm:$0xf] %v1999
          %2064 = vst [vmem:[#allocation3 + $0x1c] sm:$0xf] %v2000
          %2065 = vst [vmem:[#allocation3 + $0x20] sm:$0xf] %v2001
          %2066 = vst [vmem:[#allocation3 + $0x24] sm:$0xf] %v2002
          %2067 = vst [vmem:[#allocation3 + $0x28] sm:$0xf] %v2003
          %2068 = vst [vmem:[#allocation3 + $0x2c] sm:$0xf] %v2004
          %2069 = vst [vmem:[#allocation3 + $0x30] sm:$0xf] %v2005
          %2070 = vst [vmem:[#allocation3 + $0x34] sm:$0xf] %v2006
          %2071 = vst [vmem:[#allocation3 + $0x38] sm:$0xf] %v2007
          %2072 = vst [vmem:[#allocation3 + $0x3c] sm:$0xf] %v2008
          %2073 = vst [vmem:[#allocation3 + $0x40] sm:$0xf] %v2009
          %2074 = vst [vmem:[#allocation3 + $0x44] sm:$0xf] %v2010
          %2075 = vst [vmem:[#allocation3 + $0x48] sm:$0xf] %v2011
          %2076 = vst [vmem:[#allocation3 + $0x4c] sm:$0xf] %v2012
          %2077 = vst [vmem:[#allocation3 + $0x50] sm:$0xf] %v2013
          %2078 = vst [vmem:[#allocation3 + $0x54] sm:$0xf] %v2014
          %2079 = vst [vmem:[#allocation3 + $0x58] sm:$0xf] %v2015
          %2080 = vst [vmem:[#allocation3 + $0x5c] sm:$0xf] %v2016
          %2081 = vst [vmem:[#allocation3 + $0x60] sm:$0xf] %v2017
          %2082 = vst [vmem:[#allocation3 + $0x64] sm:$0xf] %v2018
          %2083 = vst [vmem:[#allocation3 + $0x68] sm:$0xf] %v2019
          %2084 = vst [vmem:[#allocation3 + $0x6c] sm:$0xf] %v2020
          %2085 = vst [vmem:[#allocation3 + $0x70] sm:$0xf] %v2021
          %2086 = vst [vmem:[#allocation3 + $0x74] sm:$0xf] %v2022
          %2087 = vst [vmem:[#allocation3 + $0x78] sm:$0xf] %v2023
          %2088 = vst [vmem:[#allocation3 + $0x7c] sm:$0xf] %v2024
        $region120: #{tpu_custom_call.1} parent=67 // pred_fallthru
          _
        %v2089 = vld [vmem:[%s576] sm:$0xf]
        %v2090 = vld [vmem:[%s576 + $0x4] sm:$0xf]
        %v2091 = vld [vmem:[%s576 + $0x8] sm:$0xf]
        %v2092 = vld [vmem:[%s576 + $0xc] sm:$0xf]
        %v2093 = vld [vmem:[%s576 + $0x10] sm:$0xf]
        %v2094 = vld [vmem:[%s576 + $0x14] sm:$0xf]
        %v2095 = vld [vmem:[%s576 + $0x18] sm:$0xf]
        %v2096 = vld [vmem:[%s576 + $0x1c] sm:$0xf]
        %v2097 = vld [vmem:[%s576 + $0x20] sm:$0xf]
        %v2098 = vld [vmem:[%s576 + $0x24] sm:$0xf]
        %v2099 = vld [vmem:[%s576 + $0x28] sm:$0xf]
        %v2100 = vld [vmem:[%s576 + $0x2c] sm:$0xf]
        %v2101 = vld [vmem:[%s576 + $0x30] sm:$0xf]
        %v2102 = vld [vmem:[%s576 + $0x34] sm:$0xf]
        %v2103 = vld [vmem:[%s576 + $0x38] sm:$0xf]
        %v2104 = vld [vmem:[%s576 + $0x3c] sm:$0xf]
        %v2105 = vld [vmem:[#allocation9] sm:$0xf]
        %v2106 = vld [vmem:[#allocation9 + $0x4] sm:$0xf]
        %v2107 = vld [vmem:[#allocation9 + $0x8] sm:$0xf]
        %v2108 = vld [vmem:[#allocation9 + $0xc] sm:$0xf]
        %v2109 = vld [vmem:[#allocation9 + $0x10] sm:$0xf]
        %v2110 = vld [vmem:[#allocation9 + $0x14] sm:$0xf]
        %v2111 = vld [vmem:[#allocation9 + $0x18] sm:$0xf]
        %v2112 = vld [vmem:[#allocation9 + $0x1c] sm:$0xf]
        %v2113 = vld [vmem:[#allocation9 + $0x20] sm:$0xf]
        %v2114 = vld [vmem:[#allocation9 + $0x24] sm:$0xf]
        %v2115 = vld [vmem:[#allocation9 + $0x28] sm:$0xf]
        %v2116 = vld [vmem:[#allocation9 + $0x2c] sm:$0xf]
        %v2117 = vld [vmem:[#allocation9 + $0x30] sm:$0xf]
        %v2118 = vld [vmem:[#allocation9 + $0x34] sm:$0xf]
        %v2119 = vld [vmem:[#allocation9 + $0x38] sm:$0xf]
        %v2120 = vld [vmem:[#allocation9 + $0x3c] sm:$0xf]
        %v2137 = vunpack.c.l.b16 %v2089
        %v2138 = vunpack.c.l.b16 %v2090
        %v2139 = vunpack.c.l.b16 %v2091
        %v2140 = vunpack.c.l.b16 %v2092
        %v2141 = vunpack.c.l.b16 %v2093
        %v2142 = vunpack.c.l.b16 %v2094
        %v2143 = vunpack.c.l.b16 %v2095
        %v2144 = vunpack.c.l.b16 %v2096
        %v2145 = vunpack.c.l.b16 %v2097
        %v2146 = vunpack.c.l.b16 %v2098
        %v2147 = vunpack.c.l.b16 %v2099
        %v2148 = vunpack.c.l.b16 %v2100
        %v2149 = vunpack.c.l.b16 %v2101
        %v2150 = vunpack.c.l.b16 %v2102
        %v2151 = vunpack.c.l.b16 %v2103
        %v2152 = vunpack.c.l.b16 %v2104
        %v2153 = vpack.c.b16 %v2138, %v2137
        %v2154 = vpack.c.b16 %v2140, %v2139
        %v2155 = vpack.c.b16 %v2142, %v2141
        %v2156 = vpack.c.b16 %v2144, %v2143
        %v2157 = vpack.c.b16 %v2146, %v2145
        %v2158 = vpack.c.b16 %v2148, %v2147
        %v2159 = vpack.c.b16 %v2150, %v2149
        %v2160 = vpack.c.b16 %v2152, %v2151
        %v2185 = vunpack.c.l.b16 %v2105
        %v2186 = vunpack.c.l.b16 %v2106
        %v2187 = vunpack.c.l.b16 %v2107
        %v2188 = vunpack.c.l.b16 %v2108
        %v2189 = vunpack.c.l.b16 %v2109
        %v2190 = vunpack.c.l.b16 %v2110
        %v2191 = vunpack.c.l.b16 %v2111
        %v2192 = vunpack.c.l.b16 %v2112
        %v2193 = vunpack.c.l.b16 %v2113
        %v2194 = vunpack.c.l.b16 %v2114
        %v2195 = vunpack.c.l.b16 %v2115
        %v2196 = vunpack.c.l.b16 %v2116
        %v2197 = vunpack.c.l.b16 %v2117
        %v2198 = vunpack.c.l.b16 %v2118
        %v2199 = vunpack.c.l.b16 %v2119
        %v2200 = vunpack.c.l.b16 %v2120
        %v2201 = vpack.c.b16 %v2186, %v2185
        %v2202 = vpack.c.b16 %v2188, %v2187
        %v2203 = vpack.c.b16 %v2190, %v2189
        %v2204 = vpack.c.b16 %v2192, %v2191
        %v2205 = vpack.c.b16 %v2194, %v2193
        %v2206 = vpack.c.b16 %v2196, %v2195
        %v2207 = vpack.c.b16 %v2198, %v2197
        %v2208 = vpack.c.b16 %v2200, %v2199
        %2217 = vmatprep.subr.bf16.mxu0 0
        %2218 = vmatpush1.bf16.msra.mxu0 %v2208
        %2219 = vmatprep.subr.bf16.mxu0 0
        %2220 = vmatpush1.bf16.msra.mxu0 %v2207
        %2221 = vmatprep.subr.bf16.mxu0 0
        %2222 = vmatpush1.bf16.msra.mxu0 %v2206
        %2223 = vmatprep.subr.bf16.mxu0 0
        %2224 = vmatpush1.bf16.msra.mxu0 %v2205
        %2225 = vmatprep.subr.bf16.mxu0 0
        %2226 = vmatpush1.bf16.msra.mxu0 %v2204
        %2227 = vmatprep.subr.bf16.mxu0 0
        %2228 = vmatpush1.bf16.msra.mxu0 %v2203
        %2229 = vmatprep.subr.bf16.mxu0 0
        %2230 = vmatpush1.bf16.msra.mxu0 %v2202
        %2231 = vmatprep.subr.bf16.mxu0 0
        %2232 = vmatpush1.bf16.msra.mxu0 %v2201
        %2233 = vmatprep.subr.bf16.mxu0 0
        %2234 = vmatpush2.bf16.msra.mxu0 0
        %2235 = vmatprep.subr.bf16.mxu0 0
        %2236 = vmatpush2.bf16.msra.mxu0 0
        %2237 = vmatprep.subr.bf16.mxu0 0
        %2238 = vmatpush2.bf16.msra.mxu0 0
        %2239 = vmatprep.subr.bf16.mxu0 0
        %2240 = vmatpush2.bf16.msra.mxu0 0
        %2241 = vmatprep.subr.bf16.mxu0 0
        %2242 = vmatpush2.bf16.msra.mxu0 0
        %2243 = vmatprep.subr.bf16.mxu0 0
        %2244 = vmatpush2.bf16.msra.mxu0 0
        %2245 = vmatprep.subr.bf16.mxu0 0
        %2246 = vmatpush2.bf16.msra.mxu0 0
        %2247 = vmatprep.subr.bf16.mxu0 0
        %2248 = vmatpush2.bf16.msra.mxu0 0
        %2249 = vmatprep.mubr.bf16.mxu0 0
        %2250 = vmatmul.mubr.bf16.gmra.mxu0 %v2153
        %v2251 = vpop.f32.mrf.mxu0
        %v2252 = vadd.f32 0.0, %v2251
        %v2253 = vpop.f32.mrf.mxu0
        %v2254 = vpop.f32.mrf.mxu0
        %v2255 = vadd.f32 0.0, %v2254
        %v2256 = vpop.f32.mrf.mxu0
        %2257 = vmatprep.mubr.bf16.mxu0 0
        %2258 = vmatmul.mubr.bf16.gmra.mxu0 %v2154
        %v2259 = vpop.f32.mrf.mxu0
        %v2260 = vadd.f32 0.0, %v2259
        %v2261 = vpop.f32.mrf.mxu0
        %v2262 = vpop.f32.mrf.mxu0
        %v2263 = vadd.f32 0.0, %v2262
        %v2264 = vpop.f32.mrf.mxu0
        %2265 = vmatprep.mubr.bf16.mxu0 0
        %2266 = vmatmul.mubr.bf16.gmra.mxu0 %v2155
        %v2267 = vpop.f32.mrf.mxu0
        %v2268 = vadd.f32 0.0, %v2267
        %v2269 = vpop.f32.mrf.mxu0
        %v2270 = vpop.f32.mrf.mxu0
        %v2271 = vadd.f32 0.0, %v2270
        %v2272 = vpop.f32.mrf.mxu0
        %2273 = vmatprep.mubr.bf16.mxu0 0
        %2274 = vmatmul.mubr.bf16.gmra.mxu0 %v2156
        %v2275 = vpop.f32.mrf.mxu0
        %v2276 = vadd.f32 0.0, %v2275
        %v2277 = vpop.f32.mrf.mxu0
        %v2278 = vpop.f32.mrf.mxu0
        %v2279 = vadd.f32 0.0, %v2278
        %v2280 = vpop.f32.mrf.mxu0
        %2281 = vmatprep.mubr.bf16.mxu0 0
        %2282 = vmatmul.mubr.bf16.gmra.mxu0 %v2157
        %v2283 = vpop.f32.mrf.mxu0
        %v2284 = vadd.f32 0.0, %v2283
        %v2285 = vpop.f32.mrf.mxu0
        %v2286 = vpop.f32.mrf.mxu0
        %v2287 = vadd.f32 0.0, %v2286
        %v2288 = vpop.f32.mrf.mxu0
        %2289 = vmatprep.mubr.bf16.mxu0 0
        %2290 = vmatmul.mubr.bf16.gmra.mxu0 %v2158
        %v2291 = vpop.f32.mrf.mxu0
        %v2292 = vadd.f32 0.0, %v2291
        %v2293 = vpop.f32.mrf.mxu0
        %v2294 = vpop.f32.mrf.mxu0
        %v2295 = vadd.f32 0.0, %v2294
        %v2296 = vpop.f32.mrf.mxu0
        %2297 = vmatprep.mubr.bf16.mxu0 0
        %2298 = vmatmul.mubr.bf16.gmra.mxu0 %v2159
        %v2299 = vpop.f32.mrf.mxu0
        %v2300 = vadd.f32 0.0, %v2299
        %v2301 = vpop.f32.mrf.mxu0
        %v2302 = vpop.f32.mrf.mxu0
        %v2303 = vadd.f32 0.0, %v2302
        %v2304 = vpop.f32.mrf.mxu0
        %2305 = vmatprep.mubr.bf16.mxu0 0
        %2306 = vmatmul.mubr.bf16.gmra.mxu0 %v2160
        %v2307 = vpop.f32.mrf.mxu0
        %v2308 = vadd.f32 0.0, %v2307
        %v2309 = vpop.f32.mrf.mxu0
        %v2310 = vpop.f32.mrf.mxu0
        %v2311 = vadd.f32 0.0, %v2310
        %v2312 = vpop.f32.mrf.mxu0
        %2313 = vdwg.mxu0
        %2314 = vrot.lane.b32.xlu0 %v2252, 120
        %v2315 = vpop.permute.xlu0 %2314
        %2316 = vrot.lane.b32.xlu0 %v2255, 120
        %v2317 = vpop.permute.xlu0 %2316
        %2318 = vrot.lane.b32.xlu0 %v2260, 120
        %v2319 = vpop.permute.xlu0 %2318
        %2320 = vrot.lane.b32.xlu0 %v2263, 120
        %v2321 = vpop.permute.xlu0 %2320
        %2322 = vrot.lane.b32.xlu0 %v2268, 120
        %v2323 = vpop.permute.xlu0 %2322
        %2324 = vrot.lane.b32.xlu0 %v2271, 120
        %v2325 = vpop.permute.xlu0 %2324
        %2326 = vrot.lane.b32.xlu0 %v2276, 120
        %v2327 = vpop.permute.xlu0 %2326
        %2328 = vrot.lane.b32.xlu0 %v2279, 120
        %v2329 = vpop.permute.xlu0 %2328
        %2330 = vrot.lane.b32.xlu0 %v2284, 120
        %v2331 = vpop.permute.xlu0 %2330
        %2332 = vrot.lane.b32.xlu0 %v2287, 120
        %v2333 = vpop.permute.xlu0 %2332
        %2334 = vrot.lane.b32.xlu0 %v2292, 120
        %v2335 = vpop.permute.xlu0 %2334
        %2336 = vrot.lane.b32.xlu0 %v2295, 120
        %v2337 = vpop.permute.xlu0 %2336
        %2338 = vrot.lane.b32.xlu0 %v2300, 120
        %v2339 = vpop.permute.xlu0 %2338
        %2340 = vrot.lane.b32.xlu0 %v2303, 120
        %v2341 = vpop.permute.xlu0 %2340
        %2342 = vrot.lane.b32.xlu0 %v2308, 120
        %v2343 = vpop.permute.xlu0 %2342
        %2344 = vrot.lane.b32.xlu0 %v2311, 120
        %v2345 = vpop.permute.xlu0 %2344
        %2346 = vrot.lane.b32.xlu0 %v2252, 8
        %v2347 = vpop.permute.xlu0 %2346
        %2348 = vrot.lane.b32.xlu0 %v2255, 8
        %v2349 = vpop.permute.xlu0 %2348
        %2350 = vrot.lane.b32.xlu0 %v2260, 8
        %v2351 = vpop.permute.xlu0 %2350
        %2352 = vrot.lane.b32.xlu0 %v2263, 8
        %v2353 = vpop.permute.xlu0 %2352
        %2354 = vrot.lane.b32.xlu0 %v2268, 8
        %v2355 = vpop.permute.xlu0 %2354
        %2356 = vrot.lane.b32.xlu0 %v2271, 8
        %v2357 = vpop.permute.xlu0 %2356
        %2358 = vrot.lane.b32.xlu0 %v2276, 8
        %v2359 = vpop.permute.xlu0 %2358
        %2360 = vrot.lane.b32.xlu0 %v2279, 8
        %v2361 = vpop.permute.xlu0 %2360
        %2362 = vrot.lane.b32.xlu0 %v2284, 8
        %v2363 = vpop.permute.xlu0 %2362
        %2364 = vrot.lane.b32.xlu0 %v2287, 8
        %v2365 = vpop.permute.xlu0 %2364
        %2366 = vrot.lane.b32.xlu0 %v2292, 8
        %v2367 = vpop.permute.xlu0 %2366
        %2368 = vrot.lane.b32.xlu0 %v2295, 8
        %v2369 = vpop.permute.xlu0 %2368
        %2370 = vrot.lane.b32.xlu0 %v2300, 8
        %v2371 = vpop.permute.xlu0 %2370
        %2372 = vrot.lane.b32.xlu0 %v2303, 8
        %v2373 = vpop.permute.xlu0 %2372
        %2374 = vrot.lane.b32.xlu0 %v2308, 8
        %v2375 = vpop.permute.xlu0 %2374
        %2376 = vrot.lane.b32.xlu0 %v2311, 8
        %v2377 = vpop.permute.xlu0 %2376
        %v2378 = vld [vmem:[%s610] sm:$0xf]
        %v2379 = vld [vmem:[%s610 + $0x4] sm:$0xf]
        %v2380 = vld [vmem:[%s610 + $0x8] sm:$0xf]
        %v2381 = vld [vmem:[%s610 + $0xc] sm:$0xf]
        %v2382 = vld [vmem:[%s610 + $0x10] sm:$0xf]
        %v2383 = vld [vmem:[%s610 + $0x14] sm:$0xf]
        %v2384 = vld [vmem:[%s610 + $0x18] sm:$0xf]
        %v2385 = vld [vmem:[%s610 + $0x1c] sm:$0xf]
        %v2386 = vld [vmem:[%s610 + $0x20] sm:$0xf]
        %v2387 = vld [vmem:[%s610 + $0x24] sm:$0xf]
        %v2388 = vld [vmem:[%s610 + $0x28] sm:$0xf]
        %v2389 = vld [vmem:[%s610 + $0x2c] sm:$0xf]
        %v2390 = vld [vmem:[%s610 + $0x30] sm:$0xf]
        %v2391 = vld [vmem:[%s610 + $0x34] sm:$0xf]
        %v2392 = vld [vmem:[%s610 + $0x38] sm:$0xf]
        %v2393 = vld [vmem:[%s610 + $0x3c] sm:$0xf]
        %v2394 = vunpack.c.l.bf16 %v2378
        %v2395 = vunpack.c.l.bf16 %v2379
        %v2396 = vunpack.c.l.bf16 %v2380
        %v2397 = vunpack.c.l.bf16 %v2381
        %v2398 = vunpack.c.l.bf16 %v2382
        %v2399 = vunpack.c.l.bf16 %v2383
        %v2400 = vunpack.c.l.bf16 %v2384
        %v2401 = vunpack.c.l.bf16 %v2385
        %v2402 = vunpack.c.l.bf16 %v2386
        %v2403 = vunpack.c.l.bf16 %v2387
        %v2404 = vunpack.c.l.bf16 %v2388
        %v2405 = vunpack.c.l.bf16 %v2389
        %v2406 = vunpack.c.l.bf16 %v2390
        %v2407 = vunpack.c.l.bf16 %v2391
        %v2408 = vunpack.c.l.bf16 %v2392
        %v2409 = vunpack.c.l.bf16 %v2393
        %v2410 = vmul.f32 %v2252, %v2394
        %v2411 = vmul.f32 %v2255, %v2395
        %v2412 = vmul.f32 %v2260, %v2396
        %v2413 = vmul.f32 %v2263, %v2397
        %v2414 = vmul.f32 %v2268, %v2398
        %v2415 = vmul.f32 %v2271, %v2399
        %v2416 = vmul.f32 %v2276, %v2400
        %v2417 = vmul.f32 %v2279, %v2401
        %v2418 = vmul.f32 %v2284, %v2402
        %v2419 = vmul.f32 %v2287, %v2403
        %v2420 = vmul.f32 %v2292, %v2404
        %v2421 = vmul.f32 %v2295, %v2405
        %v2422 = vmul.f32 %v2300, %v2406
        %v2423 = vmul.f32 %v2303, %v2407
        %v2424 = vmul.f32 %v2308, %v2408
        %v2425 = vmul.f32 %v2311, %v2409
        %v2426 = vld [vmem:[%s619] sm:$0xf]
        %v2427 = vld [vmem:[%s619 + $0x4] sm:$0xf]
        %v2428 = vld [vmem:[%s619 + $0x8] sm:$0xf]
        %v2429 = vld [vmem:[%s619 + $0xc] sm:$0xf]
        %v2430 = vld [vmem:[%s619 + $0x10] sm:$0xf]
        %v2431 = vld [vmem:[%s619 + $0x14] sm:$0xf]
        %v2432 = vld [vmem:[%s619 + $0x18] sm:$0xf]
        %v2433 = vld [vmem:[%s619 + $0x1c] sm:$0xf]
        %v2434 = vld [vmem:[%s619 + $0x20] sm:$0xf]
        %v2435 = vld [vmem:[%s619 + $0x24] sm:$0xf]
        %v2436 = vld [vmem:[%s619 + $0x28] sm:$0xf]
        %v2437 = vld [vmem:[%s619 + $0x2c] sm:$0xf]
        %v2438 = vld [vmem:[%s619 + $0x30] sm:$0xf]
        %v2439 = vld [vmem:[%s619 + $0x34] sm:$0xf]
        %v2440 = vld [vmem:[%s619 + $0x38] sm:$0xf]
        %v2441 = vld [vmem:[%s619 + $0x3c] sm:$0xf]
        %v2442 = vunpack.c.l.bf16 %v2426
        %v2443 = vunpack.c.l.bf16 %v2427
        %v2444 = vunpack.c.l.bf16 %v2428
        %v2445 = vunpack.c.l.bf16 %v2429
        %v2446 = vunpack.c.l.bf16 %v2430
        %v2447 = vunpack.c.l.bf16 %v2431
        %v2448 = vunpack.c.l.bf16 %v2432
        %v2449 = vunpack.c.l.bf16 %v2433
        %v2450 = vunpack.c.l.bf16 %v2434
        %v2451 = vunpack.c.l.bf16 %v2435
        %v2452 = vunpack.c.l.bf16 %v2436
        %v2453 = vunpack.c.l.bf16 %v2437
        %v2454 = vunpack.c.l.bf16 %v2438
        %v2455 = vunpack.c.l.bf16 %v2439
        %v2456 = vunpack.c.l.bf16 %v2440
        %v2457 = vunpack.c.l.bf16 %v2441
        %v2458 = vmul.f32 %v2315, %v2442
        %v2459 = vmul.f32 %v2317, %v2443
        %v2460 = vmul.f32 %v2319, %v2444
        %v2461 = vmul.f32 %v2321, %v2445
        %v2462 = vmul.f32 %v2323, %v2446
        %v2463 = vmul.f32 %v2325, %v2447
        %v2464 = vmul.f32 %v2327, %v2448
        %v2465 = vmul.f32 %v2329, %v2449
        %v2466 = vmul.f32 %v2331, %v2450
        %v2467 = vmul.f32 %v2333, %v2451
        %v2468 = vmul.f32 %v2335, %v2452
        %v2469 = vmul.f32 %v2337, %v2453
        %v2470 = vmul.f32 %v2339, %v2454
        %v2471 = vmul.f32 %v2341, %v2455
        %v2472 = vmul.f32 %v2343, %v2456
        %v2473 = vmul.f32 %v2345, %v2457
        %v2474 = vadd.f32 %v2410, %v2458
        %v2475 = vadd.f32 %v2411, %v2459
        %v2476 = vadd.f32 %v2412, %v2460
        %v2477 = vadd.f32 %v2413, %v2461
        %v2478 = vadd.f32 %v2414, %v2462
        %v2479 = vadd.f32 %v2415, %v2463
        %v2480 = vadd.f32 %v2416, %v2464
        %v2481 = vadd.f32 %v2417, %v2465
        %v2482 = vadd.f32 %v2418, %v2466
        %v2483 = vadd.f32 %v2419, %v2467
        %v2484 = vadd.f32 %v2420, %v2468
        %v2485 = vadd.f32 %v2421, %v2469
        %v2486 = vadd.f32 %v2422, %v2470
        %v2487 = vadd.f32 %v2423, %v2471
        %v2488 = vadd.f32 %v2424, %v2472
        %v2489 = vadd.f32 %v2425, %v2473
        %v2490 = vld [vmem:[%s628] sm:$0xf]
        %v2491 = vld [vmem:[%s628 + $0x4] sm:$0xf]
        %v2492 = vld [vmem:[%s628 + $0x8] sm:$0xf]
        %v2493 = vld [vmem:[%s628 + $0xc] sm:$0xf]
        %v2494 = vld [vmem:[%s628 + $0x10] sm:$0xf]
        %v2495 = vld [vmem:[%s628 + $0x14] sm:$0xf]
        %v2496 = vld [vmem:[%s628 + $0x18] sm:$0xf]
        %v2497 = vld [vmem:[%s628 + $0x1c] sm:$0xf]
        %v2498 = vld [vmem:[%s628 + $0x20] sm:$0xf]
        %v2499 = vld [vmem:[%s628 + $0x24] sm:$0xf]
        %v2500 = vld [vmem:[%s628 + $0x28] sm:$0xf]
        %v2501 = vld [vmem:[%s628 + $0x2c] sm:$0xf]
        %v2502 = vld [vmem:[%s628 + $0x30] sm:$0xf]
        %v2503 = vld [vmem:[%s628 + $0x34] sm:$0xf]
        %v2504 = vld [vmem:[%s628 + $0x38] sm:$0xf]
        %v2505 = vld [vmem:[%s628 + $0x3c] sm:$0xf]
        %v2506 = vunpack.c.l.bf16 %v2490
        %v2507 = vunpack.c.l.bf16 %v2491
        %v2508 = vunpack.c.l.bf16 %v2492
        %v2509 = vunpack.c.l.bf16 %v2493
        %v2510 = vunpack.c.l.bf16 %v2494
        %v2511 = vunpack.c.l.bf16 %v2495
        %v2512 = vunpack.c.l.bf16 %v2496
        %v2513 = vunpack.c.l.bf16 %v2497
        %v2514 = vunpack.c.l.bf16 %v2498
        %v2515 = vunpack.c.l.bf16 %v2499
        %v2516 = vunpack.c.l.bf16 %v2500
        %v2517 = vunpack.c.l.bf16 %v2501
        %v2518 = vunpack.c.l.bf16 %v2502
        %v2519 = vunpack.c.l.bf16 %v2503
        %v2520 = vunpack.c.l.bf16 %v2504
        %v2521 = vunpack.c.l.bf16 %v2505
        %v2522 = vmul.f32 %v2347, %v2506
        %v2523 = vmul.f32 %v2349, %v2507
        %v2524 = vmul.f32 %v2351, %v2508
        %v2525 = vmul.f32 %v2353, %v2509
        %v2526 = vmul.f32 %v2355, %v2510
        %v2527 = vmul.f32 %v2357, %v2511
        %v2528 = vmul.f32 %v2359, %v2512
        %v2529 = vmul.f32 %v2361, %v2513
        %v2530 = vmul.f32 %v2363, %v2514
        %v2531 = vmul.f32 %v2365, %v2515
        %v2532 = vmul.f32 %v2367, %v2516
        %v2533 = vmul.f32 %v2369, %v2517
        %v2534 = vmul.f32 %v2371, %v2518
        %v2535 = vmul.f32 %v2373, %v2519
        %v2536 = vmul.f32 %v2375, %v2520
        %v2537 = vmul.f32 %v2377, %v2521
        %v2538 = vadd.f32 %v2474, %v2522
        %v2539 = vadd.f32 %v2475, %v2523
        %v2540 = vadd.f32 %v2476, %v2524
        %v2541 = vadd.f32 %v2477, %v2525
        %v2542 = vadd.f32 %v2478, %v2526
        %v2543 = vadd.f32 %v2479, %v2527
        %v2544 = vadd.f32 %v2480, %v2528
        %v2545 = vadd.f32 %v2481, %v2529
        %v2546 = vadd.f32 %v2482, %v2530
        %v2547 = vadd.f32 %v2483, %v2531
        %v2548 = vadd.f32 %v2484, %v2532
        %v2549 = vadd.f32 %v2485, %v2533
        %v2550 = vadd.f32 %v2486, %v2534
        %v2551 = vadd.f32 %v2487, %v2535
        %v2552 = vadd.f32 %v2488, %v2536
        %v2553 = vadd.f32 %v2489, %v2537
        %v2554 = vpack.c.bf16 %v2539, %v2538
        %v2555 = vpack.c.bf16 %v2541, %v2540
        %v2556 = vpack.c.bf16 %v2543, %v2542
        %v2557 = vpack.c.bf16 %v2545, %v2544
        %v2558 = vpack.c.bf16 %v2547, %v2546
        %v2559 = vpack.c.bf16 %v2549, %v2548
        %v2560 = vpack.c.bf16 %v2551, %v2550
        %v2561 = vpack.c.bf16 %v2553, %v2552
        %v2562 = vld [vmem:[#allocation2] sm:$0xf]
        %v2563 = vld [vmem:[#allocation2 + $0x4] sm:$0xf]
        %v2564 = vld [vmem:[#allocation2 + $0x8] sm:$0xf]
        %v2565 = vld [vmem:[#allocation2 + $0xc] sm:$0xf]
        %v2566 = vld [vmem:[#allocation2 + $0x10] sm:$0xf]
        %v2567 = vld [vmem:[#allocation2 + $0x14] sm:$0xf]
        %v2568 = vld [vmem:[#allocation2 + $0x18] sm:$0xf]
        %v2569 = vld [vmem:[#allocation2 + $0x1c] sm:$0xf]
        %v2570 = vld [vmem:[#allocation2 + $0x20] sm:$0xf]
        %v2571 = vld [vmem:[#allocation2 + $0x24] sm:$0xf]
        %v2572 = vld [vmem:[#allocation2 + $0x28] sm:$0xf]
        %v2573 = vld [vmem:[#allocation2 + $0x2c] sm:$0xf]
        %v2574 = vld [vmem:[#allocation2 + $0x30] sm:$0xf]
        %v2575 = vld [vmem:[#allocation2 + $0x34] sm:$0xf]
        %v2576 = vld [vmem:[#allocation2 + $0x38] sm:$0xf]
        %v2577 = vld [vmem:[#allocation2 + $0x3c] sm:$0xf]
        %v2578 = vld [vmem:[#allocation2 + $0x40] sm:$0xf]
        %v2579 = vld [vmem:[#allocation2 + $0x44] sm:$0xf]
        %v2580 = vld [vmem:[#allocation2 + $0x48] sm:$0xf]
        %v2581 = vld [vmem:[#allocation2 + $0x4c] sm:$0xf]
        %v2582 = vld [vmem:[#allocation2 + $0x50] sm:$0xf]
        %v2583 = vld [vmem:[#allocation2 + $0x54] sm:$0xf]
        %v2584 = vld [vmem:[#allocation2 + $0x58] sm:$0xf]
        %v2585 = vld [vmem:[#allocation2 + $0x5c] sm:$0xf]
        %v2586 = vld [vmem:[#allocation2 + $0x60] sm:$0xf]
        %v2587 = vld [vmem:[#allocation2 + $0x64] sm:$0xf]
        %v2588 = vld [vmem:[#allocation2 + $0x68] sm:$0xf]
        %v2589 = vld [vmem:[#allocation2 + $0x6c] sm:$0xf]
        %v2590 = vld [vmem:[#allocation2 + $0x70] sm:$0xf]
        %v2591 = vld [vmem:[#allocation2 + $0x74] sm:$0xf]
        %v2592 = vld [vmem:[#allocation2 + $0x78] sm:$0xf]
        %v2593 = vld [vmem:[#allocation2 + $0x7c] sm:$0xf]
        %v2594 = vld [vmem:[#allocation3] sm:$0xf]
        %v2595 = vld [vmem:[#allocation3 + $0x4] sm:$0xf]
        %v2596 = vld [vmem:[#allocation3 + $0x8] sm:$0xf]
        %v2597 = vld [vmem:[#allocation3 + $0xc] sm:$0xf]
        %v2598 = vld [vmem:[#allocation3 + $0x10] sm:$0xf]
        %v2599 = vld [vmem:[#allocation3 + $0x14] sm:$0xf]
        %v2600 = vld [vmem:[#allocation3 + $0x18] sm:$0xf]
        %v2601 = vld [vmem:[#allocation3 + $0x1c] sm:$0xf]
        %v2602 = vld [vmem:[#allocation3 + $0x20] sm:$0xf]
        %v2603 = vld [vmem:[#allocation3 + $0x24] sm:$0xf]
        %v2604 = vld [vmem:[#allocation3 + $0x28] sm:$0xf]
        %v2605 = vld [vmem:[#allocation3 + $0x2c] sm:$0xf]
        %v2606 = vld [vmem:[#allocation3 + $0x30] sm:$0xf]
        %v2607 = vld [vmem:[#allocation3 + $0x34] sm:$0xf]
        %v2608 = vld [vmem:[#allocation3 + $0x38] sm:$0xf]
        %v2609 = vld [vmem:[#allocation3 + $0x3c] sm:$0xf]
        %v2610 = vld [vmem:[#allocation3 + $0x40] sm:$0xf]
        %v2611 = vld [vmem:[#allocation3 + $0x44] sm:$0xf]
        %v2612 = vld [vmem:[#allocation3 + $0x48] sm:$0xf]
        %v2613 = vld [vmem:[#allocation3 + $0x4c] sm:$0xf]
        %v2614 = vld [vmem:[#allocation3 + $0x50] sm:$0xf]
        %v2615 = vld [vmem:[#allocation3 + $0x54] sm:$0xf]
        %v2616 = vld [vmem:[#allocation3 + $0x58] sm:$0xf]
        %v2617 = vld [vmem:[#allocation3 + $0x5c] sm:$0xf]
        %v2618 = vld [vmem:[#allocation3 + $0x60] sm:$0xf]
        %v2619 = vld [vmem:[#allocation3 + $0x64] sm:$0xf]
        %v2620 = vld [vmem:[#allocation3 + $0x68] sm:$0xf]
        %v2621 = vld [vmem:[#allocation3 + $0x6c] sm:$0xf]
        %v2622 = vld [vmem:[#allocation3 + $0x70] sm:$0xf]
        %v2623 = vld [vmem:[#allocation3 + $0x74] sm:$0xf]
        %v2624 = vld [vmem:[#allocation3 + $0x78] sm:$0xf]
        %v2625 = vld [vmem:[#allocation3 + $0x7c] sm:$0xf]
        %v2658 = vunpack.c.l.b16 %v2562
        %v2659 = vunpack.c.l.b16 %v2563
        %v2660 = vunpack.c.l.b16 %v2564
        %v2661 = vunpack.c.l.b16 %v2565
        %v2662 = vunpack.c.l.b16 %v2566
        %v2663 = vunpack.c.l.b16 %v2567
        %v2664 = vunpack.c.l.b16 %v2568
        %v2665 = vunpack.c.l.b16 %v2569
        %v2666 = vunpack.c.l.b16 %v2570
        %v2667 = vunpack.c.l.b16 %v2571
        %v2668 = vunpack.c.l.b16 %v2572
        %v2669 = vunpack.c.l.b16 %v2573
        %v2670 = vunpack.c.l.b16 %v2574
        %v2671 = vunpack.c.l.b16 %v2575
        %v2672 = vunpack.c.l.b16 %v2576
        %v2673 = vunpack.c.l.b16 %v2577
        %v2674 = vunpack.c.l.b16 %v2578
        %v2675 = vunpack.c.l.b16 %v2579
        %v2676 = vunpack.c.l.b16 %v2580
        %v2677 = vunpack.c.l.b16 %v2581
        %v2678 = vunpack.c.l.b16 %v2582
        %v2679 = vunpack.c.l.b16 %v2583
        %v2680 = vunpack.c.l.b16 %v2584
        %v2681 = vunpack.c.l.b16 %v2585
        %v2682 = vunpack.c.l.b16 %v2586
        %v2683 = vunpack.c.l.b16 %v2587
        %v2684 = vunpack.c.l.b16 %v2588
        %v2685 = vunpack.c.l.b16 %v2589
        %v2686 = vunpack.c.l.b16 %v2590
        %v2687 = vunpack.c.l.b16 %v2591
        %v2688 = vunpack.c.l.b16 %v2592
        %v2689 = vunpack.c.l.b16 %v2593
        %v2690 = vpack.c.b16 %v2659, %v2658
        %v2691 = vpack.c.b16 %v2661, %v2660
        %v2692 = vpack.c.b16 %v2663, %v2662
        %v2693 = vpack.c.b16 %v2665, %v2664
        %v2694 = vpack.c.b16 %v2667, %v2666
        %v2695 = vpack.c.b16 %v2669, %v2668
        %v2696 = vpack.c.b16 %v2671, %v2670
        %v2697 = vpack.c.b16 %v2673, %v2672
        %v2698 = vpack.c.b16 %v2675, %v2674
        %v2699 = vpack.c.b16 %v2677, %v2676
        %v2700 = vpack.c.b16 %v2679, %v2678
        %v2701 = vpack.c.b16 %v2681, %v2680
        %v2702 = vpack.c.b16 %v2683, %v2682
        %v2703 = vpack.c.b16 %v2685, %v2684
        %v2704 = vpack.c.b16 %v2687, %v2686
        %v2705 = vpack.c.b16 %v2689, %v2688
        %vm2706 = vcmask 261120
        %v2708 = vsel %vm2706, %v2554, 0
        %v2711 = vsel %vm2706, %v2555, 0
        %v2714 = vsel %vm2706, %v2556, 0
        %v2717 = vsel %vm2706, %v2557, 0
        %v2720 = vsel %vm2706, %v2558, 0
        %v2723 = vsel %vm2706, %v2559, 0
        %v2726 = vsel %vm2706, %v2560, 0
        %v2729 = vsel %vm2706, %v2561, 0
        %v2732 = vsel %vm2706, %v2690, 0
        %v2735 = vsel %vm2706, %v2691, 0
        %v2738 = vsel %vm2706, %v2692, 0
        %v2741 = vsel %vm2706, %v2693, 0
        %v2744 = vsel %vm2706, %v2694, 0
        %v2747 = vsel %vm2706, %v2695, 0
        %v2750 = vsel %vm2706, %v2696, 0
        %v2753 = vsel %vm2706, %v2697, 0
        %v2756 = vsel %vm2706, %v2698, 0
        %v2759 = vsel %vm2706, %v2699, 0
        %v2762 = vsel %vm2706, %v2700, 0
        %v2765 = vsel %vm2706, %v2701, 0
        %v2768 = vsel %vm2706, %v2702, 0
        %v2771 = vsel %vm2706, %v2703, 0
        %v2774 = vsel %vm2706, %v2704, 0
        %v2777 = vsel %vm2706, %v2705, 0
        %2779 = vmatprep.subr.bf16.mxu0 0
        %2780 = vmatpush1.bf16.xpose.msra.mxu0 %v2753
        %2781 = vmatprep.subr.bf16.mxu0 0
        %2782 = vmatpush1.bf16.xpose.msra.mxu0 %v2750
        %2783 = vmatprep.subr.bf16.mxu0 0
        %2784 = vmatpush1.bf16.xpose.msra.mxu0 %v2747
        %2785 = vmatprep.subr.bf16.mxu0 0
        %2786 = vmatpush1.bf16.xpose.msra.mxu0 %v2744
        %2787 = vmatprep.subr.bf16.mxu0 0
        %2788 = vmatpush1.bf16.xpose.msra.mxu0 %v2741
        %2789 = vmatprep.subr.bf16.mxu0 0
        %2790 = vmatpush1.bf16.xpose.msra.mxu0 %v2738
        %2791 = vmatprep.subr.bf16.mxu0 0
        %2792 = vmatpush1.bf16.xpose.msra.mxu0 %v2735
        %2793 = vmatprep.subr.bf16.mxu0 0
        %2794 = vmatpush1.bf16.xpose.msra.mxu0 %v2732
        %2795 = vmatprep.subr.bf16.mxu0 0
        %2796 = vmatpush2.bf16.xpose.msra.mxu0 %v2777
        %2797 = vmatprep.subr.bf16.mxu0 0
        %2798 = vmatpush2.bf16.xpose.msra.mxu0 %v2774
        %2799 = vmatprep.subr.bf16.mxu0 0
        %2800 = vmatpush2.bf16.xpose.msra.mxu0 %v2771
        %2801 = vmatprep.subr.bf16.mxu0 0
        %2802 = vmatpush2.bf16.xpose.msra.mxu0 %v2768
        %2803 = vmatprep.subr.bf16.mxu0 0
        %2804 = vmatpush2.bf16.xpose.msra.mxu0 %v2765
        %2805 = vmatprep.subr.bf16.mxu0 0
        %2806 = vmatpush2.bf16.xpose.msra.mxu0 %v2762
        %2807 = vmatprep.subr.bf16.mxu0 0
        %2808 = vmatpush2.bf16.xpose.msra.mxu0 %v2759
        %2809 = vmatprep.subr.bf16.mxu0 0
        %2810 = vmatpush2.bf16.xpose.msra.mxu0 %v2756
        %2811 = vmatprep.mubr.bf16.mxu0 0
        %2812 = vmatmul.mubr.bf16.gmra.mxu0 %v2708
        %v2813 = vpop.f32.mrf.mxu0
        %v2814 = vadd.f32 0.0, %v2813
        %v2815 = vpop.f32.mrf.mxu0
        %v2816 = vadd.f32 0.0, %v2815
        %v2817 = vpop.f32.mrf.mxu0
        %v2818 = vadd.f32 0.0, %v2817
        %v2819 = vpop.f32.mrf.mxu0
        %v2820 = vadd.f32 0.0, %v2819
        %2821 = vmatprep.mubr.bf16.mxu0 0
        %2822 = vmatmul.mubr.bf16.gmra.mxu0 %v2711
        %v2823 = vpop.f32.mrf.mxu0
        %v2824 = vadd.f32 0.0, %v2823
        %v2825 = vpop.f32.mrf.mxu0
        %v2826 = vadd.f32 0.0, %v2825
        %v2827 = vpop.f32.mrf.mxu0
        %v2828 = vadd.f32 0.0, %v2827
        %v2829 = vpop.f32.mrf.mxu0
        %v2830 = vadd.f32 0.0, %v2829
        %2831 = vmatprep.mubr.bf16.mxu0 0
        %2832 = vmatmul.mubr.bf16.gmra.mxu0 %v2714
        %v2833 = vpop.f32.mrf.mxu0
        %v2834 = vadd.f32 0.0, %v2833
        %v2835 = vpop.f32.mrf.mxu0
        %v2836 = vadd.f32 0.0, %v2835
        %v2837 = vpop.f32.mrf.mxu0
        %v2838 = vadd.f32 0.0, %v2837
        %v2839 = vpop.f32.mrf.mxu0
        %v2840 = vadd.f32 0.0, %v2839
        %2841 = vmatprep.mubr.bf16.mxu0 0
        %2842 = vmatmul.mubr.bf16.gmra.mxu0 %v2717
        %v2843 = vpop.f32.mrf.mxu0
        %v2844 = vadd.f32 0.0, %v2843
        %v2845 = vpop.f32.mrf.mxu0
        %v2846 = vadd.f32 0.0, %v2845
        %v2847 = vpop.f32.mrf.mxu0
        %v2848 = vadd.f32 0.0, %v2847
        %v2849 = vpop.f32.mrf.mxu0
        %v2850 = vadd.f32 0.0, %v2849
        %2851 = vmatprep.mubr.bf16.mxu0 0
        %2852 = vmatmul.mubr.bf16.gmra.mxu0 %v2720
        %v2853 = vpop.f32.mrf.mxu0
        %v2854 = vadd.f32 0.0, %v2853
        %v2855 = vpop.f32.mrf.mxu0
        %v2856 = vadd.f32 0.0, %v2855
        %v2857 = vpop.f32.mrf.mxu0
        %v2858 = vadd.f32 0.0, %v2857
        %v2859 = vpop.f32.mrf.mxu0
        %v2860 = vadd.f32 0.0, %v2859
        %2861 = vmatprep.mubr.bf16.mxu0 0
        %2862 = vmatmul.mubr.bf16.gmra.mxu0 %v2723
        %v2863 = vpop.f32.mrf.mxu0
        %v2864 = vadd.f32 0.0, %v2863
        %v2865 = vpop.f32.mrf.mxu0
        %v2866 = vadd.f32 0.0, %v2865
        %v2867 = vpop.f32.mrf.mxu0
        %v2868 = vadd.f32 0.0, %v2867
        %v2869 = vpop.f32.mrf.mxu0
        %v2870 = vadd.f32 0.0, %v2869
        %2871 = vmatprep.mubr.bf16.mxu0 0
        %2872 = vmatmul.mubr.bf16.gmra.mxu0 %v2726
        %v2873 = vpop.f32.mrf.mxu0
        %v2874 = vadd.f32 0.0, %v2873
        %v2875 = vpop.f32.mrf.mxu0
        %v2876 = vadd.f32 0.0, %v2875
        %v2877 = vpop.f32.mrf.mxu0
        %v2878 = vadd.f32 0.0, %v2877
        %v2879 = vpop.f32.mrf.mxu0
        %v2880 = vadd.f32 0.0, %v2879
        %2881 = vmatprep.mubr.bf16.mxu0 0
        %2882 = vmatmul.mubr.bf16.gmra.mxu0 %v2729
        %v2883 = vpop.f32.mrf.mxu0
        %v2884 = vadd.f32 0.0, %v2883
        %v2885 = vpop.f32.mrf.mxu0
        %v2886 = vadd.f32 0.0, %v2885
        %v2887 = vpop.f32.mrf.mxu0
        %v2888 = vadd.f32 0.0, %v2887
        %v2889 = vpop.f32.mrf.mxu0
        %v2890 = vadd.f32 0.0, %v2889
        %2891 = vdwg.mxu0
        %v2892 = vmul.f32 %v2814, 0.17677669
        %v2893 = vmul.f32 %v2816, 0.17677669
        %v2894 = vmul.f32 %v2818, 0.17677669
        %v2895 = vmul.f32 %v2820, 0.17677669
        %v2896 = vmul.f32 %v2824, 0.17677669
        %v2897 = vmul.f32 %v2826, 0.17677669
        %v2898 = vmul.f32 %v2828, 0.17677669
        %v2899 = vmul.f32 %v2830, 0.17677669
        %v2900 = vmul.f32 %v2834, 0.17677669
        %v2901 = vmul.f32 %v2836, 0.17677669
        %v2902 = vmul.f32 %v2838, 0.17677669
        %v2903 = vmul.f32 %v2840, 0.17677669
        %v2904 = vmul.f32 %v2844, 0.17677669
        %v2905 = vmul.f32 %v2846, 0.17677669
        %v2906 = vmul.f32 %v2848, 0.17677669
        %v2907 = vmul.f32 %v2850, 0.17677669
        %v2908 = vmul.f32 %v2854, 0.17677669
        %v2909 = vmul.f32 %v2856, 0.17677669
        %v2910 = vmul.f32 %v2858, 0.17677669
        %v2911 = vmul.f32 %v2860, 0.17677669
        %v2912 = vmul.f32 %v2864, 0.17677669
        %v2913 = vmul.f32 %v2866, 0.17677669
        %v2914 = vmul.f32 %v2868, 0.17677669
        %v2915 = vmul.f32 %v2870, 0.17677669
        %v2916 = vmul.f32 %v2874, 0.17677669
        %v2917 = vmul.f32 %v2876, 0.17677669
        %v2918 = vmul.f32 %v2878, 0.17677669
        %v2919 = vmul.f32 %v2880, 0.17677669
        %v2920 = vmul.f32 %v2884, 0.17677669
        %v2921 = vmul.f32 %v2886, 0.17677669
        %v2922 = vmul.f32 %v2888, 0.17677669
        %v2923 = vmul.f32 %v2890, 0.17677669
        %v2924 = vmax.f32 %v2892, %v2893
        %2925 = vmax.xlane.f32.xlu0 %v2924
        %v2926 = vpop.xlane.xlu0 %2925
        %v2927 = vmax.f32 %v2894, %v2895
        %2928 = vmax.xlane.f32.xlu0 %v2927
        %v2929 = vpop.xlane.xlu0 %2928
        %v2930 = vmax.f32 %v2896, %v2897
        %2931 = vmax.xlane.f32.xlu0 %v2930
        %v2932 = vpop.xlane.xlu0 %2931
        %v2933 = vmax.f32 %v2898, %v2899
        %2934 = vmax.xlane.f32.xlu0 %v2933
        %v2935 = vpop.xlane.xlu0 %2934
        %v2936 = vmax.f32 %v2900, %v2901
        %2937 = vmax.xlane.f32.xlu0 %v2936
        %v2938 = vpop.xlane.xlu0 %2937
        %v2939 = vmax.f32 %v2902, %v2903
        %2940 = vmax.xlane.f32.xlu0 %v2939
        %v2941 = vpop.xlane.xlu0 %2940
        %v2942 = vmax.f32 %v2904, %v2905
        %2943 = vmax.xlane.f32.xlu0 %v2942
        %v2944 = vpop.xlane.xlu0 %2943
        %v2945 = vmax.f32 %v2906, %v2907
        %2946 = vmax.xlane.f32.xlu0 %v2945
        %v2947 = vpop.xlane.xlu0 %2946
        %v2948 = vmax.f32 %v2908, %v2909
        %2949 = vmax.xlane.f32.xlu0 %v2948
        %v2950 = vpop.xlane.xlu0 %2949
        %v2951 = vmax.f32 %v2910, %v2911
        %2952 = vmax.xlane.f32.xlu0 %v2951
        %v2953 = vpop.xlane.xlu0 %2952
        %v2954 = vmax.f32 %v2912, %v2913
        %2955 = vmax.xlane.f32.xlu0 %v2954
        %v2956 = vpop.xlane.xlu0 %2955
        %v2957 = vmax.f32 %v2914, %v2915
        %2958 = vmax.xlane.f32.xlu0 %v2957
        %v2959 = vpop.xlane.xlu0 %2958
        %v2960 = vmax.f32 %v2916, %v2917
        %2961 = vmax.xlane.f32.xlu0 %v2960
        %v2962 = vpop.xlane.xlu0 %2961
        %v2963 = vmax.f32 %v2918, %v2919
        %2964 = vmax.xlane.f32.xlu0 %v2963
        %v2965 = vpop.xlane.xlu0 %2964
        %v2966 = vmax.f32 %v2920, %v2921
        %2967 = vmax.xlane.f32.xlu0 %v2966
        %v2968 = vpop.xlane.xlu0 %2967
        %v2969 = vmax.f32 %v2922, %v2923
        %2970 = vmax.xlane.f32.xlu0 %v2969
        %v2971 = vpop.xlane.xlu0 %2970
        %v2972 = vsub.f32 %v2892, %v2926
        %v2973 = vsub.f32 %v2893, %v2926
        %v2974 = vsub.f32 %v2894, %v2929
        %v2975 = vsub.f32 %v2895, %v2929
        %v2976 = vsub.f32 %v2896, %v2932
        %v2977 = vsub.f32 %v2897, %v2932
        %v2978 = vsub.f32 %v2898, %v2935
        %v2979 = vsub.f32 %v2899, %v2935
        %v2980 = vsub.f32 %v2900, %v2938
        %v2981 = vsub.f32 %v2901, %v2938
        %v2982 = vsub.f32 %v2902, %v2941
        %v2983 = vsub.f32 %v2903, %v2941
        %v2984 = vsub.f32 %v2904, %v2944
        %v2985 = vsub.f32 %v2905, %v2944
        %v2986 = vsub.f32 %v2906, %v2947
        %v2987 = vsub.f32 %v2907, %v2947
        %v2988 = vsub.f32 %v2908, %v2950
        %v2989 = vsub.f32 %v2909, %v2950
        %v2990 = vsub.f32 %v2910, %v2953
        %v2991 = vsub.f32 %v2911, %v2953
        %v2992 = vsub.f32 %v2912, %v2956
        %v2993 = vsub.f32 %v2913, %v2956
        %v2994 = vsub.f32 %v2914, %v2959
        %v2995 = vsub.f32 %v2915, %v2959
        %v2996 = vsub.f32 %v2916, %v2962
        %v2997 = vsub.f32 %v2917, %v2962
        %v2998 = vsub.f32 %v2918, %v2965
        %v2999 = vsub.f32 %v2919, %v2965
        %v3000 = vsub.f32 %v2920, %v2968
        %v3001 = vsub.f32 %v2921, %v2968
        %v3002 = vsub.f32 %v2922, %v2971
        %v3003 = vsub.f32 %v2923, %v2971
        %v3004 = vmul.f32 %v2972, 1.442695
        %v3005 = vpow.pop %v3004
        %v3006 = vmul.f32 %v2973, 1.442695
        %v3007 = vpow.pop %v3006
        %v3008 = vmul.f32 %v2974, 1.442695
        %v3009 = vpow.pop %v3008
        %v3010 = vmul.f32 %v2975, 1.442695
        %v3011 = vpow.pop %v3010
        %v3012 = vmul.f32 %v2976, 1.442695
        %v3013 = vpow.pop %v3012
        %v3014 = vmul.f32 %v2977, 1.442695
        %v3015 = vpow.pop %v3014
        %v3016 = vmul.f32 %v2978, 1.442695
        %v3017 = vpow.pop %v3016
        %v3018 = vmul.f32 %v2979, 1.442695
        %v3019 = vpow.pop %v3018
        %v3020 = vmul.f32 %v2980, 1.442695
        %v3021 = vpow.pop %v3020
        %v3022 = vmul.f32 %v2981, 1.442695
        %v3023 = vpow.pop %v3022
        %v3024 = vmul.f32 %v2982, 1.442695
        %v3025 = vpow.pop %v3024
        %v3026 = vmul.f32 %v2983, 1.442695
        %v3027 = vpow.pop %v3026
        %v3028 = vmul.f32 %v2984, 1.442695
        %v3029 = vpow.pop %v3028
        %v3030 = vmul.f32 %v2985, 1.442695
        %v3031 = vpow.pop %v3030
        %v3032 = vmul.f32 %v2986, 1.442695
        %v3033 = vpow.pop %v3032
        %v3034 = vmul.f32 %v2987, 1.442695
        %v3035 = vpow.pop %v3034
        %v3036 = vmul.f32 %v2988, 1.442695
        %v3037 = vpow.pop %v3036
        %v3038 = vmul.f32 %v2989, 1.442695
        %v3039 = vpow.pop %v3038
        %v3040 = vmul.f32 %v2990, 1.442695
        %v3041 = vpow.pop %v3040
        %v3042 = vmul.f32 %v2991, 1.442695
        %v3043 = vpow.pop %v3042
        %v3044 = vmul.f32 %v2992, 1.442695
        %v3045 = vpow.pop %v3044
        %v3046 = vmul.f32 %v2993, 1.442695
        %v3047 = vpow.pop %v3046
        %v3048 = vmul.f32 %v2994, 1.442695
        %v3049 = vpow.pop %v3048
        %v3050 = vmul.f32 %v2995, 1.442695
        %v3051 = vpow.pop %v3050
        %v3052 = vmul.f32 %v2996, 1.442695
        %v3053 = vpow.pop %v3052
        %v3054 = vmul.f32 %v2997, 1.442695
        %v3055 = vpow.pop %v3054
        %v3056 = vmul.f32 %v2998, 1.442695
        %v3057 = vpow.pop %v3056
        %v3058 = vmul.f32 %v2999, 1.442695
        %v3059 = vpow.pop %v3058
        %v3060 = vmul.f32 %v3000, 1.442695
        %v3061 = vpow.pop %v3060
        %v3062 = vmul.f32 %v3001, 1.442695
        %v3063 = vpow.pop %v3062
        %v3064 = vmul.f32 %v3002, 1.442695
        %v3065 = vpow.pop %v3064
        %v3066 = vmul.f32 %v3003, 1.442695
        %v3067 = vpow.pop %v3066
        %v3068 = vadd.f32 %v3005, %v3007
        %3069 = vadd.xlane.f32.xlu0 %v3068
        %v3070 = vpop.xlane.xlu0 %3069
        %v3071 = vadd.f32 %v3009, %v3011
        %3072 = vadd.xlane.f32.xlu0 %v3071
        %v3073 = vpop.xlane.xlu0 %3072
        %v3074 = vadd.f32 %v3013, %v3015
        %3075 = vadd.xlane.f32.xlu0 %v3074
        %v3076 = vpop.xlane.xlu0 %3075
        %v3077 = vadd.f32 %v3017, %v3019
        %3078 = vadd.xlane.f32.xlu0 %v3077
        %v3079 = vpop.xlane.xlu0 %3078
        %v3080 = vadd.f32 %v3021, %v3023
        %3081 = vadd.xlane.f32.xlu0 %v3080
        %v3082 = vpop.xlane.xlu0 %3081
        %v3083 = vadd.f32 %v3025, %v3027
        %3084 = vadd.xlane.f32.xlu0 %v3083
        %v3085 = vpop.xlane.xlu0 %3084
        %v3086 = vadd.f32 %v3029, %v3031
        %3087 = vadd.xlane.f32.xlu0 %v3086
        %v3088 = vpop.xlane.xlu0 %3087
        %v3089 = vadd.f32 %v3033, %v3035
        %3090 = vadd.xlane.f32.xlu0 %v3089
        %v3091 = vpop.xlane.xlu0 %3090
        %v3092 = vadd.f32 %v3037, %v3039
        %3093 = vadd.xlane.f32.xlu0 %v3092
        %v3094 = vpop.xlane.xlu0 %3093
        %v3095 = vadd.f32 %v3041, %v3043
        %3096 = vadd.xlane.f32.xlu0 %v3095
        %v3097 = vpop.xlane.xlu0 %3096
        %v3098 = vadd.f32 %v3045, %v3047
        %3099 = vadd.xlane.f32.xlu0 %v3098
        %v3100 = vpop.xlane.xlu0 %3099
        %v3101 = vadd.f32 %v3049, %v3051
        %3102 = vadd.xlane.f32.xlu0 %v3101
        %v3103 = vpop.xlane.xlu0 %3102
        %v3104 = vadd.f32 %v3053, %v3055
        %3105 = vadd.xlane.f32.xlu0 %v3104
        %v3106 = vpop.xlane.xlu0 %3105
        %v3107 = vadd.f32 %v3057, %v3059
        %3108 = vadd.xlane.f32.xlu0 %v3107
        %v3109 = vpop.xlane.xlu0 %3108
        %v3110 = vadd.f32 %v3061, %v3063
        %3111 = vadd.xlane.f32.xlu0 %v3110
        %v3112 = vpop.xlane.xlu0 %3111
        %v3113 = vadd.f32 %v3065, %v3067
        %3114 = vadd.xlane.f32.xlu0 %v3113
        %v3115 = vpop.xlane.xlu0 %3114
        %v3116 = vrcp.pop %v3070
        %v3117 = vrcp.pop %v3073
        %v3118 = vrcp.pop %v3076
        %v3119 = vrcp.pop %v3079
        %v3120 = vrcp.pop %v3082
        %v3121 = vrcp.pop %v3085
        %v3122 = vrcp.pop %v3088
        %v3123 = vrcp.pop %v3091
        %v3124 = vrcp.pop %v3094
        %v3125 = vrcp.pop %v3097
        %v3126 = vrcp.pop %v3100
        %v3127 = vrcp.pop %v3103
        %v3128 = vrcp.pop %v3106
        %v3129 = vrcp.pop %v3109
        %v3130 = vrcp.pop %v3112
        %v3131 = vrcp.pop %v3115
        %v3132 = vmul.f32 %v3005, %v3116
        %v3133 = vmul.f32 %v3007, %v3116
        %v3134 = vmul.f32 %v3009, %v3117
        %v3135 = vmul.f32 %v3011, %v3117
        %v3136 = vmul.f32 %v3013, %v3118
        %v3137 = vmul.f32 %v3015, %v3118
        %v3138 = vmul.f32 %v3017, %v3119
        %v3139 = vmul.f32 %v3019, %v3119
        %v3140 = vmul.f32 %v3021, %v3120
        %v3141 = vmul.f32 %v3023, %v3120
        %v3142 = vmul.f32 %v3025, %v3121
        %v3143 = vmul.f32 %v3027, %v3121
        %v3144 = vmul.f32 %v3029, %v3122
        %v3145 = vmul.f32 %v3031, %v3122
        %v3146 = vmul.f32 %v3033, %v3123
        %v3147 = vmul.f32 %v3035, %v3123
        %v3148 = vmul.f32 %v3037, %v3124
        %v3149 = vmul.f32 %v3039, %v3124
        %v3150 = vmul.f32 %v3041, %v3125
        %v3151 = vmul.f32 %v3043, %v3125
        %v3152 = vmul.f32 %v3045, %v3126
        %v3153 = vmul.f32 %v3047, %v3126
        %v3154 = vmul.f32 %v3049, %v3127
        %v3155 = vmul.f32 %v3051, %v3127
        %v3156 = vmul.f32 %v3053, %v3128
        %v3157 = vmul.f32 %v3055, %v3128
        %v3158 = vmul.f32 %v3057, %v3129
        %v3159 = vmul.f32 %v3059, %v3129
        %v3160 = vmul.f32 %v3061, %v3130
        %v3161 = vmul.f32 %v3063, %v3130
        %v3162 = vmul.f32 %v3065, %v3131
        %v3163 = vmul.f32 %v3067, %v3131
        %v3164 = vpack.c.bf16 %v3134, %v3132
        %v3165 = vpack.c.bf16 %v3135, %v3133
        %v3166 = vpack.c.bf16 %v3138, %v3136
        %v3167 = vpack.c.bf16 %v3139, %v3137
        %v3168 = vpack.c.bf16 %v3142, %v3140
        %v3169 = vpack.c.bf16 %v3143, %v3141
        %v3170 = vpack.c.bf16 %v3146, %v3144
        %v3171 = vpack.c.bf16 %v3147, %v3145
        %v3172 = vpack.c.bf16 %v3150, %v3148
        %v3173 = vpack.c.bf16 %v3151, %v3149
        %v3174 = vpack.c.bf16 %v3154, %v3152
        %v3175 = vpack.c.bf16 %v3155, %v3153
        %v3176 = vpack.c.bf16 %v3158, %v3156
        %v3177 = vpack.c.bf16 %v3159, %v3157
        %v3178 = vpack.c.bf16 %v3162, %v3160
        %v3179 = vpack.c.bf16 %v3163, %v3161
        %v3212 = vunpack.c.l.b16 %v2594
        %v3213 = vunpack.c.l.b16 %v2595
        %v3214 = vunpack.c.l.b16 %v2596
        %v3215 = vunpack.c.l.b16 %v2597
        %v3216 = vunpack.c.l.b16 %v2598
        %v3217 = vunpack.c.l.b16 %v2599
        %v3218 = vunpack.c.l.b16 %v2600
        %v3219 = vunpack.c.l.b16 %v2601
        %v3220 = vunpack.c.l.b16 %v2602
        %v3221 = vunpack.c.l.b16 %v2603
        %v3222 = vunpack.c.l.b16 %v2604
        %v3223 = vunpack.c.l.b16 %v2605
        %v3224 = vunpack.c.l.b16 %v2606
        %v3225 = vunpack.c.l.b16 %v2607
        %v3226 = vunpack.c.l.b16 %v2608
        %v3227 = vunpack.c.l.b16 %v2609
        %v3228 = vunpack.c.l.b16 %v2610
        %v3229 = vunpack.c.l.b16 %v2611
        %v3230 = vunpack.c.l.b16 %v2612
        %v3231 = vunpack.c.l.b16 %v2613
        %v3232 = vunpack.c.l.b16 %v2614
        %v3233 = vunpack.c.l.b16 %v2615
        %v3234 = vunpack.c.l.b16 %v2616
        %v3235 = vunpack.c.l.b16 %v2617
        %v3236 = vunpack.c.l.b16 %v2618
        %v3237 = vunpack.c.l.b16 %v2619
        %v3238 = vunpack.c.l.b16 %v2620
        %v3239 = vunpack.c.l.b16 %v2621
        %v3240 = vunpack.c.l.b16 %v2622
        %v3241 = vunpack.c.l.b16 %v2623
        %v3242 = vunpack.c.l.b16 %v2624
        %v3243 = vunpack.c.l.b16 %v2625
        %v3244 = vpack.c.b16 %v3213, %v3212
        %v3245 = vpack.c.b16 %v3215, %v3214
        %v3246 = vpack.c.b16 %v3217, %v3216
        %v3247 = vpack.c.b16 %v3219, %v3218
        %v3248 = vpack.c.b16 %v3221, %v3220
        %v3249 = vpack.c.b16 %v3223, %v3222
        %v3250 = vpack.c.b16 %v3225, %v3224
        %v3251 = vpack.c.b16 %v3227, %v3226
        %v3252 = vpack.c.b16 %v3229, %v3228
        %v3253 = vpack.c.b16 %v3231, %v3230
        %v3254 = vpack.c.b16 %v3233, %v3232
        %v3255 = vpack.c.b16 %v3235, %v3234
        %v3256 = vpack.c.b16 %v3237, %v3236
        %v3257 = vpack.c.b16 %v3239, %v3238
        %v3258 = vpack.c.b16 %v3241, %v3240
        %v3259 = vpack.c.b16 %v3243, %v3242
        %3276 = vmatprep.subr.bf16.mxu0 0
        %3277 = vmatpush1.bf16.msra.mxu0 %v3251
        %3278 = vmatprep.subr.bf16.mxu0 0
        %3279 = vmatpush1.bf16.msra.mxu0 %v3250
        %3280 = vmatprep.subr.bf16.mxu0 0
        %3281 = vmatpush1.bf16.msra.mxu0 %v3249
        %3282 = vmatprep.subr.bf16.mxu0 0
        %3283 = vmatpush1.bf16.msra.mxu0 %v3248
        %3284 = vmatprep.subr.bf16.mxu0 0
        %3285 = vmatpush1.bf16.msra.mxu0 %v3247
        %3286 = vmatprep.subr.bf16.mxu0 0
        %3287 = vmatpush1.bf16.msra.mxu0 %v3246
        %3288 = vmatprep.subr.bf16.mxu0 0
        %3289 = vmatpush1.bf16.msra.mxu0 %v3245
        %3290 = vmatprep.subr.bf16.mxu0 0
        %3291 = vmatpush1.bf16.msra.mxu0 %v3244
        %3292 = vmatprep.subr.bf16.mxu0 0
        %3293 = vmatpush2.bf16.msra.mxu0 %v3259
        %3294 = vmatprep.subr.bf16.mxu0 0
        %3295 = vmatpush2.bf16.msra.mxu0 %v3258
        %3296 = vmatprep.subr.bf16.mxu0 0
        %3297 = vmatpush2.bf16.msra.mxu0 %v3257
        %3298 = vmatprep.subr.bf16.mxu0 0
        %3299 = vmatpush2.bf16.msra.mxu0 %v3256
        %3300 = vmatprep.subr.bf16.mxu0 0
        %3301 = vmatpush2.bf16.msra.mxu0 %v3255
        %3302 = vmatprep.subr.bf16.mxu0 0
        %3303 = vmatpush2.bf16.msra.mxu0 %v3254
        %3304 = vmatprep.subr.bf16.mxu0 0
        %3305 = vmatpush2.bf16.msra.mxu0 %v3253
        %3306 = vmatprep.subr.bf16.mxu0 0
        %3307 = vmatpush2.bf16.msra.mxu0 %v3252
        %3308 = vmatprep.mubr.bf16.mxu0 %v3165
        %3309 = vmatmul.mubr.bf16.gmra.mxu0 %v3164
        %v3310 = vpop.f32.mrf.mxu0
        %v3311 = vadd.f32 0.0, %v3310
        %v3312 = vpop.f32.mrf.mxu0
        %v3313 = vpop.f32.mrf.mxu0
        %v3314 = vadd.f32 0.0, %v3313
        %v3315 = vpop.f32.mrf.mxu0
        %3316 = vmatprep.mubr.bf16.mxu0 %v3167
        %3317 = vmatmul.mubr.bf16.gmra.mxu0 %v3166
        %v3318 = vpop.f32.mrf.mxu0
        %v3319 = vadd.f32 0.0, %v3318
        %v3320 = vpop.f32.mrf.mxu0
        %v3321 = vpop.f32.mrf.mxu0
        %v3322 = vadd.f32 0.0, %v3321
        %v3323 = vpop.f32.mrf.mxu0
        %3324 = vmatprep.mubr.bf16.mxu0 %v3169
        %3325 = vmatmul.mubr.bf16.gmra.mxu0 %v3168
        %v3326 = vpop.f32.mrf.mxu0
        %v3327 = vadd.f32 0.0, %v3326
        %v3328 = vpop.f32.mrf.mxu0
        %v3329 = vpop.f32.mrf.mxu0
        %v3330 = vadd.f32 0.0, %v3329
        %v3331 = vpop.f32.mrf.mxu0
        %3332 = vmatprep.mubr.bf16.mxu0 %v3171
        %3333 = vmatmul.mubr.bf16.gmra.mxu0 %v3170
        %v3334 = vpop.f32.mrf.mxu0
        %v3335 = vadd.f32 0.0, %v3334
        %v3336 = vpop.f32.mrf.mxu0
        %v3337 = vpop.f32.mrf.mxu0
        %v3338 = vadd.f32 0.0, %v3337
        %v3339 = vpop.f32.mrf.mxu0
        %3340 = vmatprep.mubr.bf16.mxu0 %v3173
        %3341 = vmatmul.mubr.bf16.gmra.mxu0 %v3172
        %v3342 = vpop.f32.mrf.mxu0
        %v3343 = vadd.f32 0.0, %v3342
        %v3344 = vpop.f32.mrf.mxu0
        %v3345 = vpop.f32.mrf.mxu0
        %v3346 = vadd.f32 0.0, %v3345
        %v3347 = vpop.f32.mrf.mxu0
        %3348 = vmatprep.mubr.bf16.mxu0 %v3175
        %3349 = vmatmul.mubr.bf16.gmra.mxu0 %v3174
        %v3350 = vpop.f32.mrf.mxu0
        %v3351 = vadd.f32 0.0, %v3350
        %v3352 = vpop.f32.mrf.mxu0
        %v3353 = vpop.f32.mrf.mxu0
        %v3354 = vadd.f32 0.0, %v3353
        %v3355 = vpop.f32.mrf.mxu0
        %3356 = vmatprep.mubr.bf16.mxu0 %v3177
        %3357 = vmatmul.mubr.bf16.gmra.mxu0 %v3176
        %v3358 = vpop.f32.mrf.mxu0
        %v3359 = vadd.f32 0.0, %v3358
        %v3360 = vpop.f32.mrf.mxu0
        %v3361 = vpop.f32.mrf.mxu0
        %v3362 = vadd.f32 0.0, %v3361
        %v3363 = vpop.f32.mrf.mxu0
        %3364 = vmatprep.mubr.bf16.mxu0 %v3179
        %3365 = vmatmul.mubr.bf16.gmra.mxu0 %v3178
        %v3366 = vpop.f32.mrf.mxu0
        %v3367 = vadd.f32 0.0, %v3366
        %v3368 = vpop.f32.mrf.mxu0
        %v3369 = vpop.f32.mrf.mxu0
        %v3370 = vadd.f32 0.0, %v3369
        %v3371 = vpop.f32.mrf.mxu0
        %3372 = vdwg.mxu0
        %3381 = vrot.lane.b32.xlu0 %v2554, 96
        %v3382 = vpop.permute.xlu0 %3381
        %3383 = vrot.lane.b32.xlu0 %v2555, 96
        %v3384 = vpop.permute.xlu0 %3383
        %3385 = vrot.lane.b32.xlu0 %v2556, 96
        %v3386 = vpop.permute.xlu0 %3385
        %3387 = vrot.lane.b32.xlu0 %v2557, 96
        %v3388 = vpop.permute.xlu0 %3387
        %3389 = vrot.lane.b32.xlu0 %v2558, 96
        %v3390 = vpop.permute.xlu0 %3389
        %3391 = vrot.lane.b32.xlu0 %v2559, 96
        %v3392 = vpop.permute.xlu0 %3391
        %3393 = vrot.lane.b32.xlu0 %v2560, 96
        %v3394 = vpop.permute.xlu0 %3393
        %3395 = vrot.lane.b32.xlu0 %v2561, 96
        %v3396 = vpop.permute.xlu0 %3395
        %3397 = vrot.lane.b32.xlu0 %v2690, 96
        %v3398 = vpop.permute.xlu0 %3397
        %3399 = vrot.lane.b32.xlu0 %v2691, 96
        %v3400 = vpop.permute.xlu0 %3399
        %3401 = vrot.lane.b32.xlu0 %v2692, 96
        %v3402 = vpop.permute.xlu0 %3401
        %3403 = vrot.lane.b32.xlu0 %v2693, 96
        %v3404 = vpop.permute.xlu0 %3403
        %3405 = vrot.lane.b32.xlu0 %v2694, 96
        %v3406 = vpop.permute.xlu0 %3405
        %3407 = vrot.lane.b32.xlu0 %v2695, 96
        %v3408 = vpop.permute.xlu0 %3407
        %3409 = vrot.lane.b32.xlu0 %v2696, 96
        %v3410 = vpop.permute.xlu0 %3409
        %3411 = vrot.lane.b32.xlu0 %v2697, 96
        %v3412 = vpop.permute.xlu0 %3411
        %3413 = vrot.lane.b32.xlu0 %v2698, 96
        %v3414 = vpop.permute.xlu0 %3413
        %3415 = vrot.lane.b32.xlu0 %v2699, 96
        %v3416 = vpop.permute.xlu0 %3415
        %3417 = vrot.lane.b32.xlu0 %v2700, 96
        %v3418 = vpop.permute.xlu0 %3417
        %3419 = vrot.lane.b32.xlu0 %v2701, 96
        %v3420 = vpop.permute.xlu0 %3419
        %3421 = vrot.lane.b32.xlu0 %v2702, 96
        %v3422 = vpop.permute.xlu0 %3421
        %3423 = vrot.lane.b32.xlu0 %v2703, 96
        %v3424 = vpop.permute.xlu0 %3423
        %3425 = vrot.lane.b32.xlu0 %v2704, 96
        %v3426 = vpop.permute.xlu0 %3425
        %3427 = vrot.lane.b32.xlu0 %v2705, 96
        %v3428 = vpop.permute.xlu0 %3427
        %v3430 = vsel %vm2706, %v3382, 0
        %v3433 = vsel %vm2706, %v3384, 0
        %v3436 = vsel %vm2706, %v3386, 0
        %v3439 = vsel %vm2706, %v3388, 0
        %v3442 = vsel %vm2706, %v3390, 0
        %v3445 = vsel %vm2706, %v3392, 0
        %v3448 = vsel %vm2706, %v3394, 0
        %v3451 = vsel %vm2706, %v3396, 0
        %v3454 = vsel %vm2706, %v3398, 0
        %v3457 = vsel %vm2706, %v3400, 0
        %v3460 = vsel %vm2706, %v3402, 0
        %v3463 = vsel %vm2706, %v3404, 0
        %v3466 = vsel %vm2706, %v3406, 0
        %v3469 = vsel %vm2706, %v3408, 0
        %v3472 = vsel %vm2706, %v3410, 0
        %v3475 = vsel %vm2706, %v3412, 0
        %v3478 = vsel %vm2706, %v3414, 0
        %v3481 = vsel %vm2706, %v3416, 0
        %v3484 = vsel %vm2706, %v3418, 0
        %v3487 = vsel %vm2706, %v3420, 0
        %v3490 = vsel %vm2706, %v3422, 0
        %v3493 = vsel %vm2706, %v3424, 0
        %v3496 = vsel %vm2706, %v3426, 0
        %v3499 = vsel %vm2706, %v3428, 0
        %3501 = vmatprep.subr.bf16.mxu0 0
        %3502 = vmatpush1.bf16.xpose.msra.mxu0 %v3475
        %3503 = vmatprep.subr.bf16.mxu0 0
        %3504 = vmatpush1.bf16.xpose.msra.mxu0 %v3472
        %3505 = vmatprep.subr.bf16.mxu0 0
        %3506 = vmatpush1.bf16.xpose.msra.mxu0 %v3469
        %3507 = vmatprep.subr.bf16.mxu0 0
        %3508 = vmatpush1.bf16.xpose.msra.mxu0 %v3466
        %3509 = vmatprep.subr.bf16.mxu0 0
        %3510 = vmatpush1.bf16.xpose.msra.mxu0 %v3463
        %3511 = vmatprep.subr.bf16.mxu0 0
        %3512 = vmatpush1.bf16.xpose.msra.mxu0 %v3460
        %3513 = vmatprep.subr.bf16.mxu0 0
        %3514 = vmatpush1.bf16.xpose.msra.mxu0 %v3457
        %3515 = vmatprep.subr.bf16.mxu0 0
        %3516 = vmatpush1.bf16.xpose.msra.mxu0 %v3454
        %3517 = vmatprep.subr.bf16.mxu0 0
        %3518 = vmatpush2.bf16.xpose.msra.mxu0 %v3499
        %3519 = vmatprep.subr.bf16.mxu0 0
        %3520 = vmatpush2.bf16.xpose.msra.mxu0 %v3496
        %3521 = vmatprep.subr.bf16.mxu0 0
        %3522 = vmatpush2.bf16.xpose.msra.mxu0 %v3493
        %3523 = vmatprep.subr.bf16.mxu0 0
        %3524 = vmatpush2.bf16.xpose.msra.mxu0 %v3490
        %3525 = vmatprep.subr.bf16.mxu0 0
        %3526 = vmatpush2.bf16.xpose.msra.mxu0 %v3487
        %3527 = vmatprep.subr.bf16.mxu0 0
        %3528 = vmatpush2.bf16.xpose.msra.mxu0 %v3484
        %3529 = vmatprep.subr.bf16.mxu0 0
        %3530 = vmatpush2.bf16.xpose.msra.mxu0 %v3481
        %3531 = vmatprep.subr.bf16.mxu0 0
        %3532 = vmatpush2.bf16.xpose.msra.mxu0 %v3478
        %3533 = vmatprep.mubr.bf16.mxu0 0
        %3534 = vmatmul.mubr.bf16.gmra.mxu0 %v3430
        %v3535 = vpop.f32.mrf.mxu0
        %v3536 = vadd.f32 0.0, %v3535
        %v3537 = vpop.f32.mrf.mxu0
        %v3538 = vadd.f32 0.0, %v3537
        %v3539 = vpop.f32.mrf.mxu0
        %v3540 = vadd.f32 0.0, %v3539
        %v3541 = vpop.f32.mrf.mxu0
        %v3542 = vadd.f32 0.0, %v3541
        %3543 = vmatprep.mubr.bf16.mxu0 0
        %3544 = vmatmul.mubr.bf16.gmra.mxu0 %v3433
        %v3545 = vpop.f32.mrf.mxu0
        %v3546 = vadd.f32 0.0, %v3545
        %v3547 = vpop.f32.mrf.mxu0
        %v3548 = vadd.f32 0.0, %v3547
        %v3549 = vpop.f32.mrf.mxu0
        %v3550 = vadd.f32 0.0, %v3549
        %v3551 = vpop.f32.mrf.mxu0
        %v3552 = vadd.f32 0.0, %v3551
        %3553 = vmatprep.mubr.bf16.mxu0 0
        %3554 = vmatmul.mubr.bf16.gmra.mxu0 %v3436
        %v3555 = vpop.f32.mrf.mxu0
        %v3556 = vadd.f32 0.0, %v3555
        %v3557 = vpop.f32.mrf.mxu0
        %v3558 = vadd.f32 0.0, %v3557
        %v3559 = vpop.f32.mrf.mxu0
        %v3560 = vadd.f32 0.0, %v3559
        %v3561 = vpop.f32.mrf.mxu0
        %v3562 = vadd.f32 0.0, %v3561
        %3563 = vmatprep.mubr.bf16.mxu0 0
        %3564 = vmatmul.mubr.bf16.gmra.mxu0 %v3439
        %v3565 = vpop.f32.mrf.mxu0
        %v3566 = vadd.f32 0.0, %v3565
        %v3567 = vpop.f32.mrf.mxu0
        %v3568 = vadd.f32 0.0, %v3567
        %v3569 = vpop.f32.mrf.mxu0
        %v3570 = vadd.f32 0.0, %v3569
        %v3571 = vpop.f32.mrf.mxu0
        %v3572 = vadd.f32 0.0, %v3571
        %3573 = vmatprep.mubr.bf16.mxu0 0
        %3574 = vmatmul.mubr.bf16.gmra.mxu0 %v3442
        %v3575 = vpop.f32.mrf.mxu0
        %v3576 = vadd.f32 0.0, %v3575
        %v3577 = vpop.f32.mrf.mxu0
        %v3578 = vadd.f32 0.0, %v3577
        %v3579 = vpop.f32.mrf.mxu0
        %v3580 = vadd.f32 0.0, %v3579
        %v3581 = vpop.f32.mrf.mxu0
        %v3582 = vadd.f32 0.0, %v3581
        %3583 = vmatprep.mubr.bf16.mxu0 0
        %3584 = vmatmul.mubr.bf16.gmra.mxu0 %v3445
        %v3585 = vpop.f32.mrf.mxu0
        %v3586 = vadd.f32 0.0, %v3585
        %v3587 = vpop.f32.mrf.mxu0
        %v3588 = vadd.f32 0.0, %v3587
        %v3589 = vpop.f32.mrf.mxu0
        %v3590 = vadd.f32 0.0, %v3589
        %v3591 = vpop.f32.mrf.mxu0
        %v3592 = vadd.f32 0.0, %v3591
        %3593 = vmatprep.mubr.bf16.mxu0 0
        %3594 = vmatmul.mubr.bf16.gmra.mxu0 %v3448
        %v3595 = vpop.f32.mrf.mxu0
        %v3596 = vadd.f32 0.0, %v3595
        %v3597 = vpop.f32.mrf.mxu0
        %v3598 = vadd.f32 0.0, %v3597
        %v3599 = vpop.f32.mrf.mxu0
        %v3600 = vadd.f32 0.0, %v3599
        %v3601 = vpop.f32.mrf.mxu0
        %v3602 = vadd.f32 0.0, %v3601
        %3603 = vmatprep.mubr.bf16.mxu0 0
        %3604 = vmatmul.mubr.bf16.gmra.mxu0 %v3451
        %v3605 = vpop.f32.mrf.mxu0
        %v3606 = vadd.f32 0.0, %v3605
        %v3607 = vpop.f32.mrf.mxu0
        %v3608 = vadd.f32 0.0, %v3607
        %v3609 = vpop.f32.mrf.mxu0
        %v3610 = vadd.f32 0.0, %v3609
        %v3611 = vpop.f32.mrf.mxu0
        %v3612 = vadd.f32 0.0, %v3611
        %3613 = vdwg.mxu0
        %v3614 = vmul.f32 %v3536, 0.17677669
        %v3615 = vmul.f32 %v3538, 0.17677669
        %v3616 = vmul.f32 %v3540, 0.17677669
        %v3617 = vmul.f32 %v3542, 0.17677669
        %v3618 = vmul.f32 %v3546, 0.17677669
        %v3619 = vmul.f32 %v3548, 0.17677669
        %v3620 = vmul.f32 %v3550, 0.17677669
        %v3621 = vmul.f32 %v3552, 0.17677669
        %v3622 = vmul.f32 %v3556, 0.17677669
        %v3623 = vmul.f32 %v3558, 0.17677669
        %v3624 = vmul.f32 %v3560, 0.17677669
        %v3625 = vmul.f32 %v3562, 0.17677669
        %v3626 = vmul.f32 %v3566, 0.17677669
        %v3627 = vmul.f32 %v3568, 0.17677669
        %v3628 = vmul.f32 %v3570, 0.17677669
        %v3629 = vmul.f32 %v3572, 0.17677669
        %v3630 = vmul.f32 %v3576, 0.17677669
        %v3631 = vmul.f32 %v3578, 0.17677669
        %v3632 = vmul.f32 %v3580, 0.17677669
        %v3633 = vmul.f32 %v3582, 0.17677669
        %v3634 = vmul.f32 %v3586, 0.17677669
        %v3635 = vmul.f32 %v3588, 0.17677669
        %v3636 = vmul.f32 %v3590, 0.17677669
        %v3637 = vmul.f32 %v3592, 0.17677669
        %v3638 = vmul.f32 %v3596, 0.17677669
        %v3639 = vmul.f32 %v3598, 0.17677669
        %v3640 = vmul.f32 %v3600, 0.17677669
        %v3641 = vmul.f32 %v3602, 0.17677669
        %v3642 = vmul.f32 %v3606, 0.17677669
        %v3643 = vmul.f32 %v3608, 0.17677669
        %v3644 = vmul.f32 %v3610, 0.17677669
        %v3645 = vmul.f32 %v3612, 0.17677669
        %v3646 = vmax.f32 %v3614, %v3615
        %3647 = vmax.xlane.f32.xlu0 %v3646
        %v3648 = vpop.xlane.xlu0 %3647
        %v3649 = vmax.f32 %v3616, %v3617
        %3650 = vmax.xlane.f32.xlu0 %v3649
        %v3651 = vpop.xlane.xlu0 %3650
        %v3652 = vmax.f32 %v3618, %v3619
        %3653 = vmax.xlane.f32.xlu0 %v3652
        %v3654 = vpop.xlane.xlu0 %3653
        %v3655 = vmax.f32 %v3620, %v3621
        %3656 = vmax.xlane.f32.xlu0 %v3655
        %v3657 = vpop.xlane.xlu0 %3656
        %v3658 = vmax.f32 %v3622, %v3623
        %3659 = vmax.xlane.f32.xlu0 %v3658
        %v3660 = vpop.xlane.xlu0 %3659
        %v3661 = vmax.f32 %v3624, %v3625
        %3662 = vmax.xlane.f32.xlu0 %v3661
        %v3663 = vpop.xlane.xlu0 %3662
        %v3664 = vmax.f32 %v3626, %v3627
        %3665 = vmax.xlane.f32.xlu0 %v3664
        %v3666 = vpop.xlane.xlu0 %3665
        %v3667 = vmax.f32 %v3628, %v3629
        %3668 = vmax.xlane.f32.xlu0 %v3667
        %v3669 = vpop.xlane.xlu0 %3668
        %v3670 = vmax.f32 %v3630, %v3631
        %3671 = vmax.xlane.f32.xlu0 %v3670
        %v3672 = vpop.xlane.xlu0 %3671
        %v3673 = vmax.f32 %v3632, %v3633
        %3674 = vmax.xlane.f32.xlu0 %v3673
        %v3675 = vpop.xlane.xlu0 %3674
        %v3676 = vmax.f32 %v3634, %v3635
        %3677 = vmax.xlane.f32.xlu0 %v3676
        %v3678 = vpop.xlane.xlu0 %3677
        %v3679 = vmax.f32 %v3636, %v3637
        %3680 = vmax.xlane.f32.xlu0 %v3679
        %v3681 = vpop.xlane.xlu0 %3680
        %v3682 = vmax.f32 %v3638, %v3639
        %3683 = vmax.xlane.f32.xlu0 %v3682
        %v3684 = vpop.xlane.xlu0 %3683
        %v3685 = vmax.f32 %v3640, %v3641
        %3686 = vmax.xlane.f32.xlu0 %v3685
        %v3687 = vpop.xlane.xlu0 %3686
        %v3688 = vmax.f32 %v3642, %v3643
        %3689 = vmax.xlane.f32.xlu0 %v3688
        %v3690 = vpop.xlane.xlu0 %3689
        %v3691 = vmax.f32 %v3644, %v3645
        %3692 = vmax.xlane.f32.xlu0 %v3691
        %v3693 = vpop.xlane.xlu0 %3692
        %v3694 = vsub.f32 %v3614, %v3648
        %v3695 = vsub.f32 %v3615, %v3648
        %v3696 = vsub.f32 %v3616, %v3651
        %v3697 = vsub.f32 %v3617, %v3651
        %v3698 = vsub.f32 %v3618, %v3654
        %v3699 = vsub.f32 %v3619, %v3654
        %v3700 = vsub.f32 %v3620, %v3657
        %v3701 = vsub.f32 %v3621, %v3657
        %v3702 = vsub.f32 %v3622, %v3660
        %v3703 = vsub.f32 %v3623, %v3660
        %v3704 = vsub.f32 %v3624, %v3663
        %v3705 = vsub.f32 %v3625, %v3663
        %v3706 = vsub.f32 %v3626, %v3666
        %v3707 = vsub.f32 %v3627, %v3666
        %v3708 = vsub.f32 %v3628, %v3669
        %v3709 = vsub.f32 %v3629, %v3669
        %v3710 = vsub.f32 %v3630, %v3672
        %v3711 = vsub.f32 %v3631, %v3672
        %v3712 = vsub.f32 %v3632, %v3675
        %v3713 = vsub.f32 %v3633, %v3675
        %v3714 = vsub.f32 %v3634, %v3678
        %v3715 = vsub.f32 %v3635, %v3678
        %v3716 = vsub.f32 %v3636, %v3681
        %v3717 = vsub.f32 %v3637, %v3681
        %v3718 = vsub.f32 %v3638, %v3684
        %v3719 = vsub.f32 %v3639, %v3684
        %v3720 = vsub.f32 %v3640, %v3687
        %v3721 = vsub.f32 %v3641, %v3687
        %v3722 = vsub.f32 %v3642, %v3690
        %v3723 = vsub.f32 %v3643, %v3690
        %v3724 = vsub.f32 %v3644, %v3693
        %v3725 = vsub.f32 %v3645, %v3693
        %v3726 = vmul.f32 %v3694, 1.442695
        %v3727 = vpow.pop %v3726
        %v3728 = vmul.f32 %v3695, 1.442695
        %v3729 = vpow.pop %v3728
        %v3730 = vmul.f32 %v3696, 1.442695
        %v3731 = vpow.pop %v3730
        %v3732 = vmul.f32 %v3697, 1.442695
        %v3733 = vpow.pop %v3732
        %v3734 = vmul.f32 %v3698, 1.442695
        %v3735 = vpow.pop %v3734
        %v3736 = vmul.f32 %v3699, 1.442695
        %v3737 = vpow.pop %v3736
        %v3738 = vmul.f32 %v3700, 1.442695
        %v3739 = vpow.pop %v3738
        %v3740 = vmul.f32 %v3701, 1.442695
        %v3741 = vpow.pop %v3740
        %v3742 = vmul.f32 %v3702, 1.442695
        %v3743 = vpow.pop %v3742
        %v3744 = vmul.f32 %v3703, 1.442695
        %v3745 = vpow.pop %v3744
        %v3746 = vmul.f32 %v3704, 1.442695
        %v3747 = vpow.pop %v3746
        %v3748 = vmul.f32 %v3705, 1.442695
        %v3749 = vpow.pop %v3748
        %v3750 = vmul.f32 %v3706, 1.442695
        %v3751 = vpow.pop %v3750
        %v3752 = vmul.f32 %v3707, 1.442695
        %v3753 = vpow.pop %v3752
        %v3754 = vmul.f32 %v3708, 1.442695
        %v3755 = vpow.pop %v3754
        %v3756 = vmul.f32 %v3709, 1.442695
        %v3757 = vpow.pop %v3756
        %v3758 = vmul.f32 %v3710, 1.442695
        %v3759 = vpow.pop %v3758
        %v3760 = vmul.f32 %v3711, 1.442695
        %v3761 = vpow.pop %v3760
        %v3762 = vmul.f32 %v3712, 1.442695
        %v3763 = vpow.pop %v3762
        %v3764 = vmul.f32 %v3713, 1.442695
        %v3765 = vpow.pop %v3764
        %v3766 = vmul.f32 %v3714, 1.442695
        %v3767 = vpow.pop %v3766
        %v3768 = vmul.f32 %v3715, 1.442695
        %v3769 = vpow.pop %v3768
        %v3770 = vmul.f32 %v3716, 1.442695
        %v3771 = vpow.pop %v3770
        %v3772 = vmul.f32 %v3717, 1.442695
        %v3773 = vpow.pop %v3772
        %v3774 = vmul.f32 %v3718, 1.442695
        %v3775 = vpow.pop %v3774
        %v3776 = vmul.f32 %v3719, 1.442695
        %v3777 = vpow.pop %v3776
        %v3778 = vmul.f32 %v3720, 1.442695
        %v3779 = vpow.pop %v3778
        %v3780 = vmul.f32 %v3721, 1.442695
        %v3781 = vpow.pop %v3780
        %v3782 = vmul.f32 %v3722, 1.442695
        %v3783 = vpow.pop %v3782
        %v3784 = vmul.f32 %v3723, 1.442695
        %v3785 = vpow.pop %v3784
        %v3786 = vmul.f32 %v3724, 1.442695
        %v3787 = vpow.pop %v3786
        %v3788 = vmul.f32 %v3725, 1.442695
        %v3789 = vpow.pop %v3788
        %v3790 = vadd.f32 %v3727, %v3729
        %3791 = vadd.xlane.f32.xlu0 %v3790
        %v3792 = vpop.xlane.xlu0 %3791
        %v3793 = vadd.f32 %v3731, %v3733
        %3794 = vadd.xlane.f32.xlu0 %v3793
        %v3795 = vpop.xlane.xlu0 %3794
        %v3796 = vadd.f32 %v3735, %v3737
        %3797 = vadd.xlane.f32.xlu0 %v3796
        %v3798 = vpop.xlane.xlu0 %3797
        %v3799 = vadd.f32 %v3739, %v3741
        %3800 = vadd.xlane.f32.xlu0 %v3799
        %v3801 = vpop.xlane.xlu0 %3800
        %v3802 = vadd.f32 %v3743, %v3745
        %3803 = vadd.xlane.f32.xlu0 %v3802
        %v3804 = vpop.xlane.xlu0 %3803
        %v3805 = vadd.f32 %v3747, %v3749
        %3806 = vadd.xlane.f32.xlu0 %v3805
        %v3807 = vpop.xlane.xlu0 %3806
        %v3808 = vadd.f32 %v3751, %v3753
        %3809 = vadd.xlane.f32.xlu0 %v3808
        %v3810 = vpop.xlane.xlu0 %3809
        %v3811 = vadd.f32 %v3755, %v3757
        %3812 = vadd.xlane.f32.xlu0 %v3811
        %v3813 = vpop.xlane.xlu0 %3812
        %v3814 = vadd.f32 %v3759, %v3761
        %3815 = vadd.xlane.f32.xlu0 %v3814
        %v3816 = vpop.xlane.xlu0 %3815
        %v3817 = vadd.f32 %v3763, %v3765
        %3818 = vadd.xlane.f32.xlu0 %v3817
        %v3819 = vpop.xlane.xlu0 %3818
        %v3820 = vadd.f32 %v3767, %v3769
        %3821 = vadd.xlane.f32.xlu0 %v3820
        %v3822 = vpop.xlane.xlu0 %3821
        %v3823 = vadd.f32 %v3771, %v3773
        %3824 = vadd.xlane.f32.xlu0 %v3823
        %v3825 = vpop.xlane.xlu0 %3824
        %v3826 = vadd.f32 %v3775, %v3777
        %3827 = vadd.xlane.f32.xlu0 %v3826
        %v3828 = vpop.xlane.xlu0 %3827
        %v3829 = vadd.f32 %v3779, %v3781
        %3830 = vadd.xlane.f32.xlu0 %v3829
        %v3831 = vpop.xlane.xlu0 %3830
        %v3832 = vadd.f32 %v3783, %v3785
        %3833 = vadd.xlane.f32.xlu0 %v3832
        %v3834 = vpop.xlane.xlu0 %3833
        %v3835 = vadd.f32 %v3787, %v3789
        %3836 = vadd.xlane.f32.xlu0 %v3835
        %v3837 = vpop.xlane.xlu0 %3836
        %v3838 = vrcp.pop %v3792
        %v3839 = vrcp.pop %v3795
        %v3840 = vrcp.pop %v3798
        %v3841 = vrcp.pop %v3801
        %v3842 = vrcp.pop %v3804
        %v3843 = vrcp.pop %v3807
        %v3844 = vrcp.pop %v3810
        %v3845 = vrcp.pop %v3813
        %v3846 = vrcp.pop %v3816
        %v3847 = vrcp.pop %v3819
        %v3848 = vrcp.pop %v3822
        %v3849 = vrcp.pop %v3825
        %v3850 = vrcp.pop %v3828
        %v3851 = vrcp.pop %v3831
        %v3852 = vrcp.pop %v3834
        %v3853 = vrcp.pop %v3837
        %v3854 = vmul.f32 %v3727, %v3838
        %v3855 = vmul.f32 %v3729, %v3838
        %v3856 = vmul.f32 %v3731, %v3839
        %v3857 = vmul.f32 %v3733, %v3839
        %v3858 = vmul.f32 %v3735, %v3840
        %v3859 = vmul.f32 %v3737, %v3840
        %v3860 = vmul.f32 %v3739, %v3841
        %v3861 = vmul.f32 %v3741, %v3841
        %v3862 = vmul.f32 %v3743, %v3842
        %v3863 = vmul.f32 %v3745, %v3842
        %v3864 = vmul.f32 %v3747, %v3843
        %v3865 = vmul.f32 %v3749, %v3843
        %v3866 = vmul.f32 %v3751, %v3844
        %v3867 = vmul.f32 %v3753, %v3844
        %v3868 = vmul.f32 %v3755, %v3845
        %v3869 = vmul.f32 %v3757, %v3845
        %v3870 = vmul.f32 %v3759, %v3846
        %v3871 = vmul.f32 %v3761, %v3846
        %v3872 = vmul.f32 %v3763, %v3847
        %v3873 = vmul.f32 %v3765, %v3847
        %v3874 = vmul.f32 %v3767, %v3848
        %v3875 = vmul.f32 %v3769, %v3848
        %v3876 = vmul.f32 %v3771, %v3849
        %v3877 = vmul.f32 %v3773, %v3849
        %v3878 = vmul.f32 %v3775, %v3850
        %v3879 = vmul.f32 %v3777, %v3850
        %v3880 = vmul.f32 %v3779, %v3851
        %v3881 = vmul.f32 %v3781, %v3851
        %v3882 = vmul.f32 %v3783, %v3852
        %v3883 = vmul.f32 %v3785, %v3852
        %v3884 = vmul.f32 %v3787, %v3853
        %v3885 = vmul.f32 %v3789, %v3853
        %v3886 = vpack.c.bf16 %v3856, %v3854
        %v3887 = vpack.c.bf16 %v3857, %v3855
        %v3888 = vpack.c.bf16 %v3860, %v3858
        %v3889 = vpack.c.bf16 %v3861, %v3859
        %v3890 = vpack.c.bf16 %v3864, %v3862
        %v3891 = vpack.c.bf16 %v3865, %v3863
        %v3892 = vpack.c.bf16 %v3868, %v3866
        %v3893 = vpack.c.bf16 %v3869, %v3867
        %v3894 = vpack.c.bf16 %v3872, %v3870
        %v3895 = vpack.c.bf16 %v3873, %v3871
        %v3896 = vpack.c.bf16 %v3876, %v3874
        %v3897 = vpack.c.bf16 %v3877, %v3875
        %v3898 = vpack.c.bf16 %v3880, %v3878
        %v3899 = vpack.c.bf16 %v3881, %v3879
        %v3900 = vpack.c.bf16 %v3884, %v3882
        %v3901 = vpack.c.bf16 %v3885, %v3883
        %3902 = vrot.lane.b32.xlu0 %v3244, 96
        %v3903 = vpop.permute.xlu0 %3902
        %3904 = vrot.lane.b32.xlu0 %v3245, 96
        %v3905 = vpop.permute.xlu0 %3904
        %3906 = vrot.lane.b32.xlu0 %v3246, 96
        %v3907 = vpop.permute.xlu0 %3906
        %3908 = vrot.lane.b32.xlu0 %v3247, 96
        %v3909 = vpop.permute.xlu0 %3908
        %3910 = vrot.lane.b32.xlu0 %v3248, 96
        %v3911 = vpop.permute.xlu0 %3910
        %3912 = vrot.lane.b32.xlu0 %v3249, 96
        %v3913 = vpop.permute.xlu0 %3912
        %3914 = vrot.lane.b32.xlu0 %v3250, 96
        %v3915 = vpop.permute.xlu0 %3914
        %3916 = vrot.lane.b32.xlu0 %v3251, 96
        %v3917 = vpop.permute.xlu0 %3916
        %3918 = vrot.lane.b32.xlu0 %v3252, 96
        %v3919 = vpop.permute.xlu0 %3918
        %3920 = vrot.lane.b32.xlu0 %v3253, 96
        %v3921 = vpop.permute.xlu0 %3920
        %3922 = vrot.lane.b32.xlu0 %v3254, 96
        %v3923 = vpop.permute.xlu0 %3922
        %3924 = vrot.lane.b32.xlu0 %v3255, 96
        %v3925 = vpop.permute.xlu0 %3924
        %3926 = vrot.lane.b32.xlu0 %v3256, 96
        %v3927 = vpop.permute.xlu0 %3926
        %3928 = vrot.lane.b32.xlu0 %v3257, 96
        %v3929 = vpop.permute.xlu0 %3928
        %3930 = vrot.lane.b32.xlu0 %v3258, 96
        %v3931 = vpop.permute.xlu0 %3930
        %3932 = vrot.lane.b32.xlu0 %v3259, 96
        %v3933 = vpop.permute.xlu0 %3932
        %3950 = vmatprep.subr.bf16.mxu0 0
        %3951 = vmatpush1.bf16.msra.mxu0 %v3917
        %3952 = vmatprep.subr.bf16.mxu0 0
        %3953 = vmatpush1.bf16.msra.mxu0 %v3915
        %3954 = vmatprep.subr.bf16.mxu0 0
        %3955 = vmatpush1.bf16.msra.mxu0 %v3913
        %3956 = vmatprep.subr.bf16.mxu0 0
        %3957 = vmatpush1.bf16.msra.mxu0 %v3911
        %3958 = vmatprep.subr.bf16.mxu0 0
        %3959 = vmatpush1.bf16.msra.mxu0 %v3909
        %3960 = vmatprep.subr.bf16.mxu0 0
        %3961 = vmatpush1.bf16.msra.mxu0 %v3907
        %3962 = vmatprep.subr.bf16.mxu0 0
        %3963 = vmatpush1.bf16.msra.mxu0 %v3905
        %3964 = vmatprep.subr.bf16.mxu0 0
        %3965 = vmatpush1.bf16.msra.mxu0 %v3903
        %3966 = vmatprep.subr.bf16.mxu0 0
        %3967 = vmatpush2.bf16.msra.mxu0 %v3933
        %3968 = vmatprep.subr.bf16.mxu0 0
        %3969 = vmatpush2.bf16.msra.mxu0 %v3931
        %3970 = vmatprep.subr.bf16.mxu0 0
        %3971 = vmatpush2.bf16.msra.mxu0 %v3929
        %3972 = vmatprep.subr.bf16.mxu0 0
        %3973 = vmatpush2.bf16.msra.mxu0 %v3927
        %3974 = vmatprep.subr.bf16.mxu0 0
        %3975 = vmatpush2.bf16.msra.mxu0 %v3925
        %3976 = vmatprep.subr.bf16.mxu0 0
        %3977 = vmatpush2.bf16.msra.mxu0 %v3923
        %3978 = vmatprep.subr.bf16.mxu0 0
        %3979 = vmatpush2.bf16.msra.mxu0 %v3921
        %3980 = vmatprep.subr.bf16.mxu0 0
        %3981 = vmatpush2.bf16.msra.mxu0 %v3919
        %3982 = vmatprep.mubr.bf16.mxu0 %v3887
        %3983 = vmatmul.mubr.bf16.gmra.mxu0 %v3886
        %v3984 = vpop.f32.mrf.mxu0
        %v3985 = vadd.f32 0.0, %v3984
        %v3986 = vpop.f32.mrf.mxu0
        %v3987 = vpop.f32.mrf.mxu0
        %v3988 = vadd.f32 0.0, %v3987
        %v3989 = vpop.f32.mrf.mxu0
        %3990 = vmatprep.mubr.bf16.mxu0 %v3889
        %3991 = vmatmul.mubr.bf16.gmra.mxu0 %v3888
        %v3992 = vpop.f32.mrf.mxu0
        %v3993 = vadd.f32 0.0, %v3992
        %v3994 = vpop.f32.mrf.mxu0
        %v3995 = vpop.f32.mrf.mxu0
        %v3996 = vadd.f32 0.0, %v3995
        %v3997 = vpop.f32.mrf.mxu0
        %3998 = vmatprep.mubr.bf16.mxu0 %v3891
        %3999 = vmatmul.mubr.bf16.gmra.mxu0 %v3890
        %v4000 = vpop.f32.mrf.mxu0
        %v4001 = vadd.f32 0.0, %v4000
        %v4002 = vpop.f32.mrf.mxu0
        %v4003 = vpop.f32.mrf.mxu0
        %v4004 = vadd.f32 0.0, %v4003
        %v4005 = vpop.f32.mrf.mxu0
        %4006 = vmatprep.mubr.bf16.mxu0 %v3893
        %4007 = vmatmul.mubr.bf16.gmra.mxu0 %v3892
        %v4008 = vpop.f32.mrf.mxu0
        %v4009 = vadd.f32 0.0, %v4008
        %v4010 = vpop.f32.mrf.mxu0
        %v4011 = vpop.f32.mrf.mxu0
        %v4012 = vadd.f32 0.0, %v4011
        %v4013 = vpop.f32.mrf.mxu0
        %4014 = vmatprep.mubr.bf16.mxu0 %v3895
        %4015 = vmatmul.mubr.bf16.gmra.mxu0 %v3894
        %v4016 = vpop.f32.mrf.mxu0
        %v4017 = vadd.f32 0.0, %v4016
        %v4018 = vpop.f32.mrf.mxu0
        %v4019 = vpop.f32.mrf.mxu0
        %v4020 = vadd.f32 0.0, %v4019
        %v4021 = vpop.f32.mrf.mxu0
        %4022 = vmatprep.mubr.bf16.mxu0 %v3897
        %4023 = vmatmul.mubr.bf16.gmra.mxu0 %v3896
        %v4024 = vpop.f32.mrf.mxu0
        %v4025 = vadd.f32 0.0, %v4024
        %v4026 = vpop.f32.mrf.mxu0
        %v4027 = vpop.f32.mrf.mxu0
        %v4028 = vadd.f32 0.0, %v4027
        %v4029 = vpop.f32.mrf.mxu0
        %4030 = vmatprep.mubr.bf16.mxu0 %v3899
        %4031 = vmatmul.mubr.bf16.gmra.mxu0 %v3898
        %v4032 = vpop.f32.mrf.mxu0
        %v4033 = vadd.f32 0.0, %v4032
        %v4034 = vpop.f32.mrf.mxu0
        %v4035 = vpop.f32.mrf.mxu0
        %v4036 = vadd.f32 0.0, %v4035
        %v4037 = vpop.f32.mrf.mxu0
        %4038 = vmatprep.mubr.bf16.mxu0 %v3901
        %4039 = vmatmul.mubr.bf16.gmra.mxu0 %v3900
        %v4040 = vpop.f32.mrf.mxu0
        %v4041 = vadd.f32 0.0, %v4040
        %v4042 = vpop.f32.mrf.mxu0
        %v4043 = vpop.f32.mrf.mxu0
        %v4044 = vadd.f32 0.0, %v4043
        %v4045 = vpop.f32.mrf.mxu0
        %4046 = vdwg.mxu0
        %4047 = vrot.lane.b32.xlu0 %v2554, 64
        %v4048 = vpop.permute.xlu0 %4047
        %4049 = vrot.lane.b32.xlu0 %v2555, 64
        %v4050 = vpop.permute.xlu0 %4049
        %4051 = vrot.lane.b32.xlu0 %v2556, 64
        %v4052 = vpop.permute.xlu0 %4051
        %4053 = vrot.lane.b32.xlu0 %v2557, 64
        %v4054 = vpop.permute.xlu0 %4053
        %4055 = vrot.lane.b32.xlu0 %v2558, 64
        %v4056 = vpop.permute.xlu0 %4055
        %4057 = vrot.lane.b32.xlu0 %v2559, 64
        %v4058 = vpop.permute.xlu0 %4057
        %4059 = vrot.lane.b32.xlu0 %v2560, 64
        %v4060 = vpop.permute.xlu0 %4059
        %4061 = vrot.lane.b32.xlu0 %v2561, 64
        %v4062 = vpop.permute.xlu0 %4061
        %4063 = vrot.lane.b32.xlu0 %v2690, 64
        %v4064 = vpop.permute.xlu0 %4063
        %4065 = vrot.lane.b32.xlu0 %v2691, 64
        %v4066 = vpop.permute.xlu0 %4065
        %4067 = vrot.lane.b32.xlu0 %v2692, 64
        %v4068 = vpop.permute.xlu0 %4067
        %4069 = vrot.lane.b32.xlu0 %v2693, 64
        %v4070 = vpop.permute.xlu0 %4069
        %4071 = vrot.lane.b32.xlu0 %v2694, 64
        %v4072 = vpop.permute.xlu0 %4071
        %4073 = vrot.lane.b32.xlu0 %v2695, 64
        %v4074 = vpop.permute.xlu0 %4073
        %4075 = vrot.lane.b32.xlu0 %v2696, 64
        %v4076 = vpop.permute.xlu0 %4075
        %4077 = vrot.lane.b32.xlu0 %v2697, 64
        %v4078 = vpop.permute.xlu0 %4077
        %4079 = vrot.lane.b32.xlu0 %v2698, 64
        %v4080 = vpop.permute.xlu0 %4079
        %4081 = vrot.lane.b32.xlu0 %v2699, 64
        %v4082 = vpop.permute.xlu0 %4081
        %4083 = vrot.lane.b32.xlu0 %v2700, 64
        %v4084 = vpop.permute.xlu0 %4083
        %4085 = vrot.lane.b32.xlu0 %v2701, 64
        %v4086 = vpop.permute.xlu0 %4085
        %4087 = vrot.lane.b32.xlu0 %v2702, 64
        %v4088 = vpop.permute.xlu0 %4087
        %4089 = vrot.lane.b32.xlu0 %v2703, 64
        %v4090 = vpop.permute.xlu0 %4089
        %4091 = vrot.lane.b32.xlu0 %v2704, 64
        %v4092 = vpop.permute.xlu0 %4091
        %4093 = vrot.lane.b32.xlu0 %v2705, 64
        %v4094 = vpop.permute.xlu0 %4093
        %v4096 = vsel %vm2706, %v4048, 0
        %v4099 = vsel %vm2706, %v4050, 0
        %v4102 = vsel %vm2706, %v4052, 0
        %v4105 = vsel %vm2706, %v4054, 0
        %v4108 = vsel %vm2706, %v4056, 0
        %v4111 = vsel %vm2706, %v4058, 0
        %v4114 = vsel %vm2706, %v4060, 0
        %v4117 = vsel %vm2706, %v4062, 0
        %v4120 = vsel %vm2706, %v4064, 0
        %v4123 = vsel %vm2706, %v4066, 0
        %v4126 = vsel %vm2706, %v4068, 0
        %v4129 = vsel %vm2706, %v4070, 0
        %v4132 = vsel %vm2706, %v4072, 0
        %v4135 = vsel %vm2706, %v4074, 0
        %v4138 = vsel %vm2706, %v4076, 0
        %v4141 = vsel %vm2706, %v4078, 0
        %v4144 = vsel %vm2706, %v4080, 0
        %v4147 = vsel %vm2706, %v4082, 0
        %v4150 = vsel %vm2706, %v4084, 0
        %v4153 = vsel %vm2706, %v4086, 0
        %v4156 = vsel %vm2706, %v4088, 0
        %v4159 = vsel %vm2706, %v4090, 0
        %v4162 = vsel %vm2706, %v4092, 0
        %v4165 = vsel %vm2706, %v4094, 0
        %4167 = vmatprep.subr.bf16.mxu0 0
        %4168 = vmatpush1.bf16.xpose.msra.mxu0 %v4141
        %4169 = vmatprep.subr.bf16.mxu0 0
        %4170 = vmatpush1.bf16.xpose.msra.mxu0 %v4138
        %4171 = vmatprep.subr.bf16.mxu0 0
        %4172 = vmatpush1.bf16.xpose.msra.mxu0 %v4135
        %4173 = vmatprep.subr.bf16.mxu0 0
        %4174 = vmatpush1.bf16.xpose.msra.mxu0 %v4132
        %4175 = vmatprep.subr.bf16.mxu0 0
        %4176 = vmatpush1.bf16.xpose.msra.mxu0 %v4129
        %4177 = vmatprep.subr.bf16.mxu0 0
        %4178 = vmatpush1.bf16.xpose.msra.mxu0 %v4126
        %4179 = vmatprep.subr.bf16.mxu0 0
        %4180 = vmatpush1.bf16.xpose.msra.mxu0 %v4123
        %4181 = vmatprep.subr.bf16.mxu0 0
        %4182 = vmatpush1.bf16.xpose.msra.mxu0 %v4120
        %4183 = vmatprep.subr.bf16.mxu0 0
        %4184 = vmatpush2.bf16.xpose.msra.mxu0 %v4165
        %4185 = vmatprep.subr.bf16.mxu0 0
        %4186 = vmatpush2.bf16.xpose.msra.mxu0 %v4162
        %4187 = vmatprep.subr.bf16.mxu0 0
        %4188 = vmatpush2.bf16.xpose.msra.mxu0 %v4159
        %4189 = vmatprep.subr.bf16.mxu0 0
        %4190 = vmatpush2.bf16.xpose.msra.mxu0 %v4156
        %4191 = vmatprep.subr.bf16.mxu0 0
        %4192 = vmatpush2.bf16.xpose.msra.mxu0 %v4153
        %4193 = vmatprep.subr.bf16.mxu0 0
        %4194 = vmatpush2.bf16.xpose.msra.mxu0 %v4150
        %4195 = vmatprep.subr.bf16.mxu0 0
        %4196 = vmatpush2.bf16.xpose.msra.mxu0 %v4147
        %4197 = vmatprep.subr.bf16.mxu0 0
        %4198 = vmatpush2.bf16.xpose.msra.mxu0 %v4144
        %4199 = vmatprep.mubr.bf16.mxu0 0
        %4200 = vmatmul.mubr.bf16.gmra.mxu0 %v4096
        %v4201 = vpop.f32.mrf.mxu0
        %v4202 = vadd.f32 0.0, %v4201
        %v4203 = vpop.f32.mrf.mxu0
        %v4204 = vadd.f32 0.0, %v4203
        %v4205 = vpop.f32.mrf.mxu0
        %v4206 = vadd.f32 0.0, %v4205
        %v4207 = vpop.f32.mrf.mxu0
        %v4208 = vadd.f32 0.0, %v4207
        %4209 = vmatprep.mubr.bf16.mxu0 0
        %4210 = vmatmul.mubr.bf16.gmra.mxu0 %v4099
        %v4211 = vpop.f32.mrf.mxu0
        %v4212 = vadd.f32 0.0, %v4211
        %v4213 = vpop.f32.mrf.mxu0
        %v4214 = vadd.f32 0.0, %v4213
        %v4215 = vpop.f32.mrf.mxu0
        %v4216 = vadd.f32 0.0, %v4215
        %v4217 = vpop.f32.mrf.mxu0
        %v4218 = vadd.f32 0.0, %v4217
        %4219 = vmatprep.mubr.bf16.mxu0 0
        %4220 = vmatmul.mubr.bf16.gmra.mxu0 %v4102
        %v4221 = vpop.f32.mrf.mxu0
        %v4222 = vadd.f32 0.0, %v4221
        %v4223 = vpop.f32.mrf.mxu0
        %v4224 = vadd.f32 0.0, %v4223
        %v4225 = vpop.f32.mrf.mxu0
        %v4226 = vadd.f32 0.0, %v4225
        %v4227 = vpop.f32.mrf.mxu0
        %v4228 = vadd.f32 0.0, %v4227
        %4229 = vmatprep.mubr.bf16.mxu0 0
        %4230 = vmatmul.mubr.bf16.gmra.mxu0 %v4105
        %v4231 = vpop.f32.mrf.mxu0
        %v4232 = vadd.f32 0.0, %v4231
        %v4233 = vpop.f32.mrf.mxu0
        %v4234 = vadd.f32 0.0, %v4233
        %v4235 = vpop.f32.mrf.mxu0
        %v4236 = vadd.f32 0.0, %v4235
        %v4237 = vpop.f32.mrf.mxu0
        %v4238 = vadd.f32 0.0, %v4237
        %4239 = vmatprep.mubr.bf16.mxu0 0
        %4240 = vmatmul.mubr.bf16.gmra.mxu0 %v4108
        %v4241 = vpop.f32.mrf.mxu0
        %v4242 = vadd.f32 0.0, %v4241
        %v4243 = vpop.f32.mrf.mxu0
        %v4244 = vadd.f32 0.0, %v4243
        %v4245 = vpop.f32.mrf.mxu0
        %v4246 = vadd.f32 0.0, %v4245
        %v4247 = vpop.f32.mrf.mxu0
        %v4248 = vadd.f32 0.0, %v4247
        %4249 = vmatprep.mubr.bf16.mxu0 0
        %4250 = vmatmul.mubr.bf16.gmra.mxu0 %v4111
        %v4251 = vpop.f32.mrf.mxu0
        %v4252 = vadd.f32 0.0, %v4251
        %v4253 = vpop.f32.mrf.mxu0
        %v4254 = vadd.f32 0.0, %v4253
        %v4255 = vpop.f32.mrf.mxu0
        %v4256 = vadd.f32 0.0, %v4255
        %v4257 = vpop.f32.mrf.mxu0
        %v4258 = vadd.f32 0.0, %v4257
        %4259 = vmatprep.mubr.bf16.mxu0 0
        %4260 = vmatmul.mubr.bf16.gmra.mxu0 %v4114
        %v4261 = vpop.f32.mrf.mxu0
        %v4262 = vadd.f32 0.0, %v4261
        %v4263 = vpop.f32.mrf.mxu0
        %v4264 = vadd.f32 0.0, %v4263
        %v4265 = vpop.f32.mrf.mxu0
        %v4266 = vadd.f32 0.0, %v4265
        %v4267 = vpop.f32.mrf.mxu0
        %v4268 = vadd.f32 0.0, %v4267
        %4269 = vmatprep.mubr.bf16.mxu0 0
        %4270 = vmatmul.mubr.bf16.gmra.mxu0 %v4117
        %v4271 = vpop.f32.mrf.mxu0
        %v4272 = vadd.f32 0.0, %v4271
        %v4273 = vpop.f32.mrf.mxu0
        %v4274 = vadd.f32 0.0, %v4273
        %v4275 = vpop.f32.mrf.mxu0
        %v4276 = vadd.f32 0.0, %v4275
        %v4277 = vpop.f32.mrf.mxu0
        %v4278 = vadd.f32 0.0, %v4277
        %4279 = vdwg.mxu0
        %v4280 = vmul.f32 %v4202, 0.17677669
        %v4281 = vmul.f32 %v4204, 0.17677669
        %v4282 = vmul.f32 %v4206, 0.17677669
        %v4283 = vmul.f32 %v4208, 0.17677669
        %v4284 = vmul.f32 %v4212, 0.17677669
        %v4285 = vmul.f32 %v4214, 0.17677669
        %v4286 = vmul.f32 %v4216, 0.17677669
        %v4287 = vmul.f32 %v4218, 0.17677669
        %v4288 = vmul.f32 %v4222, 0.17677669
        %v4289 = vmul.f32 %v4224, 0.17677669
        %v4290 = vmul.f32 %v4226, 0.17677669
        %v4291 = vmul.f32 %v4228, 0.17677669
        %v4292 = vmul.f32 %v4232, 0.17677669
        %v4293 = vmul.f32 %v4234, 0.17677669
        %v4294 = vmul.f32 %v4236, 0.17677669
        %v4295 = vmul.f32 %v4238, 0.17677669
        %v4296 = vmul.f32 %v4242, 0.17677669
        %v4297 = vmul.f32 %v4244, 0.17677669
        %v4298 = vmul.f32 %v4246, 0.17677669
        %v4299 = vmul.f32 %v4248, 0.17677669
        %v4300 = vmul.f32 %v4252, 0.17677669
        %v4301 = vmul.f32 %v4254, 0.17677669
        %v4302 = vmul.f32 %v4256, 0.17677669
        %v4303 = vmul.f32 %v4258, 0.17677669
        %v4304 = vmul.f32 %v4262, 0.17677669
        %v4305 = vmul.f32 %v4264, 0.17677669
        %v4306 = vmul.f32 %v4266, 0.17677669
        %v4307 = vmul.f32 %v4268, 0.17677669
        %v4308 = vmul.f32 %v4272, 0.17677669
        %v4309 = vmul.f32 %v4274, 0.17677669
        %v4310 = vmul.f32 %v4276, 0.17677669
        %v4311 = vmul.f32 %v4278, 0.17677669
        %v4312 = vmax.f32 %v4280, %v4281
        %4313 = vmax.xlane.f32.xlu0 %v4312
        %v4314 = vpop.xlane.xlu0 %4313
        %v4315 = vmax.f32 %v4282, %v4283
        %4316 = vmax.xlane.f32.xlu0 %v4315
        %v4317 = vpop.xlane.xlu0 %4316
        %v4318 = vmax.f32 %v4284, %v4285
        %4319 = vmax.xlane.f32.xlu0 %v4318
        %v4320 = vpop.xlane.xlu0 %4319
        %v4321 = vmax.f32 %v4286, %v4287
        %4322 = vmax.xlane.f32.xlu0 %v4321
        %v4323 = vpop.xlane.xlu0 %4322
        %v4324 = vmax.f32 %v4288, %v4289
        %4325 = vmax.xlane.f32.xlu0 %v4324
        %v4326 = vpop.xlane.xlu0 %4325
        %v4327 = vmax.f32 %v4290, %v4291
        %4328 = vmax.xlane.f32.xlu0 %v4327
        %v4329 = vpop.xlane.xlu0 %4328
        %v4330 = vmax.f32 %v4292, %v4293
        %4331 = vmax.xlane.f32.xlu0 %v4330
        %v4332 = vpop.xlane.xlu0 %4331
        %v4333 = vmax.f32 %v4294, %v4295
        %4334 = vmax.xlane.f32.xlu0 %v4333
        %v4335 = vpop.xlane.xlu0 %4334
        %v4336 = vmax.f32 %v4296, %v4297
        %4337 = vmax.xlane.f32.xlu0 %v4336
        %v4338 = vpop.xlane.xlu0 %4337
        %v4339 = vmax.f32 %v4298, %v4299
        %4340 = vmax.xlane.f32.xlu0 %v4339
        %v4341 = vpop.xlane.xlu0 %4340
        %v4342 = vmax.f32 %v4300, %v4301
        %4343 = vmax.xlane.f32.xlu0 %v4342
        %v4344 = vpop.xlane.xlu0 %4343
        %v4345 = vmax.f32 %v4302, %v4303
        %4346 = vmax.xlane.f32.xlu0 %v4345
        %v4347 = vpop.xlane.xlu0 %4346
        %v4348 = vmax.f32 %v4304, %v4305
        %4349 = vmax.xlane.f32.xlu0 %v4348
        %v4350 = vpop.xlane.xlu0 %4349
        %v4351 = vmax.f32 %v4306, %v4307
        %4352 = vmax.xlane.f32.xlu0 %v4351
        %v4353 = vpop.xlane.xlu0 %4352
        %v4354 = vmax.f32 %v4308, %v4309
        %4355 = vmax.xlane.f32.xlu0 %v4354
        %v4356 = vpop.xlane.xlu0 %4355
        %v4357 = vmax.f32 %v4310, %v4311
        %4358 = vmax.xlane.f32.xlu0 %v4357
        %v4359 = vpop.xlane.xlu0 %4358
        %v4360 = vsub.f32 %v4280, %v4314
        %v4361 = vsub.f32 %v4281, %v4314
        %v4362 = vsub.f32 %v4282, %v4317
        %v4363 = vsub.f32 %v4283, %v4317
        %v4364 = vsub.f32 %v4284, %v4320
        %v4365 = vsub.f32 %v4285, %v4320
        %v4366 = vsub.f32 %v4286, %v4323
        %v4367 = vsub.f32 %v4287, %v4323
        %v4368 = vsub.f32 %v4288, %v4326
        %v4369 = vsub.f32 %v4289, %v4326
        %v4370 = vsub.f32 %v4290, %v4329
        %v4371 = vsub.f32 %v4291, %v4329
        %v4372 = vsub.f32 %v4292, %v4332
        %v4373 = vsub.f32 %v4293, %v4332
        %v4374 = vsub.f32 %v4294, %v4335
        %v4375 = vsub.f32 %v4295, %v4335
        %v4376 = vsub.f32 %v4296, %v4338
        %v4377 = vsub.f32 %v4297, %v4338
        %v4378 = vsub.f32 %v4298, %v4341
        %v4379 = vsub.f32 %v4299, %v4341
        %v4380 = vsub.f32 %v4300, %v4344
        %v4381 = vsub.f32 %v4301, %v4344
        %v4382 = vsub.f32 %v4302, %v4347
        %v4383 = vsub.f32 %v4303, %v4347
        %v4384 = vsub.f32 %v4304, %v4350
        %v4385 = vsub.f32 %v4305, %v4350
        %v4386 = vsub.f32 %v4306, %v4353
        %v4387 = vsub.f32 %v4307, %v4353
        %v4388 = vsub.f32 %v4308, %v4356
        %v4389 = vsub.f32 %v4309, %v4356
        %v4390 = vsub.f32 %v4310, %v4359
        %v4391 = vsub.f32 %v4311, %v4359
        %v4392 = vmul.f32 %v4360, 1.442695
        %v4393 = vpow.pop %v4392
        %v4394 = vmul.f32 %v4361, 1.442695
        %v4395 = vpow.pop %v4394
        %v4396 = vmul.f32 %v4362, 1.442695
        %v4397 = vpow.pop %v4396
        %v4398 = vmul.f32 %v4363, 1.442695
        %v4399 = vpow.pop %v4398
        %v4400 = vmul.f32 %v4364, 1.442695
        %v4401 = vpow.pop %v4400
        %v4402 = vmul.f32 %v4365, 1.442695
        %v4403 = vpow.pop %v4402
        %v4404 = vmul.f32 %v4366, 1.442695
        %v4405 = vpow.pop %v4404
        %v4406 = vmul.f32 %v4367, 1.442695
        %v4407 = vpow.pop %v4406
        %v4408 = vmul.f32 %v4368, 1.442695
        %v4409 = vpow.pop %v4408
        %v4410 = vmul.f32 %v4369, 1.442695
        %v4411 = vpow.pop %v4410
        %v4412 = vmul.f32 %v4370, 1.442695
        %v4413 = vpow.pop %v4412
        %v4414 = vmul.f32 %v4371, 1.442695
        %v4415 = vpow.pop %v4414
        %v4416 = vmul.f32 %v4372, 1.442695
        %v4417 = vpow.pop %v4416
        %v4418 = vmul.f32 %v4373, 1.442695
        %v4419 = vpow.pop %v4418
        %v4420 = vmul.f32 %v4374, 1.442695
        %v4421 = vpow.pop %v4420
        %v4422 = vmul.f32 %v4375, 1.442695
        %v4423 = vpow.pop %v4422
        %v4424 = vmul.f32 %v4376, 1.442695
        %v4425 = vpow.pop %v4424
        %v4426 = vmul.f32 %v4377, 1.442695
        %v4427 = vpow.pop %v4426
        %v4428 = vmul.f32 %v4378, 1.442695
        %v4429 = vpow.pop %v4428
        %v4430 = vmul.f32 %v4379, 1.442695
        %v4431 = vpow.pop %v4430
        %v4432 = vmul.f32 %v4380, 1.442695
        %v4433 = vpow.pop %v4432
        %v4434 = vmul.f32 %v4381, 1.442695
        %v4435 = vpow.pop %v4434
        %v4436 = vmul.f32 %v4382, 1.442695
        %v4437 = vpow.pop %v4436
        %v4438 = vmul.f32 %v4383, 1.442695
        %v4439 = vpow.pop %v4438
        %v4440 = vmul.f32 %v4384, 1.442695
        %v4441 = vpow.pop %v4440
        %v4442 = vmul.f32 %v4385, 1.442695
        %v4443 = vpow.pop %v4442
        %v4444 = vmul.f32 %v4386, 1.442695
        %v4445 = vpow.pop %v4444
        %v4446 = vmul.f32 %v4387, 1.442695
        %v4447 = vpow.pop %v4446
        %v4448 = vmul.f32 %v4388, 1.442695
        %v4449 = vpow.pop %v4448
        %v4450 = vmul.f32 %v4389, 1.442695
        %v4451 = vpow.pop %v4450
        %v4452 = vmul.f32 %v4390, 1.442695
        %v4453 = vpow.pop %v4452
        %v4454 = vmul.f32 %v4391, 1.442695
        %v4455 = vpow.pop %v4454
        %v4456 = vadd.f32 %v4393, %v4395
        %4457 = vadd.xlane.f32.xlu0 %v4456
        %v4458 = vpop.xlane.xlu0 %4457
        %v4459 = vadd.f32 %v4397, %v4399
        %4460 = vadd.xlane.f32.xlu0 %v4459
        %v4461 = vpop.xlane.xlu0 %4460
        %v4462 = vadd.f32 %v4401, %v4403
        %4463 = vadd.xlane.f32.xlu0 %v4462
        %v4464 = vpop.xlane.xlu0 %4463
        %v4465 = vadd.f32 %v4405, %v4407
        %4466 = vadd.xlane.f32.xlu0 %v4465
        %v4467 = vpop.xlane.xlu0 %4466
        %v4468 = vadd.f32 %v4409, %v4411
        %4469 = vadd.xlane.f32.xlu0 %v4468
        %v4470 = vpop.xlane.xlu0 %4469
        %v4471 = vadd.f32 %v4413, %v4415
        %4472 = vadd.xlane.f32.xlu0 %v4471
        %v4473 = vpop.xlane.xlu0 %4472
        %v4474 = vadd.f32 %v4417, %v4419
        %4475 = vadd.xlane.f32.xlu0 %v4474
        %v4476 = vpop.xlane.xlu0 %4475
        %v4477 = vadd.f32 %v4421, %v4423
        %4478 = vadd.xlane.f32.xlu0 %v4477
        %v4479 = vpop.xlane.xlu0 %4478
        %v4480 = vadd.f32 %v4425, %v4427
        %4481 = vadd.xlane.f32.xlu0 %v4480
        %v4482 = vpop.xlane.xlu0 %4481
        %v4483 = vadd.f32 %v4429, %v4431
        %4484 = vadd.xlane.f32.xlu0 %v4483
        %v4485 = vpop.xlane.xlu0 %4484
        %v4486 = vadd.f32 %v4433, %v4435
        %4487 = vadd.xlane.f32.xlu0 %v4486
        %v4488 = vpop.xlane.xlu0 %4487
        %v4489 = vadd.f32 %v4437, %v4439
        %4490 = vadd.xlane.f32.xlu0 %v4489
        %v4491 = vpop.xlane.xlu0 %4490
        %v4492 = vadd.f32 %v4441, %v4443
        %4493 = vadd.xlane.f32.xlu0 %v4492
        %v4494 = vpop.xlane.xlu0 %4493
        %v4495 = vadd.f32 %v4445, %v4447
        %4496 = vadd.xlane.f32.xlu0 %v4495
        %v4497 = vpop.xlane.xlu0 %4496
        %v4498 = vadd.f32 %v4449, %v4451
        %4499 = vadd.xlane.f32.xlu0 %v4498
        %v4500 = vpop.xlane.xlu0 %4499
        %v4501 = vadd.f32 %v4453, %v4455
        %4502 = vadd.xlane.f32.xlu0 %v4501
        %v4503 = vpop.xlane.xlu0 %4502
        %v4504 = vrcp.pop %v4458
        %v4505 = vrcp.pop %v4461
        %v4506 = vrcp.pop %v4464
        %v4507 = vrcp.pop %v4467
        %v4508 = vrcp.pop %v4470
        %v4509 = vrcp.pop %v4473
        %v4510 = vrcp.pop %v4476
        %v4511 = vrcp.pop %v4479
        %v4512 = vrcp.pop %v4482
        %v4513 = vrcp.pop %v4485
        %v4514 = vrcp.pop %v4488
        %v4515 = vrcp.pop %v4491
        %v4516 = vrcp.pop %v4494
        %v4517 = vrcp.pop %v4497
        %v4518 = vrcp.pop %v4500
        %v4519 = vrcp.pop %v4503
        %v4520 = vmul.f32 %v4393, %v4504
        %v4521 = vmul.f32 %v4395, %v4504
        %v4522 = vmul.f32 %v4397, %v4505
        %v4523 = vmul.f32 %v4399, %v4505
        %v4524 = vmul.f32 %v4401, %v4506
        %v4525 = vmul.f32 %v4403, %v4506
        %v4526 = vmul.f32 %v4405, %v4507
        %v4527 = vmul.f32 %v4407, %v4507
        %v4528 = vmul.f32 %v4409, %v4508
        %v4529 = vmul.f32 %v4411, %v4508
        %v4530 = vmul.f32 %v4413, %v4509
        %v4531 = vmul.f32 %v4415, %v4509
        %v4532 = vmul.f32 %v4417, %v4510
        %v4533 = vmul.f32 %v4419, %v4510
        %v4534 = vmul.f32 %v4421, %v4511
        %v4535 = vmul.f32 %v4423, %v4511
        %v4536 = vmul.f32 %v4425, %v4512
        %v4537 = vmul.f32 %v4427, %v4512
        %v4538 = vmul.f32 %v4429, %v4513
        %v4539 = vmul.f32 %v4431, %v4513
        %v4540 = vmul.f32 %v4433, %v4514
        %v4541 = vmul.f32 %v4435, %v4514
        %v4542 = vmul.f32 %v4437, %v4515
        %v4543 = vmul.f32 %v4439, %v4515
        %v4544 = vmul.f32 %v4441, %v4516
        %v4545 = vmul.f32 %v4443, %v4516
        %v4546 = vmul.f32 %v4445, %v4517
        %v4547 = vmul.f32 %v4447, %v4517
        %v4548 = vmul.f32 %v4449, %v4518
        %v4549 = vmul.f32 %v4451, %v4518
        %v4550 = vmul.f32 %v4453, %v4519
        %v4551 = vmul.f32 %v4455, %v4519
        %v4552 = vpack.c.bf16 %v4522, %v4520
        %v4553 = vpack.c.bf16 %v4523, %v4521
        %v4554 = vpack.c.bf16 %v4526, %v4524
        %v4555 = vpack.c.bf16 %v4527, %v4525
        %v4556 = vpack.c.bf16 %v4530, %v4528
        %v4557 = vpack.c.bf16 %v4531, %v4529
        %v4558 = vpack.c.bf16 %v4534, %v4532
        %v4559 = vpack.c.bf16 %v4535, %v4533
        %v4560 = vpack.c.bf16 %v4538, %v4536
        %v4561 = vpack.c.bf16 %v4539, %v4537
        %v4562 = vpack.c.bf16 %v4542, %v4540
        %v4563 = vpack.c.bf16 %v4543, %v4541
        %v4564 = vpack.c.bf16 %v4546, %v4544
        %v4565 = vpack.c.bf16 %v4547, %v4545
        %v4566 = vpack.c.bf16 %v4550, %v4548
        %v4567 = vpack.c.bf16 %v4551, %v4549
        %4568 = vrot.lane.b32.xlu0 %v3244, 64
        %v4569 = vpop.permute.xlu0 %4568
        %4570 = vrot.lane.b32.xlu0 %v3245, 64
        %v4571 = vpop.permute.xlu0 %4570
        %4572 = vrot.lane.b32.xlu0 %v3246, 64
        %v4573 = vpop.permute.xlu0 %4572
        %4574 = vrot.lane.b32.xlu0 %v3247, 64
        %v4575 = vpop.permute.xlu0 %4574
        %4576 = vrot.lane.b32.xlu0 %v3248, 64
        %v4577 = vpop.permute.xlu0 %4576
        %4578 = vrot.lane.b32.xlu0 %v3249, 64
        %v4579 = vpop.permute.xlu0 %4578
        %4580 = vrot.lane.b32.xlu0 %v3250, 64
        %v4581 = vpop.permute.xlu0 %4580
        %4582 = vrot.lane.b32.xlu0 %v3251, 64
        %v4583 = vpop.permute.xlu0 %4582
        %4584 = vrot.lane.b32.xlu0 %v3252, 64
        %v4585 = vpop.permute.xlu0 %4584
        %4586 = vrot.lane.b32.xlu0 %v3253, 64
        %v4587 = vpop.permute.xlu0 %4586
        %4588 = vrot.lane.b32.xlu0 %v3254, 64
        %v4589 = vpop.permute.xlu0 %4588
        %4590 = vrot.lane.b32.xlu0 %v3255, 64
        %v4591 = vpop.permute.xlu0 %4590
        %4592 = vrot.lane.b32.xlu0 %v3256, 64
        %v4593 = vpop.permute.xlu0 %4592
        %4594 = vrot.lane.b32.xlu0 %v3257, 64
        %v4595 = vpop.permute.xlu0 %4594
        %4596 = vrot.lane.b32.xlu0 %v3258, 64
        %v4597 = vpop.permute.xlu0 %4596
        %4598 = vrot.lane.b32.xlu0 %v3259, 64
        %v4599 = vpop.permute.xlu0 %4598
        %4616 = vmatprep.subr.bf16.mxu0 0
        %4617 = vmatpush1.bf16.msra.mxu0 %v4583
        %4618 = vmatprep.subr.bf16.mxu0 0
        %4619 = vmatpush1.bf16.msra.mxu0 %v4581
        %4620 = vmatprep.subr.bf16.mxu0 0
        %4621 = vmatpush1.bf16.msra.mxu0 %v4579
        %4622 = vmatprep.subr.bf16.mxu0 0
        %4623 = vmatpush1.bf16.msra.mxu0 %v4577
        %4624 = vmatprep.subr.bf16.mxu0 0
        %4625 = vmatpush1.bf16.msra.mxu0 %v4575
        %4626 = vmatprep.subr.bf16.mxu0 0
        %4627 = vmatpush1.bf16.msra.mxu0 %v4573
        %4628 = vmatprep.subr.bf16.mxu0 0
        %4629 = vmatpush1.bf16.msra.mxu0 %v4571
        %4630 = vmatprep.subr.bf16.mxu0 0
        %4631 = vmatpush1.bf16.msra.mxu0 %v4569
        %4632 = vmatprep.subr.bf16.mxu0 0
        %4633 = vmatpush2.bf16.msra.mxu0 %v4599
        %4634 = vmatprep.subr.bf16.mxu0 0
        %4635 = vmatpush2.bf16.msra.mxu0 %v4597
        %4636 = vmatprep.subr.bf16.mxu0 0
        %4637 = vmatpush2.bf16.msra.mxu0 %v4595
        %4638 = vmatprep.subr.bf16.mxu0 0
        %4639 = vmatpush2.bf16.msra.mxu0 %v4593
        %4640 = vmatprep.subr.bf16.mxu0 0
        %4641 = vmatpush2.bf16.msra.mxu0 %v4591
        %4642 = vmatprep.subr.bf16.mxu0 0
        %4643 = vmatpush2.bf16.msra.mxu0 %v4589
        %4644 = vmatprep.subr.bf16.mxu0 0
        %4645 = vmatpush2.bf16.msra.mxu0 %v4587
        %4646 = vmatprep.subr.bf16.mxu0 0
        %4647 = vmatpush2.bf16.msra.mxu0 %v4585
        %4648 = vmatprep.mubr.bf16.mxu0 %v4553
        %4649 = vmatmul.mubr.bf16.gmra.mxu0 %v4552
        %v4650 = vpop.f32.mrf.mxu0
        %v4651 = vadd.f32 0.0, %v4650
        %v4652 = vpop.f32.mrf.mxu0
        %v4653 = vpop.f32.mrf.mxu0
        %v4654 = vadd.f32 0.0, %v4653
        %v4655 = vpop.f32.mrf.mxu0
        %4656 = vmatprep.mubr.bf16.mxu0 %v4555
        %4657 = vmatmul.mubr.bf16.gmra.mxu0 %v4554
        %v4658 = vpop.f32.mrf.mxu0
        %v4659 = vadd.f32 0.0, %v4658
        %v4660 = vpop.f32.mrf.mxu0
        %v4661 = vpop.f32.mrf.mxu0
        %v4662 = vadd.f32 0.0, %v4661
        %v4663 = vpop.f32.mrf.mxu0
        %4664 = vmatprep.mubr.bf16.mxu0 %v4557
        %4665 = vmatmul.mubr.bf16.gmra.mxu0 %v4556
        %v4666 = vpop.f32.mrf.mxu0
        %v4667 = vadd.f32 0.0, %v4666
        %v4668 = vpop.f32.mrf.mxu0
        %v4669 = vpop.f32.mrf.mxu0
        %v4670 = vadd.f32 0.0, %v4669
        %v4671 = vpop.f32.mrf.mxu0
        %4672 = vmatprep.mubr.bf16.mxu0 %v4559
        %4673 = vmatmul.mubr.bf16.gmra.mxu0 %v4558
        %v4674 = vpop.f32.mrf.mxu0
        %v4675 = vadd.f32 0.0, %v4674
        %v4676 = vpop.f32.mrf.mxu0
        %v4677 = vpop.f32.mrf.mxu0
        %v4678 = vadd.f32 0.0, %v4677
        %v4679 = vpop.f32.mrf.mxu0
        %4680 = vmatprep.mubr.bf16.mxu0 %v4561
        %4681 = vmatmul.mubr.bf16.gmra.mxu0 %v4560
        %v4682 = vpop.f32.mrf.mxu0
        %v4683 = vadd.f32 0.0, %v4682
        %v4684 = vpop.f32.mrf.mxu0
        %v4685 = vpop.f32.mrf.mxu0
        %v4686 = vadd.f32 0.0, %v4685
        %v4687 = vpop.f32.mrf.mxu0
        %4688 = vmatprep.mubr.bf16.mxu0 %v4563
        %4689 = vmatmul.mubr.bf16.gmra.mxu0 %v4562
        %v4690 = vpop.f32.mrf.mxu0
        %v4691 = vadd.f32 0.0, %v4690
        %v4692 = vpop.f32.mrf.mxu0
        %v4693 = vpop.f32.mrf.mxu0
        %v4694 = vadd.f32 0.0, %v4693
        %v4695 = vpop.f32.mrf.mxu0
        %4696 = vmatprep.mubr.bf16.mxu0 %v4565
        %4697 = vmatmul.mubr.bf16.gmra.mxu0 %v4564
        %v4698 = vpop.f32.mrf.mxu0
        %v4699 = vadd.f32 0.0, %v4698
        %v4700 = vpop.f32.mrf.mxu0
        %v4701 = vpop.f32.mrf.mxu0
        %v4702 = vadd.f32 0.0, %v4701
        %v4703 = vpop.f32.mrf.mxu0
        %4704 = vmatprep.mubr.bf16.mxu0 %v4567
        %4705 = vmatmul.mubr.bf16.gmra.mxu0 %v4566
        %v4706 = vpop.f32.mrf.mxu0
        %v4707 = vadd.f32 0.0, %v4706
        %v4708 = vpop.f32.mrf.mxu0
        %v4709 = vpop.f32.mrf.mxu0
        %v4710 = vadd.f32 0.0, %v4709
        %v4711 = vpop.f32.mrf.mxu0
        %4712 = vdwg.mxu0
        %4713 = vrot.lane.b32.xlu0 %v2554, 32
        %v4714 = vpop.permute.xlu0 %4713
        %4715 = vrot.lane.b32.xlu0 %v2555, 32
        %v4716 = vpop.permute.xlu0 %4715
        %4717 = vrot.lane.b32.xlu0 %v2556, 32
        %v4718 = vpop.permute.xlu0 %4717
        %4719 = vrot.lane.b32.xlu0 %v2557, 32
        %v4720 = vpop.permute.xlu0 %4719
        %4721 = vrot.lane.b32.xlu0 %v2558, 32
        %v4722 = vpop.permute.xlu0 %4721
        %4723 = vrot.lane.b32.xlu0 %v2559, 32
        %v4724 = vpop.permute.xlu0 %4723
        %4725 = vrot.lane.b32.xlu0 %v2560, 32
        %v4726 = vpop.permute.xlu0 %4725
        %4727 = vrot.lane.b32.xlu0 %v2561, 32
        %v4728 = vpop.permute.xlu0 %4727
        %4729 = vrot.lane.b32.xlu0 %v2690, 32
        %v4730 = vpop.permute.xlu0 %4729
        %4731 = vrot.lane.b32.xlu0 %v2691, 32
        %v4732 = vpop.permute.xlu0 %4731
        %4733 = vrot.lane.b32.xlu0 %v2692, 32
        %v4734 = vpop.permute.xlu0 %4733
        %4735 = vrot.lane.b32.xlu0 %v2693, 32
        %v4736 = vpop.permute.xlu0 %4735
        %4737 = vrot.lane.b32.xlu0 %v2694, 32
        %v4738 = vpop.permute.xlu0 %4737
        %4739 = vrot.lane.b32.xlu0 %v2695, 32
        %v4740 = vpop.permute.xlu0 %4739
        %4741 = vrot.lane.b32.xlu0 %v2696, 32
        %v4742 = vpop.permute.xlu0 %4741
        %4743 = vrot.lane.b32.xlu0 %v2697, 32
        %v4744 = vpop.permute.xlu0 %4743
        %4745 = vrot.lane.b32.xlu0 %v2698, 32
        %v4746 = vpop.permute.xlu0 %4745
        %4747 = vrot.lane.b32.xlu0 %v2699, 32
        %v4748 = vpop.permute.xlu0 %4747
        %4749 = vrot.lane.b32.xlu0 %v2700, 32
        %v4750 = vpop.permute.xlu0 %4749
        %4751 = vrot.lane.b32.xlu0 %v2701, 32
        %v4752 = vpop.permute.xlu0 %4751
        %4753 = vrot.lane.b32.xlu0 %v2702, 32
        %v4754 = vpop.permute.xlu0 %4753
        %4755 = vrot.lane.b32.xlu0 %v2703, 32
        %v4756 = vpop.permute.xlu0 %4755
        %4757 = vrot.lane.b32.xlu0 %v2704, 32
        %v4758 = vpop.permute.xlu0 %4757
        %4759 = vrot.lane.b32.xlu0 %v2705, 32
        %v4760 = vpop.permute.xlu0 %4759
        %v4762 = vsel %vm2706, %v4714, 0
        %v4765 = vsel %vm2706, %v4716, 0
        %v4768 = vsel %vm2706, %v4718, 0
        %v4771 = vsel %vm2706, %v4720, 0
        %v4774 = vsel %vm2706, %v4722, 0
        %v4777 = vsel %vm2706, %v4724, 0
        %v4780 = vsel %vm2706, %v4726, 0
        %v4783 = vsel %vm2706, %v4728, 0
        %v4786 = vsel %vm2706, %v4730, 0
        %v4789 = vsel %vm2706, %v4732, 0
        %v4792 = vsel %vm2706, %v4734, 0
        %v4795 = vsel %vm2706, %v4736, 0
        %v4798 = vsel %vm2706, %v4738, 0
        %v4801 = vsel %vm2706, %v4740, 0
        %v4804 = vsel %vm2706, %v4742, 0
        %v4807 = vsel %vm2706, %v4744, 0
        %v4810 = vsel %vm2706, %v4746, 0
        %v4813 = vsel %vm2706, %v4748, 0
        %v4816 = vsel %vm2706, %v4750, 0
        %v4819 = vsel %vm2706, %v4752, 0
        %v4822 = vsel %vm2706, %v4754, 0
        %v4825 = vsel %vm2706, %v4756, 0
        %v4828 = vsel %vm2706, %v4758, 0
        %v4831 = vsel %vm2706, %v4760, 0
        %4833 = vmatprep.subr.bf16.mxu0 0
        %4834 = vmatpush1.bf16.xpose.msra.mxu0 %v4807
        %4835 = vmatprep.subr.bf16.mxu0 0
        %4836 = vmatpush1.bf16.xpose.msra.mxu0 %v4804
        %4837 = vmatprep.subr.bf16.mxu0 0
        %4838 = vmatpush1.bf16.xpose.msra.mxu0 %v4801
        %4839 = vmatprep.subr.bf16.mxu0 0
        %4840 = vmatpush1.bf16.xpose.msra.mxu0 %v4798
        %4841 = vmatprep.subr.bf16.mxu0 0
        %4842 = vmatpush1.bf16.xpose.msra.mxu0 %v4795
        %4843 = vmatprep.subr.bf16.mxu0 0
        %4844 = vmatpush1.bf16.xpose.msra.mxu0 %v4792
        %4845 = vmatprep.subr.bf16.mxu0 0
        %4846 = vmatpush1.bf16.xpose.msra.mxu0 %v4789
        %4847 = vmatprep.subr.bf16.mxu0 0
        %4848 = vmatpush1.bf16.xpose.msra.mxu0 %v4786
        %4849 = vmatprep.subr.bf16.mxu0 0
        %4850 = vmatpush2.bf16.xpose.msra.mxu0 %v4831
        %4851 = vmatprep.subr.bf16.mxu0 0
        %4852 = vmatpush2.bf16.xpose.msra.mxu0 %v4828
        %4853 = vmatprep.subr.bf16.mxu0 0
        %4854 = vmatpush2.bf16.xpose.msra.mxu0 %v4825
        %4855 = vmatprep.subr.bf16.mxu0 0
        %4856 = vmatpush2.bf16.xpose.msra.mxu0 %v4822
        %4857 = vmatprep.subr.bf16.mxu0 0
        %4858 = vmatpush2.bf16.xpose.msra.mxu0 %v4819
        %4859 = vmatprep.subr.bf16.mxu0 0
        %4860 = vmatpush2.bf16.xpose.msra.mxu0 %v4816
        %4861 = vmatprep.subr.bf16.mxu0 0
        %4862 = vmatpush2.bf16.xpose.msra.mxu0 %v4813
        %4863 = vmatprep.subr.bf16.mxu0 0
        %4864 = vmatpush2.bf16.xpose.msra.mxu0 %v4810
        %4865 = vmatprep.mubr.bf16.mxu0 0
        %4866 = vmatmul.mubr.bf16.gmra.mxu0 %v4762
        %v4867 = vpop.f32.mrf.mxu0
        %v4868 = vadd.f32 0.0, %v4867
        %v4869 = vpop.f32.mrf.mxu0
        %v4870 = vadd.f32 0.0, %v4869
        %v4871 = vpop.f32.mrf.mxu0
        %v4872 = vadd.f32 0.0, %v4871
        %v4873 = vpop.f32.mrf.mxu0
        %v4874 = vadd.f32 0.0, %v4873
        %4875 = vmatprep.mubr.bf16.mxu0 0
        %4876 = vmatmul.mubr.bf16.gmra.mxu0 %v4765
        %v4877 = vpop.f32.mrf.mxu0
        %v4878 = vadd.f32 0.0, %v4877
        %v4879 = vpop.f32.mrf.mxu0
        %v4880 = vadd.f32 0.0, %v4879
        %v4881 = vpop.f32.mrf.mxu0
        %v4882 = vadd.f32 0.0, %v4881
        %v4883 = vpop.f32.mrf.mxu0
        %v4884 = vadd.f32 0.0, %v4883
        %4885 = vmatprep.mubr.bf16.mxu0 0
        %4886 = vmatmul.mubr.bf16.gmra.mxu0 %v4768
        %v4887 = vpop.f32.mrf.mxu0
        %v4888 = vadd.f32 0.0, %v4887
        %v4889 = vpop.f32.mrf.mxu0
        %v4890 = vadd.f32 0.0, %v4889
        %v4891 = vpop.f32.mrf.mxu0
        %v4892 = vadd.f32 0.0, %v4891
        %v4893 = vpop.f32.mrf.mxu0
        %v4894 = vadd.f32 0.0, %v4893
        %4895 = vmatprep.mubr.bf16.mxu0 0
        %4896 = vmatmul.mubr.bf16.gmra.mxu0 %v4771
        %v4897 = vpop.f32.mrf.mxu0
        %v4898 = vadd.f32 0.0, %v4897
        %v4899 = vpop.f32.mrf.mxu0
        %v4900 = vadd.f32 0.0, %v4899
        %v4901 = vpop.f32.mrf.mxu0
        %v4902 = vadd.f32 0.0, %v4901
        %v4903 = vpop.f32.mrf.mxu0
        %v4904 = vadd.f32 0.0, %v4903
        %4905 = vmatprep.mubr.bf16.mxu0 0
        %4906 = vmatmul.mubr.bf16.gmra.mxu0 %v4774
        %v4907 = vpop.f32.mrf.mxu0
        %v4908 = vadd.f32 0.0, %v4907
        %v4909 = vpop.f32.mrf.mxu0
        %v4910 = vadd.f32 0.0, %v4909
        %v4911 = vpop.f32.mrf.mxu0
        %v4912 = vadd.f32 0.0, %v4911
        %v4913 = vpop.f32.mrf.mxu0
        %v4914 = vadd.f32 0.0, %v4913
        %4915 = vmatprep.mubr.bf16.mxu0 0
        %4916 = vmatmul.mubr.bf16.gmra.mxu0 %v4777
        %v4917 = vpop.f32.mrf.mxu0
        %v4918 = vadd.f32 0.0, %v4917
        %v4919 = vpop.f32.mrf.mxu0
        %v4920 = vadd.f32 0.0, %v4919
        %v4921 = vpop.f32.mrf.mxu0
        %v4922 = vadd.f32 0.0, %v4921
        %v4923 = vpop.f32.mrf.mxu0
        %v4924 = vadd.f32 0.0, %v4923
        %4925 = vmatprep.mubr.bf16.mxu0 0
        %4926 = vmatmul.mubr.bf16.gmra.mxu0 %v4780
        %v4927 = vpop.f32.mrf.mxu0
        %v4928 = vadd.f32 0.0, %v4927
        %v4929 = vpop.f32.mrf.mxu0
        %v4930 = vadd.f32 0.0, %v4929
        %v4931 = vpop.f32.mrf.mxu0
        %v4932 = vadd.f32 0.0, %v4931
        %v4933 = vpop.f32.mrf.mxu0
        %v4934 = vadd.f32 0.0, %v4933
        %4935 = vmatprep.mubr.bf16.mxu0 0
        %4936 = vmatmul.mubr.bf16.gmra.mxu0 %v4783
        %v4937 = vpop.f32.mrf.mxu0
        %v4938 = vadd.f32 0.0, %v4937
        %v4939 = vpop.f32.mrf.mxu0
        %v4940 = vadd.f32 0.0, %v4939
        %v4941 = vpop.f32.mrf.mxu0
        %v4942 = vadd.f32 0.0, %v4941
        %v4943 = vpop.f32.mrf.mxu0
        %v4944 = vadd.f32 0.0, %v4943
        %4945 = vdwg.mxu0
        %v4946 = vmul.f32 %v4868, 0.17677669
        %v4947 = vmul.f32 %v4870, 0.17677669
        %v4948 = vmul.f32 %v4872, 0.17677669
        %v4949 = vmul.f32 %v4874, 0.17677669
        %v4950 = vmul.f32 %v4878, 0.17677669
        %v4951 = vmul.f32 %v4880, 0.17677669
        %v4952 = vmul.f32 %v4882, 0.17677669
        %v4953 = vmul.f32 %v4884, 0.17677669
        %v4954 = vmul.f32 %v4888, 0.17677669
        %v4955 = vmul.f32 %v4890, 0.17677669
        %v4956 = vmul.f32 %v4892, 0.17677669
        %v4957 = vmul.f32 %v4894, 0.17677669
        %v4958 = vmul.f32 %v4898, 0.17677669
        %v4959 = vmul.f32 %v4900, 0.17677669
        %v4960 = vmul.f32 %v4902, 0.17677669
        %v4961 = vmul.f32 %v4904, 0.17677669
        %v4962 = vmul.f32 %v4908, 0.17677669
        %v4963 = vmul.f32 %v4910, 0.17677669
        %v4964 = vmul.f32 %v4912, 0.17677669
        %v4965 = vmul.f32 %v4914, 0.17677669
        %v4966 = vmul.f32 %v4918, 0.17677669
        %v4967 = vmul.f32 %v4920, 0.17677669
        %v4968 = vmul.f32 %v4922, 0.17677669
        %v4969 = vmul.f32 %v4924, 0.17677669
        %v4970 = vmul.f32 %v4928, 0.17677669
        %v4971 = vmul.f32 %v4930, 0.17677669
        %v4972 = vmul.f32 %v4932, 0.17677669
        %v4973 = vmul.f32 %v4934, 0.17677669
        %v4974 = vmul.f32 %v4938, 0.17677669
        %v4975 = vmul.f32 %v4940, 0.17677669
        %v4976 = vmul.f32 %v4942, 0.17677669
        %v4977 = vmul.f32 %v4944, 0.17677669
        %v4978 = vmax.f32 %v4946, %v4947
        %4979 = vmax.xlane.f32.xlu0 %v4978
        %v4980 = vpop.xlane.xlu0 %4979
        %v4981 = vmax.f32 %v4948, %v4949
        %4982 = vmax.xlane.f32.xlu0 %v4981
        %v4983 = vpop.xlane.xlu0 %4982
        %v4984 = vmax.f32 %v4950, %v4951
        %4985 = vmax.xlane.f32.xlu0 %v4984
        %v4986 = vpop.xlane.xlu0 %4985
        %v4987 = vmax.f32 %v4952, %v4953
        %4988 = vmax.xlane.f32.xlu0 %v4987
        %v4989 = vpop.xlane.xlu0 %4988
        %v4990 = vmax.f32 %v4954, %v4955
        %4991 = vmax.xlane.f32.xlu0 %v4990
        %v4992 = vpop.xlane.xlu0 %4991
        %v4993 = vmax.f32 %v4956, %v4957
        %4994 = vmax.xlane.f32.xlu0 %v4993
        %v4995 = vpop.xlane.xlu0 %4994
        %v4996 = vmax.f32 %v4958, %v4959
        %4997 = vmax.xlane.f32.xlu0 %v4996
        %v4998 = vpop.xlane.xlu0 %4997
        %v4999 = vmax.f32 %v4960, %v4961
        %5000 = vmax.xlane.f32.xlu0 %v4999
        %v5001 = vpop.xlane.xlu0 %5000
        %v5002 = vmax.f32 %v4962, %v4963
        %5003 = vmax.xlane.f32.xlu0 %v5002
        %v5004 = vpop.xlane.xlu0 %5003
        %v5005 = vmax.f32 %v4964, %v4965
        %5006 = vmax.xlane.f32.xlu0 %v5005
        %v5007 = vpop.xlane.xlu0 %5006
        %v5008 = vmax.f32 %v4966, %v4967
        %5009 = vmax.xlane.f32.xlu0 %v5008
        %v5010 = vpop.xlane.xlu0 %5009
        %v5011 = vmax.f32 %v4968, %v4969
        %5012 = vmax.xlane.f32.xlu0 %v5011
        %v5013 = vpop.xlane.xlu0 %5012
        %v5014 = vmax.f32 %v4970, %v4971
        %5015 = vmax.xlane.f32.xlu0 %v5014
        %v5016 = vpop.xlane.xlu0 %5015
        %v5017 = vmax.f32 %v4972, %v4973
        %5018 = vmax.xlane.f32.xlu0 %v5017
        %v5019 = vpop.xlane.xlu0 %5018
        %v5020 = vmax.f32 %v4974, %v4975
        %5021 = vmax.xlane.f32.xlu0 %v5020
        %v5022 = vpop.xlane.xlu0 %5021
        %v5023 = vmax.f32 %v4976, %v4977
        %5024 = vmax.xlane.f32.xlu0 %v5023
        %v5025 = vpop.xlane.xlu0 %5024
        %v5026 = vsub.f32 %v4946, %v4980
        %v5027 = vsub.f32 %v4947, %v4980
        %v5028 = vsub.f32 %v4948, %v4983
        %v5029 = vsub.f32 %v4949, %v4983
        %v5030 = vsub.f32 %v4950, %v4986
        %v5031 = vsub.f32 %v4951, %v4986
        %v5032 = vsub.f32 %v4952, %v4989
        %v5033 = vsub.f32 %v4953, %v4989
        %v5034 = vsub.f32 %v4954, %v4992
        %v5035 = vsub.f32 %v4955, %v4992
        %v5036 = vsub.f32 %v4956, %v4995
        %v5037 = vsub.f32 %v4957, %v4995
        %v5038 = vsub.f32 %v4958, %v4998
        %v5039 = vsub.f32 %v4959, %v4998
        %v5040 = vsub.f32 %v4960, %v5001
        %v5041 = vsub.f32 %v4961, %v5001
        %v5042 = vsub.f32 %v4962, %v5004
        %v5043 = vsub.f32 %v4963, %v5004
        %v5044 = vsub.f32 %v4964, %v5007
        %v5045 = vsub.f32 %v4965, %v5007
        %v5046 = vsub.f32 %v4966, %v5010
        %v5047 = vsub.f32 %v4967, %v5010
        %v5048 = vsub.f32 %v4968, %v5013
        %v5049 = vsub.f32 %v4969, %v5013
        %v5050 = vsub.f32 %v4970, %v5016
        %v5051 = vsub.f32 %v4971, %v5016
        %v5052 = vsub.f32 %v4972, %v5019
        %v5053 = vsub.f32 %v4973, %v5019
        %v5054 = vsub.f32 %v4974, %v5022
        %v5055 = vsub.f32 %v4975, %v5022
        %v5056 = vsub.f32 %v4976, %v5025
        %v5057 = vsub.f32 %v4977, %v5025
        %v5058 = vmul.f32 %v5026, 1.442695
        %v5059 = vpow.pop %v5058
        %v5060 = vmul.f32 %v5027, 1.442695
        %v5061 = vpow.pop %v5060
        %v5062 = vmul.f32 %v5028, 1.442695
        %v5063 = vpow.pop %v5062
        %v5064 = vmul.f32 %v5029, 1.442695
        %v5065 = vpow.pop %v5064
        %v5066 = vmul.f32 %v5030, 1.442695
        %v5067 = vpow.pop %v5066
        %v5068 = vmul.f32 %v5031, 1.442695
        %v5069 = vpow.pop %v5068
        %v5070 = vmul.f32 %v5032, 1.442695
        %v5071 = vpow.pop %v5070
        %v5072 = vmul.f32 %v5033, 1.442695
        %v5073 = vpow.pop %v5072
        %v5074 = vmul.f32 %v5034, 1.442695
        %v5075 = vpow.pop %v5074
        %v5076 = vmul.f32 %v5035, 1.442695
        %v5077 = vpow.pop %v5076
        %v5078 = vmul.f32 %v5036, 1.442695
        %v5079 = vpow.pop %v5078
        %v5080 = vmul.f32 %v5037, 1.442695
        %v5081 = vpow.pop %v5080
        %v5082 = vmul.f32 %v5038, 1.442695
        %v5083 = vpow.pop %v5082
        %v5084 = vmul.f32 %v5039, 1.442695
        %v5085 = vpow.pop %v5084
        %v5086 = vmul.f32 %v5040, 1.442695
        %v5087 = vpow.pop %v5086
        %v5088 = vmul.f32 %v5041, 1.442695
        %v5089 = vpow.pop %v5088
        %v5090 = vmul.f32 %v5042, 1.442695
        %v5091 = vpow.pop %v5090
        %v5092 = vmul.f32 %v5043, 1.442695
        %v5093 = vpow.pop %v5092
        %v5094 = vmul.f32 %v5044, 1.442695
        %v5095 = vpow.pop %v5094
        %v5096 = vmul.f32 %v5045, 1.442695
        %v5097 = vpow.pop %v5096
        %v5098 = vmul.f32 %v5046, 1.442695
        %v5099 = vpow.pop %v5098
        %v5100 = vmul.f32 %v5047, 1.442695
        %v5101 = vpow.pop %v5100
        %v5102 = vmul.f32 %v5048, 1.442695
        %v5103 = vpow.pop %v5102
        %v5104 = vmul.f32 %v5049, 1.442695
        %v5105 = vpow.pop %v5104
        %v5106 = vmul.f32 %v5050, 1.442695
        %v5107 = vpow.pop %v5106
        %v5108 = vmul.f32 %v5051, 1.442695
        %v5109 = vpow.pop %v5108
        %v5110 = vmul.f32 %v5052, 1.442695
        %v5111 = vpow.pop %v5110
        %v5112 = vmul.f32 %v5053, 1.442695
        %v5113 = vpow.pop %v5112
        %v5114 = vmul.f32 %v5054, 1.442695
        %v5115 = vpow.pop %v5114
        %v5116 = vmul.f32 %v5055, 1.442695
        %v5117 = vpow.pop %v5116
        %v5118 = vmul.f32 %v5056, 1.442695
        %v5119 = vpow.pop %v5118
        %v5120 = vmul.f32 %v5057, 1.442695
        %v5121 = vpow.pop %v5120
        %v5122 = vadd.f32 %v5059, %v5061
        %5123 = vadd.xlane.f32.xlu0 %v5122
        %v5124 = vpop.xlane.xlu0 %5123
        %v5125 = vadd.f32 %v5063, %v5065
        %5126 = vadd.xlane.f32.xlu0 %v5125
        %v5127 = vpop.xlane.xlu0 %5126
        %v5128 = vadd.f32 %v5067, %v5069
        %5129 = vadd.xlane.f32.xlu0 %v5128
        %v5130 = vpop.xlane.xlu0 %5129
        %v5131 = vadd.f32 %v5071, %v5073
        %5132 = vadd.xlane.f32.xlu0 %v5131
        %v5133 = vpop.xlane.xlu0 %5132
        %v5134 = vadd.f32 %v5075, %v5077
        %5135 = vadd.xlane.f32.xlu0 %v5134
        %v5136 = vpop.xlane.xlu0 %5135
        %v5137 = vadd.f32 %v5079, %v5081
        %5138 = vadd.xlane.f32.xlu0 %v5137
        %v5139 = vpop.xlane.xlu0 %5138
        %v5140 = vadd.f32 %v5083, %v5085
        %5141 = vadd.xlane.f32.xlu0 %v5140
        %v5142 = vpop.xlane.xlu0 %5141
        %v5143 = vadd.f32 %v5087, %v5089
        %5144 = vadd.xlane.f32.xlu0 %v5143
        %v5145 = vpop.xlane.xlu0 %5144
        %v5146 = vadd.f32 %v5091, %v5093
        %5147 = vadd.xlane.f32.xlu0 %v5146
        %v5148 = vpop.xlane.xlu0 %5147
        %v5149 = vadd.f32 %v5095, %v5097
        %5150 = vadd.xlane.f32.xlu0 %v5149
        %v5151 = vpop.xlane.xlu0 %5150
        %v5152 = vadd.f32 %v5099, %v5101
        %5153 = vadd.xlane.f32.xlu0 %v5152
        %v5154 = vpop.xlane.xlu0 %5153
        %v5155 = vadd.f32 %v5103, %v5105
        %5156 = vadd.xlane.f32.xlu0 %v5155
        %v5157 = vpop.xlane.xlu0 %5156
        %v5158 = vadd.f32 %v5107, %v5109
        %5159 = vadd.xlane.f32.xlu0 %v5158
        %v5160 = vpop.xlane.xlu0 %5159
        %v5161 = vadd.f32 %v5111, %v5113
        %5162 = vadd.xlane.f32.xlu0 %v5161
        %v5163 = vpop.xlane.xlu0 %5162
        %v5164 = vadd.f32 %v5115, %v5117
        %5165 = vadd.xlane.f32.xlu0 %v5164
        %v5166 = vpop.xlane.xlu0 %5165
        %v5167 = vadd.f32 %v5119, %v5121
        %5168 = vadd.xlane.f32.xlu0 %v5167
        %v5169 = vpop.xlane.xlu0 %5168
        %v5170 = vrcp.pop %v5124
        %v5171 = vrcp.pop %v5127
        %v5172 = vrcp.pop %v5130
        %v5173 = vrcp.pop %v5133
        %v5174 = vrcp.pop %v5136
        %v5175 = vrcp.pop %v5139
        %v5176 = vrcp.pop %v5142
        %v5177 = vrcp.pop %v5145
        %v5178 = vrcp.pop %v5148
        %v5179 = vrcp.pop %v5151
        %v5180 = vrcp.pop %v5154
        %v5181 = vrcp.pop %v5157
        %v5182 = vrcp.pop %v5160
        %v5183 = vrcp.pop %v5163
        %v5184 = vrcp.pop %v5166
        %v5185 = vrcp.pop %v5169
        %v5186 = vmul.f32 %v5059, %v5170
        %v5187 = vmul.f32 %v5061, %v5170
        %v5188 = vmul.f32 %v5063, %v5171
        %v5189 = vmul.f32 %v5065, %v5171
        %v5190 = vmul.f32 %v5067, %v5172
        %v5191 = vmul.f32 %v5069, %v5172
        %v5192 = vmul.f32 %v5071, %v5173
        %v5193 = vmul.f32 %v5073, %v5173
        %v5194 = vmul.f32 %v5075, %v5174
        %v5195 = vmul.f32 %v5077, %v5174
        %v5196 = vmul.f32 %v5079, %v5175
        %v5197 = vmul.f32 %v5081, %v5175
        %v5198 = vmul.f32 %v5083, %v5176
        %v5199 = vmul.f32 %v5085, %v5176
        %v5200 = vmul.f32 %v5087, %v5177
        %v5201 = vmul.f32 %v5089, %v5177
        %v5202 = vmul.f32 %v5091, %v5178
        %v5203 = vmul.f32 %v5093, %v5178
        %v5204 = vmul.f32 %v5095, %v5179
        %v5205 = vmul.f32 %v5097, %v5179
        %v5206 = vmul.f32 %v5099, %v5180
        %v5207 = vmul.f32 %v5101, %v5180
        %v5208 = vmul.f32 %v5103, %v5181
        %v5209 = vmul.f32 %v5105, %v5181
        %v5210 = vmul.f32 %v5107, %v5182
        %v5211 = vmul.f32 %v5109, %v5182
        %v5212 = vmul.f32 %v5111, %v5183
        %v5213 = vmul.f32 %v5113, %v5183
        %v5214 = vmul.f32 %v5115, %v5184
        %v5215 = vmul.f32 %v5117, %v5184
        %v5216 = vmul.f32 %v5119, %v5185
        %v5217 = vmul.f32 %v5121, %v5185
        %v5218 = vpack.c.bf16 %v5188, %v5186
        %v5219 = vpack.c.bf16 %v5189, %v5187
        %v5220 = vpack.c.bf16 %v5192, %v5190
        %v5221 = vpack.c.bf16 %v5193, %v5191
        %v5222 = vpack.c.bf16 %v5196, %v5194
        %v5223 = vpack.c.bf16 %v5197, %v5195
        %v5224 = vpack.c.bf16 %v5200, %v5198
        %v5225 = vpack.c.bf16 %v5201, %v5199
        %v5226 = vpack.c.bf16 %v5204, %v5202
        %v5227 = vpack.c.bf16 %v5205, %v5203
        %v5228 = vpack.c.bf16 %v5208, %v5206
        %v5229 = vpack.c.bf16 %v5209, %v5207
        %v5230 = vpack.c.bf16 %v5212, %v5210
        %v5231 = vpack.c.bf16 %v5213, %v5211
        %v5232 = vpack.c.bf16 %v5216, %v5214
        %v5233 = vpack.c.bf16 %v5217, %v5215
        %5234 = vrot.lane.b32.xlu0 %v3244, 32
        %v5235 = vpop.permute.xlu0 %5234
        %5236 = vrot.lane.b32.xlu0 %v3245, 32
        %v5237 = vpop.permute.xlu0 %5236
        %5238 = vrot.lane.b32.xlu0 %v3246, 32
        %v5239 = vpop.permute.xlu0 %5238
        %5240 = vrot.lane.b32.xlu0 %v3247, 32
        %v5241 = vpop.permute.xlu0 %5240
        %5242 = vrot.lane.b32.xlu0 %v3248, 32
        %v5243 = vpop.permute.xlu0 %5242
        %5244 = vrot.lane.b32.xlu0 %v3249, 32
        %v5245 = vpop.permute.xlu0 %5244
        %5246 = vrot.lane.b32.xlu0 %v3250, 32
        %v5247 = vpop.permute.xlu0 %5246
        %5248 = vrot.lane.b32.xlu0 %v3251, 32
        %v5249 = vpop.permute.xlu0 %5248
        %5250 = vrot.lane.b32.xlu0 %v3252, 32
        %v5251 = vpop.permute.xlu0 %5250
        %5252 = vrot.lane.b32.xlu0 %v3253, 32
        %v5253 = vpop.permute.xlu0 %5252
        %5254 = vrot.lane.b32.xlu0 %v3254, 32
        %v5255 = vpop.permute.xlu0 %5254
        %5256 = vrot.lane.b32.xlu0 %v3255, 32
        %v5257 = vpop.permute.xlu0 %5256
        %5258 = vrot.lane.b32.xlu0 %v3256, 32
        %v5259 = vpop.permute.xlu0 %5258
        %5260 = vrot.lane.b32.xlu0 %v3257, 32
        %v5261 = vpop.permute.xlu0 %5260
        %5262 = vrot.lane.b32.xlu0 %v3258, 32
        %v5263 = vpop.permute.xlu0 %5262
        %5264 = vrot.lane.b32.xlu0 %v3259, 32
        %v5265 = vpop.permute.xlu0 %5264
        %5282 = vmatprep.subr.bf16.mxu0 0
        %5283 = vmatpush1.bf16.msra.mxu0 %v5249
        %5284 = vmatprep.subr.bf16.mxu0 0
        %5285 = vmatpush1.bf16.msra.mxu0 %v5247
        %5286 = vmatprep.subr.bf16.mxu0 0
        %5287 = vmatpush1.bf16.msra.mxu0 %v5245
        %5288 = vmatprep.subr.bf16.mxu0 0
        %5289 = vmatpush1.bf16.msra.mxu0 %v5243
        %5290 = vmatprep.subr.bf16.mxu0 0
        %5291 = vmatpush1.bf16.msra.mxu0 %v5241
        %5292 = vmatprep.subr.bf16.mxu0 0
        %5293 = vmatpush1.bf16.msra.mxu0 %v5239
        %5294 = vmatprep.subr.bf16.mxu0 0
        %5295 = vmatpush1.bf16.msra.mxu0 %v5237
        %5296 = vmatprep.subr.bf16.mxu0 0
        %5297 = vmatpush1.bf16.msra.mxu0 %v5235
        %5298 = vmatprep.subr.bf16.mxu0 0
        %5299 = vmatpush2.bf16.msra.mxu0 %v5265
        %5300 = vmatprep.subr.bf16.mxu0 0
        %5301 = vmatpush2.bf16.msra.mxu0 %v5263
        %5302 = vmatprep.subr.bf16.mxu0 0
        %5303 = vmatpush2.bf16.msra.mxu0 %v5261
        %5304 = vmatprep.subr.bf16.mxu0 0
        %5305 = vmatpush2.bf16.msra.mxu0 %v5259
        %5306 = vmatprep.subr.bf16.mxu0 0
        %5307 = vmatpush2.bf16.msra.mxu0 %v5257
        %5308 = vmatprep.subr.bf16.mxu0 0
        %5309 = vmatpush2.bf16.msra.mxu0 %v5255
        %5310 = vmatprep.subr.bf16.mxu0 0
        %5311 = vmatpush2.bf16.msra.mxu0 %v5253
        %5312 = vmatprep.subr.bf16.mxu0 0
        %5313 = vmatpush2.bf16.msra.mxu0 %v5251
        %5314 = vmatprep.mubr.bf16.mxu0 %v5219
        %5315 = vmatmul.mubr.bf16.gmra.mxu0 %v5218
        %v5316 = vpop.f32.mrf.mxu0
        %v5317 = vadd.f32 0.0, %v5316
        %v5318 = vpop.f32.mrf.mxu0
        %v5319 = vpop.f32.mrf.mxu0
        %v5320 = vadd.f32 0.0, %v5319
        %v5321 = vpop.f32.mrf.mxu0
        %5322 = vmatprep.mubr.bf16.mxu0 %v5221
        %5323 = vmatmul.mubr.bf16.gmra.mxu0 %v5220
        %v5324 = vpop.f32.mrf.mxu0
        %v5325 = vadd.f32 0.0, %v5324
        %v5326 = vpop.f32.mrf.mxu0
        %v5327 = vpop.f32.mrf.mxu0
        %v5328 = vadd.f32 0.0, %v5327
        %v5329 = vpop.f32.mrf.mxu0
        %5330 = vmatprep.mubr.bf16.mxu0 %v5223
        %5331 = vmatmul.mubr.bf16.gmra.mxu0 %v5222
        %v5332 = vpop.f32.mrf.mxu0
        %v5333 = vadd.f32 0.0, %v5332
        %v5334 = vpop.f32.mrf.mxu0
        %v5335 = vpop.f32.mrf.mxu0
        %v5336 = vadd.f32 0.0, %v5335
        %v5337 = vpop.f32.mrf.mxu0
        %5338 = vmatprep.mubr.bf16.mxu0 %v5225
        %5339 = vmatmul.mubr.bf16.gmra.mxu0 %v5224
        %v5340 = vpop.f32.mrf.mxu0
        %v5341 = vadd.f32 0.0, %v5340
        %v5342 = vpop.f32.mrf.mxu0
        %v5343 = vpop.f32.mrf.mxu0
        %v5344 = vadd.f32 0.0, %v5343
        %v5345 = vpop.f32.mrf.mxu0
        %5346 = vmatprep.mubr.bf16.mxu0 %v5227
        %5347 = vmatmul.mubr.bf16.gmra.mxu0 %v5226
        %v5348 = vpop.f32.mrf.mxu0
        %v5349 = vadd.f32 0.0, %v5348
        %v5350 = vpop.f32.mrf.mxu0
        %v5351 = vpop.f32.mrf.mxu0
        %v5352 = vadd.f32 0.0, %v5351
        %v5353 = vpop.f32.mrf.mxu0
        %5354 = vmatprep.mubr.bf16.mxu0 %v5229
        %5355 = vmatmul.mubr.bf16.gmra.mxu0 %v5228
        %v5356 = vpop.f32.mrf.mxu0
        %v5357 = vadd.f32 0.0, %v5356
        %v5358 = vpop.f32.mrf.mxu0
        %v5359 = vpop.f32.mrf.mxu0
        %v5360 = vadd.f32 0.0, %v5359
        %v5361 = vpop.f32.mrf.mxu0
        %5362 = vmatprep.mubr.bf16.mxu0 %v5231
        %5363 = vmatmul.mubr.bf16.gmra.mxu0 %v5230
        %v5364 = vpop.f32.mrf.mxu0
        %v5365 = vadd.f32 0.0, %v5364
        %v5366 = vpop.f32.mrf.mxu0
        %v5367 = vpop.f32.mrf.mxu0
        %v5368 = vadd.f32 0.0, %v5367
        %v5369 = vpop.f32.mrf.mxu0
        %5370 = vmatprep.mubr.bf16.mxu0 %v5233
        %5371 = vmatmul.mubr.bf16.gmra.mxu0 %v5232
        %v5372 = vpop.f32.mrf.mxu0
        %v5373 = vadd.f32 0.0, %v5372
        %v5374 = vpop.f32.mrf.mxu0
        %v5375 = vpop.f32.mrf.mxu0
        %v5376 = vadd.f32 0.0, %v5375
        %v5377 = vpop.f32.mrf.mxu0
        %5378 = vdwg.mxu0
        %5395 = vrot.lane.b32.xlu0 %v3985, 32
        %v5396 = vpop.permute.xlu0 %5395
        %5397 = vrot.lane.b32.xlu0 %v3988, 32
        %v5398 = vpop.permute.xlu0 %5397
        %5399 = vrot.lane.b32.xlu0 %v3993, 32
        %v5400 = vpop.permute.xlu0 %5399
        %5401 = vrot.lane.b32.xlu0 %v3996, 32
        %v5402 = vpop.permute.xlu0 %5401
        %5403 = vrot.lane.b32.xlu0 %v4001, 32
        %v5404 = vpop.permute.xlu0 %5403
        %5405 = vrot.lane.b32.xlu0 %v4004, 32
        %v5406 = vpop.permute.xlu0 %5405
        %5407 = vrot.lane.b32.xlu0 %v4009, 32
        %v5408 = vpop.permute.xlu0 %5407
        %5409 = vrot.lane.b32.xlu0 %v4012, 32
        %v5410 = vpop.permute.xlu0 %5409
        %5411 = vrot.lane.b32.xlu0 %v4017, 32
        %v5412 = vpop.permute.xlu0 %5411
        %5413 = vrot.lane.b32.xlu0 %v4020, 32
        %v5414 = vpop.permute.xlu0 %5413
        %5415 = vrot.lane.b32.xlu0 %v4025, 32
        %v5416 = vpop.permute.xlu0 %5415
        %5417 = vrot.lane.b32.xlu0 %v4028, 32
        %v5418 = vpop.permute.xlu0 %5417
        %5419 = vrot.lane.b32.xlu0 %v4033, 32
        %v5420 = vpop.permute.xlu0 %5419
        %5421 = vrot.lane.b32.xlu0 %v4036, 32
        %v5422 = vpop.permute.xlu0 %5421
        %5423 = vrot.lane.b32.xlu0 %v4041, 32
        %v5424 = vpop.permute.xlu0 %5423
        %5425 = vrot.lane.b32.xlu0 %v4044, 32
        %v5426 = vpop.permute.xlu0 %5425
        %5459 = vrot.lane.b32.xlu0 %v4651, 64
        %v5460 = vpop.permute.xlu0 %5459
        %5461 = vrot.lane.b32.xlu0 %v4654, 64
        %v5462 = vpop.permute.xlu0 %5461
        %5463 = vrot.lane.b32.xlu0 %v4659, 64
        %v5464 = vpop.permute.xlu0 %5463
        %5465 = vrot.lane.b32.xlu0 %v4662, 64
        %v5466 = vpop.permute.xlu0 %5465
        %5467 = vrot.lane.b32.xlu0 %v4667, 64
        %v5468 = vpop.permute.xlu0 %5467
        %5469 = vrot.lane.b32.xlu0 %v4670, 64
        %v5470 = vpop.permute.xlu0 %5469
        %5471 = vrot.lane.b32.xlu0 %v4675, 64
        %v5472 = vpop.permute.xlu0 %5471
        %5473 = vrot.lane.b32.xlu0 %v4678, 64
        %v5474 = vpop.permute.xlu0 %5473
        %5475 = vrot.lane.b32.xlu0 %v4683, 64
        %v5476 = vpop.permute.xlu0 %5475
        %5477 = vrot.lane.b32.xlu0 %v4686, 64
        %v5478 = vpop.permute.xlu0 %5477
        %5479 = vrot.lane.b32.xlu0 %v4691, 64
        %v5480 = vpop.permute.xlu0 %5479
        %5481 = vrot.lane.b32.xlu0 %v4694, 64
        %v5482 = vpop.permute.xlu0 %5481
        %5483 = vrot.lane.b32.xlu0 %v4699, 64
        %v5484 = vpop.permute.xlu0 %5483
        %5485 = vrot.lane.b32.xlu0 %v4702, 64
        %v5486 = vpop.permute.xlu0 %5485
        %5487 = vrot.lane.b32.xlu0 %v4707, 64
        %v5488 = vpop.permute.xlu0 %5487
        %5489 = vrot.lane.b32.xlu0 %v4710, 64
        %v5490 = vpop.permute.xlu0 %5489
        %5523 = vrot.lane.b32.xlu0 %v5317, 96
        %v5524 = vpop.permute.xlu0 %5523
        %5525 = vrot.lane.b32.xlu0 %v5320, 96
        %v5526 = vpop.permute.xlu0 %5525
        %5527 = vrot.lane.b32.xlu0 %v5325, 96
        %v5528 = vpop.permute.xlu0 %5527
        %5529 = vrot.lane.b32.xlu0 %v5328, 96
        %v5530 = vpop.permute.xlu0 %5529
        %5531 = vrot.lane.b32.xlu0 %v5333, 96
        %v5532 = vpop.permute.xlu0 %5531
        %5533 = vrot.lane.b32.xlu0 %v5336, 96
        %v5534 = vpop.permute.xlu0 %5533
        %5535 = vrot.lane.b32.xlu0 %v5341, 96
        %v5536 = vpop.permute.xlu0 %5535
        %5537 = vrot.lane.b32.xlu0 %v5344, 96
        %v5538 = vpop.permute.xlu0 %5537
        %5539 = vrot.lane.b32.xlu0 %v5349, 96
        %v5540 = vpop.permute.xlu0 %5539
        %5541 = vrot.lane.b32.xlu0 %v5352, 96
        %v5542 = vpop.permute.xlu0 %5541
        %5543 = vrot.lane.b32.xlu0 %v5357, 96
        %v5544 = vpop.permute.xlu0 %5543
        %5545 = vrot.lane.b32.xlu0 %v5360, 96
        %v5546 = vpop.permute.xlu0 %5545
        %5547 = vrot.lane.b32.xlu0 %v5365, 96
        %v5548 = vpop.permute.xlu0 %5547
        %5549 = vrot.lane.b32.xlu0 %v5368, 96
        %v5550 = vpop.permute.xlu0 %5549
        %5551 = vrot.lane.b32.xlu0 %v5373, 96
        %v5552 = vpop.permute.xlu0 %5551
        %5553 = vrot.lane.b32.xlu0 %v5376, 96
        %v5554 = vpop.permute.xlu0 %5553
        %v5571 = vsel %vm2706, %v3311, %v5396
        %v5572 = vsel %vm2706, %v3314, %v5398
        %v5573 = vsel %vm2706, %v3319, %v5400
        %v5574 = vsel %vm2706, %v3322, %v5402
        %v5575 = vsel %vm2706, %v3327, %v5404
        %v5576 = vsel %vm2706, %v3330, %v5406
        %v5577 = vsel %vm2706, %v3335, %v5408
        %v5578 = vsel %vm2706, %v3338, %v5410
        %v5579 = vsel %vm2706, %v3343, %v5412
        %v5580 = vsel %vm2706, %v3346, %v5414
        %v5581 = vsel %vm2706, %v3351, %v5416
        %v5582 = vsel %vm2706, %v3354, %v5418
        %v5583 = vsel %vm2706, %v3359, %v5420
        %v5584 = vsel %vm2706, %v3362, %v5422
        %v5585 = vsel %vm2706, %v3367, %v5424
        %v5586 = vsel %vm2706, %v3370, %v5426
        %vm5587 = vcmask 523264
        %v5588 = vsel %vm5587, %v5571, %v5460
        %v5589 = vsel %vm5587, %v5572, %v5462
        %v5590 = vsel %vm5587, %v5573, %v5464
        %v5591 = vsel %vm5587, %v5574, %v5466
        %v5592 = vsel %vm5587, %v5575, %v5468
        %v5593 = vsel %vm5587, %v5576, %v5470
        %v5594 = vsel %vm5587, %v5577, %v5472
        %v5595 = vsel %vm5587, %v5578, %v5474
        %v5596 = vsel %vm5587, %v5579, %v5476
        %v5597 = vsel %vm5587, %v5580, %v5478
        %v5598 = vsel %vm5587, %v5581, %v5480
        %v5599 = vsel %vm5587, %v5582, %v5482
        %v5600 = vsel %vm5587, %v5583, %v5484
        %v5601 = vsel %vm5587, %v5584, %v5486
        %v5602 = vsel %vm5587, %v5585, %v5488
        %v5603 = vsel %vm5587, %v5586, %v5490
        %vm5604 = vcmask 785408
        %v5605 = vsel %vm5604, %v5588, %v5524
        %v5606 = vsel %vm5604, %v5589, %v5526
        %v5607 = vsel %vm5604, %v5590, %v5528
        %v5608 = vsel %vm5604, %v5591, %v5530
        %v5609 = vsel %vm5604, %v5592, %v5532
        %v5610 = vsel %vm5604, %v5593, %v5534
        %v5611 = vsel %vm5604, %v5594, %v5536
        %v5612 = vsel %vm5604, %v5595, %v5538
        %v5613 = vsel %vm5604, %v5596, %v5540
        %v5614 = vsel %vm5604, %v5597, %v5542
        %v5615 = vsel %vm5604, %v5598, %v5544
        %v5616 = vsel %vm5604, %v5599, %v5546
        %v5617 = vsel %vm5604, %v5600, %v5548
        %v5618 = vsel %vm5604, %v5601, %v5550
        %v5619 = vsel %vm5604, %v5602, %v5552
        %v5620 = vsel %vm5604, %v5603, %v5554
        %v5621 = vpack.c.bf16 %v5606, %v5605
        %v5622 = vpack.c.bf16 %v5608, %v5607
        %v5623 = vpack.c.bf16 %v5610, %v5609
        %v5624 = vpack.c.bf16 %v5612, %v5611
        %v5625 = vpack.c.bf16 %v5614, %v5613
        %v5626 = vpack.c.bf16 %v5616, %v5615
        %v5627 = vpack.c.bf16 %v5618, %v5617
        %v5628 = vpack.c.bf16 %v5620, %v5619
        %v5629 = vld [vmem:[#allocation13] sm:$0xf]
        %v5630 = vld [vmem:[#allocation13 + $0x4] sm:$0xf]
        %v5631 = vld [vmem:[#allocation13 + $0x8] sm:$0xf]
        %v5632 = vld [vmem:[#allocation13 + $0xc] sm:$0xf]
        %v5633 = vld [vmem:[#allocation13 + $0x10] sm:$0xf]
        %v5634 = vld [vmem:[#allocation13 + $0x14] sm:$0xf]
        %v5635 = vld [vmem:[#allocation13 + $0x18] sm:$0xf]
        %v5636 = vld [vmem:[#allocation13 + $0x1c] sm:$0xf]
        %v5637 = vld [vmem:[#allocation13 + $0x20] sm:$0xf]
        %v5638 = vld [vmem:[#allocation13 + $0x24] sm:$0xf]
        %v5639 = vld [vmem:[#allocation13 + $0x28] sm:$0xf]
        %v5640 = vld [vmem:[#allocation13 + $0x2c] sm:$0xf]
        %v5641 = vld [vmem:[#allocation13 + $0x30] sm:$0xf]
        %v5642 = vld [vmem:[#allocation13 + $0x34] sm:$0xf]
        %v5643 = vld [vmem:[#allocation13 + $0x38] sm:$0xf]
        %v5644 = vld [vmem:[#allocation13 + $0x3c] sm:$0xf]
        %v5661 = vunpack.c.l.b16 %v5629
        %v5662 = vunpack.c.l.b16 %v5630
        %v5663 = vunpack.c.l.b16 %v5631
        %v5664 = vunpack.c.l.b16 %v5632
        %v5665 = vunpack.c.l.b16 %v5633
        %v5666 = vunpack.c.l.b16 %v5634
        %v5667 = vunpack.c.l.b16 %v5635
        %v5668 = vunpack.c.l.b16 %v5636
        %v5669 = vunpack.c.l.b16 %v5637
        %v5670 = vunpack.c.l.b16 %v5638
        %v5671 = vunpack.c.l.b16 %v5639
        %v5672 = vunpack.c.l.b16 %v5640
        %v5673 = vunpack.c.l.b16 %v5641
        %v5674 = vunpack.c.l.b16 %v5642
        %v5675 = vunpack.c.l.b16 %v5643
        %v5676 = vunpack.c.l.b16 %v5644
        %v5677 = vpack.c.b16 %v5662, %v5661
        %v5678 = vpack.c.b16 %v5664, %v5663
        %v5679 = vpack.c.b16 %v5666, %v5665
        %v5680 = vpack.c.b16 %v5668, %v5667
        %v5681 = vpack.c.b16 %v5670, %v5669
        %v5682 = vpack.c.b16 %v5672, %v5671
        %v5683 = vpack.c.b16 %v5674, %v5673
        %v5684 = vpack.c.b16 %v5676, %v5675
        %5693 = vmatprep.subr.bf16.mxu0 0
        %5694 = vmatpush1.bf16.msra.mxu0 %v5684
        %5695 = vmatprep.subr.bf16.mxu0 0
        %5696 = vmatpush1.bf16.msra.mxu0 %v5683
        %5697 = vmatprep.subr.bf16.mxu0 0
        %5698 = vmatpush1.bf16.msra.mxu0 %v5682
        %5699 = vmatprep.subr.bf16.mxu0 0
        %5700 = vmatpush1.bf16.msra.mxu0 %v5681
        %5701 = vmatprep.subr.bf16.mxu0 0
        %5702 = vmatpush1.bf16.msra.mxu0 %v5680
        %5703 = vmatprep.subr.bf16.mxu0 0
        %5704 = vmatpush1.bf16.msra.mxu0 %v5679
        %5705 = vmatprep.subr.bf16.mxu0 0
        %5706 = vmatpush1.bf16.msra.mxu0 %v5678
        %5707 = vmatprep.subr.bf16.mxu0 0
        %5708 = vmatpush1.bf16.msra.mxu0 %v5677
        %5709 = vmatprep.subr.bf16.mxu0 0
        %5710 = vmatpush2.bf16.msra.mxu0 0
        %5711 = vmatprep.subr.bf16.mxu0 0
        %5712 = vmatpush2.bf16.msra.mxu0 0
        %5713 = vmatprep.subr.bf16.mxu0 0
        %5714 = vmatpush2.bf16.msra.mxu0 0
        %5715 = vmatprep.subr.bf16.mxu0 0
        %5716 = vmatpush2.bf16.msra.mxu0 0
        %5717 = vmatprep.subr.bf16.mxu0 0
        %5718 = vmatpush2.bf16.msra.mxu0 0
        %5719 = vmatprep.subr.bf16.mxu0 0
        %5720 = vmatpush2.bf16.msra.mxu0 0
        %5721 = vmatprep.subr.bf16.mxu0 0
        %5722 = vmatpush2.bf16.msra.mxu0 0
        %5723 = vmatprep.subr.bf16.mxu0 0
        %5724 = vmatpush2.bf16.msra.mxu0 0
        %5725 = vmatprep.mubr.bf16.mxu0 0
        %5726 = vmatmul.mubr.bf16.gmra.mxu0 %v5621
        %v5727 = vpop.f32.mrf.mxu0
        %v5728 = vadd.f32 0.0, %v5727
        %v5729 = vpop.f32.mrf.mxu0
        %v5730 = vpop.f32.mrf.mxu0
        %v5731 = vadd.f32 0.0, %v5730
        %v5732 = vpop.f32.mrf.mxu0
        %5733 = vmatprep.mubr.bf16.mxu0 0
        %5734 = vmatmul.mubr.bf16.gmra.mxu0 %v5622
        %v5735 = vpop.f32.mrf.mxu0
        %v5736 = vadd.f32 0.0, %v5735
        %v5737 = vpop.f32.mrf.mxu0
        %v5738 = vpop.f32.mrf.mxu0
        %v5739 = vadd.f32 0.0, %v5738
        %v5740 = vpop.f32.mrf.mxu0
        %5741 = vmatprep.mubr.bf16.mxu0 0
        %5742 = vmatmul.mubr.bf16.gmra.mxu0 %v5623
        %v5743 = vpop.f32.mrf.mxu0
        %v5744 = vadd.f32 0.0, %v5743
        %v5745 = vpop.f32.mrf.mxu0
        %v5746 = vpop.f32.mrf.mxu0
        %v5747 = vadd.f32 0.0, %v5746
        %v5748 = vpop.f32.mrf.mxu0
        %5749 = vmatprep.mubr.bf16.mxu0 0
        %5750 = vmatmul.mubr.bf16.gmra.mxu0 %v5624
        %v5751 = vpop.f32.mrf.mxu0
        %v5752 = vadd.f32 0.0, %v5751
        %v5753 = vpop.f32.mrf.mxu0
        %v5754 = vpop.f32.mrf.mxu0
        %v5755 = vadd.f32 0.0, %v5754
        %v5756 = vpop.f32.mrf.mxu0
        %5757 = vmatprep.mubr.bf16.mxu0 0
        %5758 = vmatmul.mubr.bf16.gmra.mxu0 %v5625
        %v5759 = vpop.f32.mrf.mxu0
        %v5760 = vadd.f32 0.0, %v5759
        %v5761 = vpop.f32.mrf.mxu0
        %v5762 = vpop.f32.mrf.mxu0
        %v5763 = vadd.f32 0.0, %v5762
        %v5764 = vpop.f32.mrf.mxu0
        %5765 = vmatprep.mubr.bf16.mxu0 0
        %5766 = vmatmul.mubr.bf16.gmra.mxu0 %v5626
        %v5767 = vpop.f32.mrf.mxu0
        %v5768 = vadd.f32 0.0, %v5767
        %v5769 = vpop.f32.mrf.mxu0
        %v5770 = vpop.f32.mrf.mxu0
        %v5771 = vadd.f32 0.0, %v5770
        %v5772 = vpop.f32.mrf.mxu0
        %5773 = vmatprep.mubr.bf16.mxu0 0
        %5774 = vmatmul.mubr.bf16.gmra.mxu0 %v5627
        %v5775 = vpop.f32.mrf.mxu0
        %v5776 = vadd.f32 0.0, %v5775
        %v5777 = vpop.f32.mrf.mxu0
        %v5778 = vpop.f32.mrf.mxu0
        %v5779 = vadd.f32 0.0, %v5778
        %v5780 = vpop.f32.mrf.mxu0
        %5781 = vmatprep.mubr.bf16.mxu0 0
        %5782 = vmatmul.mubr.bf16.gmra.mxu0 %v5628
        %v5783 = vpop.f32.mrf.mxu0
        %v5784 = vadd.f32 0.0, %v5783
        %v5785 = vpop.f32.mrf.mxu0
        %v5786 = vpop.f32.mrf.mxu0
        %v5787 = vadd.f32 0.0, %v5786
        %v5788 = vpop.f32.mrf.mxu0
        %5789 = vdwg.mxu0
        %5790 = vst [vmem:[%s700] sm:$0xff] %v5728
        %5791 = vst [vmem:[%s700 + $0x8] sm:$0xff] %v5731
        %5792 = vst [vmem:[%s700 + $0x10] sm:$0xff] %v5736
        %5793 = vst [vmem:[%s700 + $0x18] sm:$0xff] %v5739
        %5794 = vst [vmem:[%s700 + $0x20] sm:$0xff] %v5744
        %5795 = vst [vmem:[%s700 + $0x28] sm:$0xff] %v5747
        %5796 = vst [vmem:[%s700 + $0x30] sm:$0xff] %v5752
        %5797 = vst [vmem:[%s700 + $0x38] sm:$0xff] %v5755
        %5798 = vst [vmem:[%s700 + $0x40] sm:$0xff] %v5760
        %5799 = vst [vmem:[%s700 + $0x48] sm:$0xff] %v5763
        %5800 = vst [vmem:[%s700 + $0x50] sm:$0xff] %v5768
        %5801 = vst [vmem:[%s700 + $0x58] sm:$0xff] %v5771
        %5802 = vst [vmem:[%s700 + $0x60] sm:$0xff] %v5776
        %5803 = vst [vmem:[%s700 + $0x68] sm:$0xff] %v5779
        %5804 = vst [vmem:[%s700 + $0x70] sm:$0xff] %v5784
        %5805 = vst [vmem:[%s700 + $0x78] sm:$0xff] %v5787
        %s5806 = sand.u32 %s335, 1
        %s5807 = scalar_lea.sflag [#allocation6], %s5806
        %s5808 = sand.u32 %s335, 1
        %s5809 = smul.addr %s5808, 128
        %s5810 = scalar_lea.vmem [#allocation21], %s5809
        // Predicated region
        $region121: #{tpu_custom_call.1} parent=67 // pred_check
          %p5811 = pneg %p345
        $region122: #{tpu_custom_call.1} parent=67 // pred_check_branch
          %5813 = sbr.rel (%p5811) target = $region124
        $region123: #{tpu_custom_call.1} parent=67 // pred_region
          %s5814 = smul.u32 16, %s39
          %s5816 = ssub.s32 2048, 2048
          %5817 = vsyncadd %s5807, %s5816
          %s5818 = smul.addr %s38, 32
          %s5819 = sadd.s32 %s5814, %s5818
          %s5820 = smul.addr %s5819, 128
          %s5821 = scalar_lea.hbm %s12, %s5820
          %s5822 = sshll.u32 %s5810, 4
          %s5823 = int_to_ptr.vmem [resolvable:$true] %s5822
          %5828 = dma.vmem_to_hbm [thread:$0]  %s5823, 2048, %s5821, %s5807, 128, 128, 8
        $region124: #{tpu_custom_call.1} parent=67 // pred_fallthru
          _
      $region68: #{tpu_custom_call.1} parent=5 // pred_fallthru
        _
      %p5829 = scmp.le.s32.totalorder 2, %s29
      // Predicated region
      $region125: #{tpu_custom_call.1} parent=5 // pred_check
        %p5830 = pneg %p5829
      $region126: #{tpu_custom_call.1} parent=5 // pred_check_branch
        %5832 = sbr.rel (%p5830) target = $region128
      $region127: #{tpu_custom_call.1} parent=5 // pred_region
        %s5833 = ssub.s32 %s29, 2
        // Predicated region
        $region129: #{tpu_custom_call.1} parent=127 // pred_check
          %p5834 = pneg %p351
        $region130: #{tpu_custom_call.1} parent=127 // pred_check_branch
          %5836 = sbr.rel (%p5834) target = $region132
        $region131: #{tpu_custom_call.1} parent=127 // pred_region
          %s5837 = sand.u32 %s336, 1
          %s5838 = scalar_lea.sflag [#allocation6], %s5837
          %s5839 = sand.u32 %s336, 1
          %s5840 = smul.addr %s5839, 128
          %s5841 = scalar_lea.vmem [#allocation21], %s5840
          %5842 = dma.done %s5838, 2048
        $region132: #{tpu_custom_call.1} parent=127 // pred_fallthru
          _
      $region128: #{tpu_custom_call.1} parent=5 // pred_fallthru
        _
    $region6: #{tpu_custom_call.1} parent=1 // loop_footer
      %s33 = sadd.s32 1, %s29
    $region7: #{tpu_custom_call.1} parent=1 // loop_footer_branch
      %28 = sbr.rel target = $region3
    $region8: #{tpu_custom_call.1} parent=1 // loop_exit
      _
    %5843 = vsyncpa [#allocation5], 1
    %s5844 = scalar_lea.sflag [#allocation5], 1
    %5845 = vsyncpa %s5844, 1
    %5846 = vsyncpa [#allocation8], 1
    %s5847 = scalar_lea.sflag [#allocation8], 1
    %5848 = vsyncpa %s5847, 1
    %5849 = vsyncpa [#allocation11], 1
    %5850 = vsyncpa [#allocation14], 1
    %5851 = vsyncpa [#allocation6], 1
    %s5852 = scalar_lea.sflag [#allocation6], 1
    %5853 = vsyncpa %s5852, 1

</llo_original>
